<compile_context>
chip_gen: v7x
topology: tpu7x:2x2x1
jax: 0.10.0
libtpu: 0.0.40
codegen_flags: <defaults>
</compile_context>

<pallas_src>
import functools
import math

import jax
import jax.numpy as jnp
from jax.experimental import pallas as pl
from jax.experimental.pallas import tpu as pltpu


DP = 128  # padded per-branch feature width (one full lane group)


def acmgcn_kernel(tk, a_ref, xs_ref, x_own_ref, dn_ref,
                  w_low_ref, w_high_ref, w_mlp_ref, av_ref, att_ref,
                  o_ref, acc_ref):
    k = pl.program_id(1)

    @pl.when(k == 0)
    def _():
        acc_ref[...] = jnp.zeros_like(acc_ref)

    # K-tiled aggregation: acc += A^T[i_tile, k_tile] @ (d^-1/2 * x)[k_tile].
    # A^T streams as int8 (exact 0/1) and is cast to bf16 on the VPU; the
    # pre-scaled neighbor features are VMEM-resident and sliced here.
    a = a_ref[...].astype(jnp.bfloat16)                       # (tn, tk)
    start = pl.multiple_of(k * tk, tk)
    x_nb = xs_ref[pl.ds(start, tk), :]                        # (tk, D) bf16
    acc_ref[...] += jnp.dot(a, x_nb, preferred_element_type=jnp.float32)

    @pl.when(k == pl.num_programs(1) - 1)
    def _():
        x = x_own_ref[...]                                    # (tn, D) f32
        agg = acc_ref[...] * dn_ref[...]                      # row post-scale d^-1/2
        high = x - agg                                        # high-pass signal

        # Three independent lane-dense branch GEMMs (bf16 operands, f32 acc);
        # padded weight columns are zero so ReLU keeps pad lanes at 0.
        out_low = jnp.maximum(
            jnp.dot(agg.astype(jnp.bfloat16), w_low_ref[...],
                    preferred_element_type=jnp.float32), 0.0)     # (tn, DP)
        out_high = jnp.maximum(
            jnp.dot(high.astype(jnp.bfloat16), w_high_ref[...],
                    preferred_element_type=jnp.float32), 0.0)
        out_mlp = jnp.maximum(
            jnp.dot(x.astype(jnp.bfloat16), w_mlp_ref[...],
                    preferred_element_type=jnp.float32), 0.0)

        av = av_ref[...]                                      # (3, DP), zero pad
        sig_low = jax.nn.sigmoid(
            jnp.sum(out_low * av[0:1, :], axis=-1, keepdims=True))
        sig_high = jax.nn.sigmoid(
            jnp.sum(out_high * av[1:2, :], axis=-1, keepdims=True))
        sig_mlp = jax.nn.sigmoid(
            jnp.sum(out_mlp * av[2:3, :], axis=-1, keepdims=True))

        # 3-way softmax over (sig @ att_vec) / T; att_vec scalars from SMEM.
        T = 3.0
        e0 = (sig_low * att_ref[0, 0] + sig_high * att_ref[1, 0]
              + sig_mlp * att_ref[2, 0]) / T
        e1 = (sig_low * att_ref[0, 1] + sig_high * att_ref[1, 1]
              + sig_mlp * att_ref[2, 1]) / T
        e2 = (sig_low * att_ref[0, 2] + sig_high * att_ref[1, 2]
              + sig_mlp * att_ref[2, 2]) / T
        m = jnp.maximum(jnp.maximum(e0, e1), e2)
        p0 = jnp.exp(e0 - m)
        p1 = jnp.exp(e1 - m)
        p2 = jnp.exp(e2 - m)
        inv = pl.reciprocal(p0 + p1 + p2, approx=True)

        # Lane-dense (tn, 128) store; pad columns are exactly zero and are
        # sliced away in the wrapper.
        o_ref[...] = 3.0 * (p0 * inv * out_low + p1 * inv * out_high
                            + p2 * inv * out_mlp)


def acmgcn_forward(adj, x, params, *, tn=None, tk=None):
    """ACM-GCN forward. adj: (N, N) dense 0/1 adjacency, x: (N, D) float32."""
    N, D = x.shape
    if tn is None:
        tn = min(512, max(8, N // 2))    # keep >= 2 parallel row tiles (v7x: 2 TCs)
    if tk is None:
        tk = min(2048, N)                # big reduction tiles: amortize per-step cost
    tn = min(tn, N)
    tk = min(tk, N)
    assert N % tn == 0 and N % tk == 0
    assert D <= DP

    w_low, w_high, w_mlp, av_low, av_high, av_mlp, att_vec = params

    # Graph glue (plain JAX, cheap): degrees + one transpose/cast pass of adj.
    # Degrees clamped so isolated nodes give 0 contribution, not inf/NaN.
    # TODO(synk): DGL ops (out_degrees / u_mul_v / u_mul_e_sum) are replaced by
    # this dense normalized aggregation (identical result for dense graphs).
    deg = jnp.sum(adj, axis=1)
    inv_sqrt_deg = jnp.where(deg > 0, 1.0 / jnp.sqrt(jnp.maximum(deg, 1.0)), 0.0)
    a_t = adj.T.astype(jnp.int8)                                  # (N, N) exact 0/1
    x_scaled = (x * inv_sqrt_deg[:, None]).astype(jnp.bfloat16)   # neighbor pre-scale
    dnorm = inv_sqrt_deg[:, None].astype(jnp.float32)             # (N, 1) row post-scale

    # Lane-padded weights (bf16) and attention vectors (f32), zero padded.
    def pad_w(w):
        return jnp.zeros((D, DP), jnp.bfloat16).at[:, :D].set(w.astype(jnp.bfloat16))
    w_low_p, w_high_p, w_mlp_p = pad_w(w_low), pad_w(w_high), pad_w(w_mlp)
    av_p = jnp.zeros((3, DP), jnp.float32)
    av_p = av_p.at[0, :D].set(av_low[:, 0])
    av_p = av_p.at[1, :D].set(av_high[:, 0])
    av_p = av_p.at[2, :D].set(av_mlp[:, 0])

    # 3-deep buffering on the dominant adjacency stream once the k axis is
    # long enough to benefit (hides per-step DMA setup gaps on v7x).
    if N // tk >= 3:
        a_spec = pl.BlockSpec((tn, tk), lambda i, k: (i, k),
                              pipeline_mode=pl.Buffered(3))
    else:
        a_spec = pl.BlockSpec((tn, tk), lambda i, k: (i, k))

    cost = pl.CostEstimate(
        flops=int(2 * N * N * D + 3 * 2 * N * D * DP + 24 * N * DP),
        transcendentals=int(7 * N),
        bytes_accessed=int(N * N * 1 + N * D * (2 + 4) + N * 4
                           + 3 * D * DP * 2 + 3 * DP * 4 + N * DP * 4),
    )

    out_pad = pl.pallas_call(
        functools.partial(acmgcn_kernel, tk),
        out_shape=jax.ShapeDtypeStruct((N, DP), jnp.float32),
        grid_spec=pltpu.PrefetchScalarGridSpec(
            num_scalar_prefetch=0,
            grid=(N // tn, N // tk),
            in_specs=[
                a_spec,                                              # A^T tile (int8)
                pl.BlockSpec((N, D), lambda i, k: (0, 0)),           # resident scaled x (bf16)
                pl.BlockSpec((tn, D), lambda i, k: (i, 0)),          # own-row x (f32)
                pl.BlockSpec((tn, 1), lambda i, k: (i, 0)),          # row deg^-1/2 (f32)
                pl.BlockSpec((D, DP), lambda i, k: (0, 0)),          # W_low (bf16, padded)
                pl.BlockSpec((D, DP), lambda i, k: (0, 0)),          # W_high
                pl.BlockSpec((D, DP), lambda i, k: (0, 0)),          # W_mlp
                pl.BlockSpec((3, DP), lambda i, k: (0, 0)),          # att vecs (padded)
                pl.BlockSpec(memory_space=pltpu.MemorySpace.SMEM),   # att_vec 3x3
            ],
            out_specs=pl.BlockSpec((tn, DP), lambda i, k: (i, 0)),
            scratch_shapes=[pltpu.VMEM((tn, D), jnp.float32)],       # f32 accumulator
        ),
        compiler_params=pltpu.CompilerParams(
            dimension_semantics=("parallel", "arbitrary"),
            vmem_limit_bytes=32 * 1024 * 1024),
        cost_estimate=cost,
    )(a_t, x_scaled, x, dnorm, w_low_p, w_high_p, w_mlp_p, av_p, att_vec)
    return out_pad[:, :D]


def init_params(key, D):
    """Deterministic init matching ACMGCNModule.reset_parameters()."""
    stdv = 1.0 / math.sqrt(D)
    std_att = 1.0 / math.sqrt(1.0)
    std_att_vec = 1.0 / math.sqrt(3.0)
    ks = jax.random.split(key, 7)
    w_low = jax.random.uniform(ks[0], (D, D), jnp.float32, -stdv, stdv)
    w_high = jax.random.uniform(ks[1], (D, D), jnp.float32, -stdv, stdv)
    w_mlp = jax.random.uniform(ks[2], (D, D), jnp.float32, -stdv, stdv)
    av_low = jax.random.uniform(ks[3], (D, 1), jnp.float32, -std_att, std_att)
    av_high = jax.random.uniform(ks[4], (D, 1), jnp.float32, -std_att, std_att)
    av_mlp = jax.random.uniform(ks[5], (D, 1), jnp.float32, -std_att, std_att)
    att_vec = jax.random.uniform(ks[6], (3, 3), jnp.float32,
                                 -std_att_vec, std_att_vec)
    return (w_low, w_high, w_mlp, av_low, av_high, av_mlp, att_vec)


def acmgcn_reference(adj, x, params):
    """Pure-JAX (f32) reference of the PyTorch forward."""
    w_low, w_high, w_mlp, av_low, av_high, av_mlp, att_vec = params
    deg = jnp.sum(adj, axis=1)
    inv_sqrt_deg = jnp.where(deg > 0, 1.0 / jnp.sqrt(jnp.maximum(deg, 1.0)), 0.0)
    S = adj.T * inv_sqrt_deg[:, None] * inv_sqrt_deg[None, :]
    out_low_pre = S @ x
    out_high_pre = x - out_low_pre
    out_low = jax.nn.relu(out_low_pre @ w_low)
    out_high = jax.nn.relu(out_high_pre @ w_high)
    out_mlp = jax.nn.relu(x @ w_mlp)
    logits = jnp.concatenate(
        [out_low @ av_low, out_high @ av_high, out_mlp @ av_mlp], axis=1)
    att = jax.nn.softmax((jax.nn.sigmoid(logits) @ att_vec) / 3.0, axis=1)
    return 3.0 * (att[:, 0:1] * out_low + att[:, 1:2] * out_high
                  + att[:, 2:3] * out_mlp)


if __name__ == "__main__":
    # module config: ACMGCNModule(dim=8, hidden_dim_multiplier=4) -> D = 32
    dim, hidden_dim_multiplier = 8, 4
    D = dim * hidden_dim_multiplier
    N = 512  # number of graph nodes (grid = (2, 1): 2 parallel row tiles)

    key = jax.random.PRNGKey(0)
    k_adj, k_x, k_p = jax.random.split(key, 3)

    # random symmetric graph with self-loops (guarantees nonzero degrees)
    A = (jax.random.uniform(k_adj, (N, N)) < 0.05).astype(jnp.float32)
    A = jnp.maximum(A, A.T)
    A = jnp.maximum(A, jnp.eye(N, dtype=jnp.float32))

    x = jax.random.normal(k_x, (N, D), jnp.float32)
    params = init_params(k_p, D)

    out = acmgcn_forward(A, x, params)
    out = jax.block_until_ready(out)

    ref = acmgcn_reference(A, x, params)
    err = float(jnp.max(jnp.abs(out - ref)))
    assert out.shape == (N, D)
    assert bool(jnp.all(jnp.isfinite(out)))
    assert bool(jnp.allclose(out, ref, rtol=2e-2, atol=2e-2)), ("max abs diff", err)

    print("KERNEL_OK")
</pallas_src>

<mosaic_0001>
module attributes {stable_mosaic.version = 11 : i64} {
  func.func @acmgcn_kernel(%arg0: i32, %arg1: i32, %arg2: memref<256x512xi8, #tpu.memory_space<vmem>>, %arg3: memref<512x32xbf16, #tpu.memory_space<vmem>>, %arg4: memref<256x32xf32, #tpu.memory_space<vmem>>, %arg5: memref<256x1xf32, #tpu.memory_space<vmem>>, %arg6: memref<32x128xbf16, #tpu.memory_space<vmem>>, %arg7: memref<32x128xbf16, #tpu.memory_space<vmem>>, %arg8: memref<32x128xbf16, #tpu.memory_space<vmem>>, %arg9: memref<3x128xf32, #tpu.memory_space<vmem>>, %arg10: memref<3x3xf32, #tpu.memory_space<smem>>, %arg11: memref<256x128xf32, #tpu.memory_space<vmem>>, %arg12: memref<256x32xf32, #tpu.memory_space<vmem>>) attributes {dimension_semantics = [#tpu.dimension_semantics<parallel>, #tpu.dimension_semantics<arbitrary>], iteration_bounds = array<i64: 2, 1>, scalar_prefetch = 0 : i64, scratch_operands = 1 : i64, tpu.core_type = #tpu.core_type<tc>, window_params = [{transform_indices = @transform_0, window_bounds = array<i64: 256, 512>}, {pipeline_mode = #tpu.pipeline_mode<synchronous>, transform_indices = @transform_1, window_bounds = array<i64: 512, 32>}, {transform_indices = @transform_2, window_bounds = array<i64: 256, 32>}, {transform_indices = @transform_3, window_bounds = array<i64: 256, 1>}, {pipeline_mode = #tpu.pipeline_mode<synchronous>, transform_indices = @transform_4, window_bounds = array<i64: 32, 128>}, {pipeline_mode = #tpu.pipeline_mode<synchronous>, transform_indices = @transform_5, window_bounds = array<i64: 32, 128>}, {pipeline_mode = #tpu.pipeline_mode<synchronous>, transform_indices = @transform_6, window_bounds = array<i64: 32, 128>}, {pipeline_mode = #tpu.pipeline_mode<synchronous>, transform_indices = @transform_7, window_bounds = array<i64: 3, 128>}, {transform_indices = @transform_8, window_bounds = array<i64: 3, 3>}, {transform_indices = @transform_9, window_bounds = array<i64: 256, 128>}]} {
    %c0_i32 = arith.constant 0 : i32
    %0 = arith.cmpi eq, %arg1, %c0_i32 : i32
    %1 = arith.extui %0 : i1 to i32
    %c0_i32_0 = arith.constant 0 : i32
    %2 = arith.cmpi ne, %1, %c0_i32_0 : i32
    scf.if %2 {
      %cst_9 = arith.constant 0.000000e+00 : f32
      %16 = vector.broadcast %cst_9 : f32 to vector<256x32xf32>
      %c0_10 = arith.constant 0 : index
      %c0_11 = arith.constant 0 : index
      %17 = vector.load %arg12[%c0_10, %c0_11] : memref<256x32xf32, #tpu.memory_space<vmem>>, vector<256x32xf32>
      tpu.vector_store %arg12[%c0_10, %c0_11], %16 {strides = array<i32>} : memref<256x32xf32, #tpu.memory_space<vmem>>, vector<256x32xf32>,
    } else {
    }
    %c0 = arith.constant 0 : index
    %c0_1 = arith.constant 0 : index
    %3 = vector.load %arg2[%c0, %c0_1] : memref<256x512xi8, #tpu.memory_space<vmem>>, vector<256x512xi8>
    %4 = arith.sitofp %3 : vector<256x512xi8> to vector<256x512xbf16>
    %c512_i32 = arith.constant 512 : i32
    %5 = arith.muli %arg1, %c512_i32 : i32
    %6 = tpu.assume_multiple %5, 512 : i32
    %7 = arith.index_cast %6 : i32 to index
    %c0_2 = arith.constant 0 : index
    %8 = vector.load %arg3[%7, %c0_2] : memref<512x32xbf16, #tpu.memory_space<vmem>>, vector<512x32xbf16>
    %c0_3 = arith.constant 0 : index
    %c0_4 = arith.constant 0 : index
    %9 = vector.load %arg12[%c0_3, %c0_4] : memref<256x32xf32, #tpu.memory_space<vmem>>, vector<256x32xf32>
    %cst = arith.constant dense<0.000000e+00> : vector<256x32xf32>
    %10 = tpu.matmul %4, %8, %cst {dimension_numbers = #tpu.dot_dimension_numbers<[1], [0], [0], [1], [0, 0, 1, 1], [], []>} : vector<256x512xbf16>, vector<512x32xbf16>, vector<256x32xf32> -> vector<256x32xf32>
    %11 = arith.addf %9, %10 : vector<256x32xf32>
    %c0_5 = arith.constant 0 : index
    %c0_6 = arith.constant 0 : index
    %12 = vector.load %arg12[%c0_5, %c0_6] : memref<256x32xf32, #tpu.memory_space<vmem>>, vector<256x32xf32>
    tpu.vector_store %arg12[%c0_5, %c0_6], %11 {strides = array<i32>} : memref<256x32xf32, #tpu.memory_space<vmem>>, vector<256x32xf32>,
    %c0_i32_7 = arith.constant 0 : i32
    %13 = arith.cmpi eq, %arg1, %c0_i32_7 : i32
    %14 = arith.extui %13 : i1 to i32
    %c0_i32_8 = arith.constant 0 : i32
    %15 = arith.cmpi ne, %14, %c0_i32_8 : i32
    scf.if %15 {
      %c0_9 = arith.constant 0 : index
      %c0_10 = arith.constant 0 : index
      %16 = vector.load %arg4[%c0_9, %c0_10] : memref<256x32xf32, #tpu.memory_space<vmem>>, vector<256x32xf32>
      %c0_11 = arith.constant 0 : index
      %c0_12 = arith.constant 0 : index
      %17 = vector.load %arg12[%c0_11, %c0_12] : memref<256x32xf32, #tpu.memory_space<vmem>>, vector<256x32xf32>
      %c0_13 = arith.constant 0 : index
      %c0_14 = arith.constant 0 : index
      %18 = vector.load %arg5[%c0_13, %c0_14] : memref<256x1xf32, #tpu.memory_space<vmem>>, vector<256x1xf32>
      %19 = vector.broadcast %18 : vector<256x1xf32> to vector<256x32xf32>
      %20 = arith.mulf %17, %19 : vector<256x32xf32>
      %21 = arith.subf %16, %20 : vector<256x32xf32>
      %22 = arith.truncf %20 : vector<256x32xf32> to vector<256x32xbf16>
      %c0_15 = arith.constant 0 : index
      %c0_16 = arith.constant 0 : index
      %23 = vector.load %arg6[%c0_15, %c0_16] : memref<32x128xbf16, #tpu.memory_space<vmem>>, vector<32x128xbf16>
      %cst_17 = arith.constant dense<0.000000e+00> : vector<256x128xf32>
      %24 = tpu.matmul %22, %23, %cst_17 {dimension_numbers = #tpu.dot_dimension_numbers<[1], [0], [0], [1], [0, 0, 1, 1], [], []>} : vector<256x32xbf16>, vector<32x128xbf16>, vector<256x128xf32> -> vector<256x128xf32>
      %cst_18 = arith.constant 0.000000e+00 : f32
      %25 = vector.broadcast %cst_18 : f32 to vector<256x128xf32>
      %26 = arith.maximumf %24, %25 : vector<256x128xf32>
      %27 = arith.truncf %21 : vector<256x32xf32> to vector<256x32xbf16>
      %c0_19 = arith.constant 0 : index
      %c0_20 = arith.constant 0 : index
      %28 = vector.load %arg7[%c0_19, %c0_20] : memref<32x128xbf16, #tpu.memory_space<vmem>>, vector<32x128xbf16>
      %cst_21 = arith.constant dense<0.000000e+00> : vector<256x128xf32>
      %29 = tpu.matmul %27, %28, %cst_21 {dimension_numbers = #tpu.dot_dimension_numbers<[1], [0], [0], [1], [0, 0, 1, 1], [], []>} : vector<256x32xbf16>, vector<32x128xbf16>, vector<256x128xf32> -> vector<256x128xf32>
      %cst_22 = arith.constant 0.000000e+00 : f32
      %30 = vector.broadcast %cst_22 : f32 to vector<256x128xf32>
      %31 = arith.maximumf %29, %30 : vector<256x128xf32>
      %32 = arith.truncf %16 : vector<256x32xf32> to vector<256x32xbf16>
      %c0_23 = arith.constant 0 : index
      %c0_24 = arith.constant 0 : index
      %33 = vector.load %arg8[%c0_23, %c0_24] : memref<32x128xbf16, #tpu.memory_space<vmem>>, vector<32x128xbf16>
      %cst_25 = arith.constant dense<0.000000e+00> : vector<256x128xf32>
      %34 = tpu.matmul %32, %33, %cst_25 {dimension_numbers = #tpu.dot_dimension_numbers<[1], [0], [0], [1], [0, 0, 1, 1], [], []>} : vector<256x32xbf16>, vector<32x128xbf16>, vector<256x128xf32> -> vector<256x128xf32>
      %cst_26 = arith.constant 0.000000e+00 : f32
      %35 = vector.broadcast %cst_26 : f32 to vector<256x128xf32>
      %36 = arith.maximumf %34, %35 : vector<256x128xf32>
      %c0_27 = arith.constant 0 : index
      %c0_28 = arith.constant 0 : index
      %37 = vector.load %arg9[%c0_27, %c0_28] : memref<3x128xf32, #tpu.memory_space<vmem>>, vector<3x128xf32>
      %38 = vector.extract_strided_slice %37 {offsets = [0, 0], sizes = [1, 128], strides = [1, 1]} : vector<3x128xf32> to vector<1x128xf32>
      %39 = vector.broadcast %38 : vector<1x128xf32> to vector<256x128xf32>
      %40 = arith.mulf %26, %39 : vector<256x128xf32>
      %cst_29 = arith.constant dense<0.000000e+00> : vector<256xf32>
      %41 = vector.multi_reduction <add>, %40, %cst_29 [1] : vector<256x128xf32> to vector<256xf32>
      %42 = vector.shape_cast %41 : vector<256xf32> to vector<256x1xf32>
      %43 = arith.negf %42 : vector<256x1xf32>
      %44 = math.exp %43 : vector<256x1xf32>
      %cst_30 = arith.constant 1.000000e+00 : f32
      %45 = vector.broadcast %cst_30 : f32 to vector<256x1xf32>
      %46 = arith.addf %45, %44 : vector<256x1xf32>
      %47 = arith.divf %45, %46 : vector<256x1xf32>
      %48 = vector.extract_strided_slice %37 {offsets = [1, 0], sizes = [1, 128], strides = [1, 1]} : vector<3x128xf32> to vector<1x128xf32>
      %49 = vector.broadcast %48 : vector<1x128xf32> to vector<256x128xf32>
      %50 = arith.mulf %31, %49 : vector<256x128xf32>
      %cst_31 = arith.constant dense<0.000000e+00> : vector<256xf32>
      %51 = vector.multi_reduction <add>, %50, %cst_31 [1] : vector<256x128xf32> to vector<256xf32>
      %52 = vector.shape_cast %51 : vector<256xf32> to vector<256x1xf32>
      %53 = arith.negf %52 : vector<256x1xf32>
      %54 = math.exp %53 : vector<256x1xf32>
      %cst_32 = arith.constant 1.000000e+00 : f32
      %55 = vector.broadcast %cst_32 : f32 to vector<256x1xf32>
      %56 = arith.addf %55, %54 : vector<256x1xf32>
      %57 = arith.divf %55, %56 : vector<256x1xf32>
      %58 = vector.extract_strided_slice %37 {offsets = [2, 0], sizes = [1, 128], strides = [1, 1]} : vector<3x128xf32> to vector<1x128xf32>
      %59 = vector.broadcast %58 : vector<1x128xf32> to vector<256x128xf32>
      %60 = arith.mulf %36, %59 : vector<256x128xf32>
      %cst_33 = arith.constant dense<0.000000e+00> : vector<256xf32>
      %61 = vector.multi_reduction <add>, %60, %cst_33 [1] : vector<256x128xf32> to vector<256xf32>
      %62 = vector.shape_cast %61 : vector<256xf32> to vector<256x1xf32>
      %63 = arith.negf %62 : vector<256x1xf32>
      %64 = math.exp %63 : vector<256x1xf32>
      %cst_34 = arith.constant 1.000000e+00 : f32
      %65 = vector.broadcast %cst_34 : f32 to vector<256x1xf32>
      %66 = arith.addf %65, %64 : vector<256x1xf32>
      %67 = arith.divf %65, %66 : vector<256x1xf32>
      %c0_35 = arith.constant 0 : index
      %c0_36 = arith.constant 0 : index
      %68 = memref.load %arg10[%c0_35, %c0_36] : memref<3x3xf32, #tpu.memory_space<smem>>
      %69 = vector.broadcast %68 : f32 to vector<256x1xf32>
      %70 = arith.mulf %47, %69 : vector<256x1xf32>
      %c1 = arith.constant 1 : index
      %c0_37 = arith.constant 0 : index
      %71 = memref.load %arg10[%c1, %c0_37] : memref<3x3xf32, #tpu.memory_space<smem>>
      %72 = vector.broadcast %71 : f32 to vector<256x1xf32>
      %73 = arith.mulf %57, %72 : vector<256x1xf32>
      %74 = arith.addf %70, %73 : vector<256x1xf32>
      %c2 = arith.constant 2 : index
      %c0_38 = arith.constant 0 : index
      %75 = memref.load %arg10[%c2, %c0_38] : memref<3x3xf32, #tpu.memory_space<smem>>
      %76 = vector.broadcast %75 : f32 to vector<256x1xf32>
      %77 = arith.mulf %67, %76 : vector<256x1xf32>
      %78 = arith.addf %74, %77 : vector<256x1xf32>
      %cst_39 = arith.constant 3.000000e+00 : f32
      %79 = vector.broadcast %cst_39 : f32 to vector<256x1xf32>
      %80 = arith.divf %78, %79 : vector<256x1xf32>
      %c0_40 = arith.constant 0 : index
      %c1_41 = arith.constant 1 : index
      %81 = memref.load %arg10[%c0_40, %c1_41] : memref<3x3xf32, #tpu.memory_space<smem>>
      %82 = vector.broadcast %81 : f32 to vector<256x1xf32>
      %83 = arith.mulf %47, %82 : vector<256x1xf32>
      %c1_42 = arith.constant 1 : index
      %c1_43 = arith.constant 1 : index
      %84 = memref.load %arg10[%c1_42, %c1_43] : memref<3x3xf32, #tpu.memory_space<smem>>
      %85 = vector.broadcast %84 : f32 to vector<256x1xf32>
      %86 = arith.mulf %57, %85 : vector<256x1xf32>
      %87 = arith.addf %83, %86 : vector<256x1xf32>
      %c2_44 = arith.constant 2 : index
      %c1_45 = arith.constant 1 : index
      %88 = memref.load %arg10[%c2_44, %c1_45] : memref<3x3xf32, #tpu.memory_space<smem>>
      %89 = vector.broadcast %88 : f32 to vector<256x1xf32>
      %90 = arith.mulf %67, %89 : vector<256x1xf32>
      %91 = arith.addf %87, %90 : vector<256x1xf32>
      %cst_46 = arith.constant 3.000000e+00 : f32
      %92 = vector.broadcast %cst_46 : f32 to vector<256x1xf32>
      %93 = arith.divf %91, %92 : vector<256x1xf32>
      %c0_47 = arith.constant 0 : index
      %c2_48 = arith.constant 2 : index
      %94 = memref.load %arg10[%c0_47, %c2_48] : memref<3x3xf32, #tpu.memory_space<smem>>
      %95 = vector.broadcast %94 : f32 to vector<256x1xf32>
      %96 = arith.mulf %47, %95 : vector<256x1xf32>
      %c1_49 = arith.constant 1 : index
      %c2_50 = arith.constant 2 : index
      %97 = memref.load %arg10[%c1_49, %c2_50] : memref<3x3xf32, #tpu.memory_space<smem>>
      %98 = vector.broadcast %97 : f32 to vector<256x1xf32>
      %99 = arith.mulf %57, %98 : vector<256x1xf32>
      %100 = arith.addf %96, %99 : vector<256x1xf32>
      %c2_51 = arith.constant 2 : index
      %c2_52 = arith.constant 2 : index
      %101 = memref.load %arg10[%c2_51, %c2_52] : memref<3x3xf32, #tpu.memory_space<smem>>
      %102 = vector.broadcast %101 : f32 to vector<256x1xf32>
      %103 = arith.mulf %67, %102 : vector<256x1xf32>
      %104 = arith.addf %100, %103 : vector<256x1xf32>
      %cst_53 = arith.constant 3.000000e+00 : f32
      %105 = vector.broadcast %cst_53 : f32 to vector<256x1xf32>
      %106 = arith.divf %104, %105 : vector<256x1xf32>
      %107 = arith.maximumf %80, %93 : vector<256x1xf32>
      %108 = arith.maximumf %107, %106 : vector<256x1xf32>
      %109 = arith.subf %80, %108 : vector<256x1xf32>
      %110 = math.exp %109 : vector<256x1xf32>
      %111 = arith.subf %93, %108 : vector<256x1xf32>
      %112 = math.exp %111 : vector<256x1xf32>
      %113 = arith.subf %106, %108 : vector<256x1xf32>
      %114 = math.exp %113 : vector<256x1xf32>
      %115 = arith.addf %110, %112 : vector<256x1xf32>
      %116 = arith.addf %115, %114 : vector<256x1xf32>
      %117 = tpu.reciprocal %116 {approx = true} : vector<256x1xf32> -> vector<256x1xf32>
      %118 = arith.mulf %110, %117 : vector<256x1xf32>
      %119 = vector.broadcast %118 : vector<256x1xf32> to vector<256x128xf32>
      %120 = arith.mulf %119, %26 : vector<256x128xf32>
      %121 = arith.mulf %112, %117 : vector<256x1xf32>
      %122 = vector.broadcast %121 : vector<256x1xf32> to vector<256x128xf32>
      %123 = arith.mulf %122, %31 : vector<256x128xf32>
      %124 = arith.addf %120, %123 : vector<256x128xf32>
      %125 = arith.mulf %114, %117 : vector<256x1xf32>
      %126 = vector.broadcast %125 : vector<256x1xf32> to vector<256x128xf32>
      %127 = arith.mulf %126, %36 : vector<256x128xf32>
      %128 = arith.addf %124, %127 : vector<256x128xf32>
      %cst_54 = arith.constant 3.000000e+00 : f32
      %129 = vector.broadcast %cst_54 : f32 to vector<256x128xf32>
      %130 = arith.mulf %129, %128 : vector<256x128xf32>
      %c0_55 = arith.constant 0 : index
      %c0_56 = arith.constant 0 : index
      %131 = vector.load %arg11[%c0_55, %c0_56] : memref<256x128xf32, #tpu.memory_space<vmem>>, vector<256x128xf32>
      tpu.vector_store %arg11[%c0_55, %c0_56], %130 {strides = array<i32>} : memref<256x128xf32, #tpu.memory_space<vmem>>, vector<256x128xf32>,
    } else {
    }
    return
  }
  func.func @transform_0(%arg0: i32, %arg1: i32) -> (i32, i32) {
    %c0_i32 = arith.constant 0 : i32
    return %arg0, %arg1 : i32, i32
  }
  func.func @transform_1(%arg0: i32, %arg1: i32) -> (i32, i32) {
    %c0_i32 = arith.constant 0 : i32
    %c0_i32_0 = arith.constant 0 : i32
    %c0_i32_1 = arith.constant 0 : i32
    return %c0_i32, %c0_i32_0 : i32, i32
  }
  func.func @transform_2(%arg0: i32, %arg1: i32) -> (i32, i32) {
    %c0_i32 = arith.constant 0 : i32
    %c0_i32_0 = arith.constant 0 : i32
    return %arg0, %c0_i32 : i32, i32
  }
  func.func @transform_3(%arg0: i32, %arg1: i32) -> (i32, i32) {
    %c0_i32 = arith.constant 0 : i32
    %c0_i32_0 = arith.constant 0 : i32
    return %arg0, %c0_i32 : i32, i32
  }
  func.func @transform_4(%arg0: i32, %arg1: i32) -> (i32, i32) {
    %c0_i32 = arith.constant 0 : i32
    %c0_i32_0 = arith.constant 0 : i32
    %c0_i32_1 = arith.constant 0 : i32
    return %c0_i32, %c0_i32_0 : i32, i32
  }
  func.func @transform_5(%arg0: i32, %arg1: i32) -> (i32, i32) {
    %c0_i32 = arith.constant 0 : i32
    %c0_i32_0 = arith.constant 0 : i32
    %c0_i32_1 = arith.constant 0 : i32
    return %c0_i32, %c0_i32_0 : i32, i32
  }
  func.func @transform_6(%arg0: i32, %arg1: i32) -> (i32, i32) {
    %c0_i32 = arith.constant 0 : i32
    %c0_i32_0 = arith.constant 0 : i32
    %c0_i32_1 = arith.constant 0 : i32
    return %c0_i32, %c0_i32_0 : i32, i32
  }
  func.func @transform_7(%arg0: i32, %arg1: i32) -> (i32, i32) {
    %c0_i32 = arith.constant 0 : i32
    %c0_i32_0 = arith.constant 0 : i32
    %c0_i32_1 = arith.constant 0 : i32
    return %c0_i32, %c0_i32_0 : i32, i32
  }
  func.func @transform_8(%arg0: i32, %arg1: i32) -> (i32, i32) {
    %c0_i32 = arith.constant 0 : i32
    %c0_i32_0 = arith.constant 0 : i32
    %c0_i32_1 = arith.constant 0 : i32
    return %c0_i32, %c0_i32_0 : i32, i32
  }
  func.func @transform_9(%arg0: i32, %arg1: i32) -> (i32, i32) {
    %c0_i32 = arith.constant 0 : i32
    %c0_i32_0 = arith.constant 0 : i32
    return %arg0, %c0_i32 : i32, i32
  }
}

</mosaic_0001>

<llo_original>
// kernel: tpu_custom_call.1
$region0: #{tpu_custom_call.1}
  #allocation0 [shape = 'u32[]', space=smem, size = 0x4, offset = 0x4, fixed_abs, tag = 'smem constant byte address 0x4 - core index']
  #allocation1 [shape = 'u32[144,128]{1,0:T(1,128)}', space=vmem, size = 0x12000, scoped, tag = 'internal scratch']
  #allocation2 [shape = 'f32[256,32]{1,0:T(8,128)}', space=vmem, size = 0x20000, scoped, tag = 'scratch operand']
  %s0 = inlined_call_operand.vmem [shape: s8[512,512], index: 0, kind: input, shape index: {}]
  %s1 = inlined_call_operand.vmem [shape: bf16[512,32], index: 1, kind: input, shape index: {}]
  %s2 = inlined_call_operand.vmem [shape: f32[512,32], index: 2, kind: input, shape index: {}]
  %s3 = inlined_call_operand.vmem [shape: f32[512,1], index: 3, kind: input, shape index: {}]
  %s4 = inlined_call_operand.vmem [shape: bf16[32,128], index: 4, kind: input, shape index: {}]
  %s5 = inlined_call_operand.vmem [shape: bf16[32,128], index: 5, kind: input, shape index: {}]
  %s6 = inlined_call_operand.vmem [shape: bf16[32,128], index: 6, kind: input, shape index: {}]
  %s7 = inlined_call_operand.vmem [shape: f32[3,128], index: 7, kind: input, shape index: {}]
  %s8 = inlined_call_operand.vmem [shape: f32[3,3], index: 8, kind: input, shape index: {}]
  %s9 = inlined_call_operand.hbm [shape: f32[512,128], index: 9, kind: output, shape index: {}]
  %s10 = sld [smem:[#allocation0]]
  $region81: #{tpu_custom_call.1} parent=0
    _
  %s12 = ssub.s32 1, %s10
  %s13 = scalar_select 0, %s12, %s10
  $region1: #{tpu_custom_call.1} parent=0
    #allocation3 [shape = 'u8[2048]{0}', space=smem, size = 0x800, scoped, tag = 'input window, operand 8, single buffered']
    #allocation4 [shape = 's32[2]{0}', space=sflag, size = 0x8, scoped, tag = 'scoped memory for tpu_custom_call.1']
    #allocation5 [shape = 's32[2]{0}', space=sflag, size = 0x8, scoped, tag = 'scoped memory for tpu_custom_call.1']
    #allocation6 [shape = 'u8[262144]{0}', space=vmem, size = 0x40000, scoped, tag = 'output window, operand 0']
    %14 = vsyncpa [#allocation5], 0
    %15 = vsyncpa [#allocation4], 0
    %s16 = scalar_lea.sflag [#allocation4], 1
    %17 = vsyncpa %s16, 0
    loop: start=0, step=1, limit=4
    $region2: #{tpu_custom_call.1} parent=1 // loop_pre_header
      _
    $region3: #{tpu_custom_call.1} parent=1 // loop_header
      %s19 = sphi 0, %s23
      %p20 = scmp.ge.s32.totalorder %s19, 4
      %s26 = sphi 0, %s38
      %s27 = sphi 0, %s34
      %s28 = sphi 0, %s26
      %s29 = sphi 0, %s27
      %s30 = sphi 0, %s28
      %s31 = sphi 0, %s29
      %s43 = sphi 0, %s45
      %s46 = sphi 0, %s43
      %s47 = sphi 0, %s46
      %s63 = sphi 0, %s47
      %s67 = sphi 0, %s67
      %s69 = sphi 0, %s67
      %s70 = sphi 0, %s69
      %s84 = sphi 0, %s70
      %s90 = sphi 0, %s92
      %s93 = sphi 0, %s90
      %s94 = sphi 0, %s93
      %s110 = sphi 0, %s94
      %s116 = sphi 0, %s118
      %s119 = sphi 0, %s116
      %s120 = sphi 0, %s119
      %s136 = sphi 0, %s120
      %s140 = sphi 0, %s140
      %s142 = sphi 0, %s140
      %s143 = sphi 0, %s142
      %s157 = sphi 0, %s143
      %s161 = sphi 0, %s161
      %s163 = sphi 0, %s161
      %s164 = sphi 0, %s163
      %s178 = sphi 0, %s164
      %s182 = sphi 0, %s182
      %s184 = sphi 0, %s182
      %s185 = sphi 0, %s184
      %s199 = sphi 0, %s185
      %s203 = sphi 0, %s203
      %s205 = sphi 0, %s203
      %s206 = sphi 0, %s205
      %s220 = sphi 0, %s206
      %s224 = sphi 0, %s224
      %s226 = sphi 0, %s224
      %s227 = sphi 0, %s226
      %s241 = sphi 0, %s227
      %s247 = sphi 0, %s249
      %s250 = sphi 0, %s247
      %s251 = sphi 0, %s250
      %s267 = sphi 0, %s251
    $region4: #{tpu_custom_call.1} parent=1 // loop_header_branch
      %22 = sbr.rel (%p20) target = $region8
    $region5: #{tpu_custom_call.1} parent=1 // loop_body
      %s24 = ssub.s32 %s19, 1
      %s25 = ssub.s32 %s19, 2
      %s32 = sadd.s32 1, %s27
      %p33 = scmp.ge.s32.totalorder %s32, 1
      %s34 = scalar_select %p33, 0, %s32
      %s35 = sadd.s32 1, %s26
      %s36 = scalar_select %p33, %s35, %s26
      %p37 = scmp.ge.s32.totalorder %s36, 2
      %s38 = scalar_select %p37, 0, %s36
      %s39 = ssub.s32 %s26, %s38
      %s40 = ssub.s32 %s27, %s34
      %s41 = sor.u32 %s39, %s40
      %p42 = scmp.eq.s32.totalorder %s41, 0
      %s44 = sadd.s32 %s43, 1
      %s45 = scalar_select %p42, %s43, %s44
      %p48 = pneg %p42
      %p49 = scmp.eq.s32.totalorder %s19, 1
      %p50 = por %p48, %p49
      %p51 = scmp.ne.s32.totalorder %s43, %s46
      %p52 = scmp.eq.s32.totalorder %s19, 0
      %p53 = por %p51, %p52
      %p54 = scmp.ne.s32.totalorder %s43, %s46
      %p55 = scmp.eq.s32.totalorder %s24, 1
      %p56 = por %p54, %p55
      %p57 = scmp.ne.s32.totalorder %s46, %s47
      %p58 = scmp.eq.s32.totalorder %s24, 0
      %p59 = por %p57, %p58
      %p60 = scmp.ne.s32.totalorder %s46, %s47
      %p61 = scmp.eq.s32.totalorder %s25, 1
      %p62 = por %p60, %p61
      %p64 = scmp.ne.s32.totalorder %s47, %s63
      %p65 = scmp.eq.s32.totalorder %s25, 0
      %p66 = por %p64, %p65
      %s68 = sadd.s32 %s67, 1
      %p71 = scmp.eq.s32.totalorder %s19, 1
      %p72 = scmp.ne.s32.totalorder %s67, %s69
      %p73 = scmp.eq.s32.totalorder %s19, 0
      %p74 = por %p72, %p73
      %p75 = scmp.ne.s32.totalorder %s67, %s69
      %p76 = scmp.eq.s32.totalorder %s24, 1
      %p77 = por %p75, %p76
      %p78 = scmp.ne.s32.totalorder %s69, %s70
      %p79 = scmp.eq.s32.totalorder %s24, 0
      %p80 = por %p78, %p79
      %p81 = scmp.ne.s32.totalorder %s69, %s70
      %p82 = scmp.eq.s32.totalorder %s25, 1
      %p83 = por %p81, %p82
      %p85 = scmp.ne.s32.totalorder %s70, %s84
      %p86 = scmp.eq.s32.totalorder %s25, 0
      %p87 = por %p85, %p86
      %s88 = ssub.s32 %s26, %s38
      %p89 = scmp.eq.s32.totalorder %s88, 0
      %s91 = sadd.s32 %s90, 1
      %s92 = scalar_select %p89, %s90, %s91
      %p95 = pneg %p89
      %p96 = scmp.eq.s32.totalorder %s19, 1
      %p97 = por %p95, %p96
      %p98 = scmp.ne.s32.totalorder %s90, %s93
      %p99 = scmp.eq.s32.totalorder %s19, 0
      %p100 = por %p98, %p99
      %p101 = scmp.ne.s32.totalorder %s90, %s93
      %p102 = scmp.eq.s32.totalorder %s24, 1
      %p103 = por %p101, %p102
      %p104 = scmp.ne.s32.totalorder %s93, %s94
      %p105 = scmp.eq.s32.totalorder %s24, 0
      %p106 = por %p104, %p105
      %p107 = scmp.ne.s32.totalorder %s93, %s94
      %p108 = scmp.eq.s32.totalorder %s25, 1
      %p109 = por %p107, %p108
      %p111 = scmp.ne.s32.totalorder %s94, %s110
      %p112 = scmp.eq.s32.totalorder %s25, 0
      %p113 = por %p111, %p112
      %s114 = ssub.s32 %s26, %s38
      %p115 = scmp.eq.s32.totalorder %s114, 0
      %s117 = sadd.s32 %s116, 1
      %s118 = scalar_select %p115, %s116, %s117
      %p121 = pneg %p115
      %p122 = scmp.eq.s32.totalorder %s19, 1
      %p123 = por %p121, %p122
      %p124 = scmp.ne.s32.totalorder %s116, %s119
      %p125 = scmp.eq.s32.totalorder %s19, 0
      %p126 = por %p124, %p125
      %p127 = scmp.ne.s32.totalorder %s116, %s119
      %p128 = scmp.eq.s32.totalorder %s24, 1
      %p129 = por %p127, %p128
      %p130 = scmp.ne.s32.totalorder %s119, %s120
      %p131 = scmp.eq.s32.totalorder %s24, 0
      %p132 = por %p130, %p131
      %p133 = scmp.ne.s32.totalorder %s119, %s120
      %p134 = scmp.eq.s32.totalorder %s25, 1
      %p135 = por %p133, %p134
      %p137 = scmp.ne.s32.totalorder %s120, %s136
      %p138 = scmp.eq.s32.totalorder %s25, 0
      %p139 = por %p137, %p138
      %s141 = sadd.s32 %s140, 1
      %p144 = scmp.eq.s32.totalorder %s19, 1
      %p145 = scmp.ne.s32.totalorder %s140, %s142
      %p146 = scmp.eq.s32.totalorder %s19, 0
      %p147 = por %p145, %p146
      %p148 = scmp.ne.s32.totalorder %s140, %s142
      %p149 = scmp.eq.s32.totalorder %s24, 1
      %p150 = por %p148, %p149
      %p151 = scmp.ne.s32.totalorder %s142, %s143
      %p152 = scmp.eq.s32.totalorder %s24, 0
      %p153 = por %p151, %p152
      %p154 = scmp.ne.s32.totalorder %s142, %s143
      %p155 = scmp.eq.s32.totalorder %s25, 1
      %p156 = por %p154, %p155
      %p158 = scmp.ne.s32.totalorder %s143, %s157
      %p159 = scmp.eq.s32.totalorder %s25, 0
      %p160 = por %p158, %p159
      %s162 = sadd.s32 %s161, 1
      %p165 = scmp.eq.s32.totalorder %s19, 1
      %p166 = scmp.ne.s32.totalorder %s161, %s163
      %p167 = scmp.eq.s32.totalorder %s19, 0
      %p168 = por %p166, %p167
      %p169 = scmp.ne.s32.totalorder %s161, %s163
      %p170 = scmp.eq.s32.totalorder %s24, 1
      %p171 = por %p169, %p170
      %p172 = scmp.ne.s32.totalorder %s163, %s164
      %p173 = scmp.eq.s32.totalorder %s24, 0
      %p174 = por %p172, %p173
      %p175 = scmp.ne.s32.totalorder %s163, %s164
      %p176 = scmp.eq.s32.totalorder %s25, 1
      %p177 = por %p175, %p176
      %p179 = scmp.ne.s32.totalorder %s164, %s178
      %p180 = scmp.eq.s32.totalorder %s25, 0
      %p181 = por %p179, %p180
      %s183 = sadd.s32 %s182, 1
      %p186 = scmp.eq.s32.totalorder %s19, 1
      %p187 = scmp.ne.s32.totalorder %s182, %s184
      %p188 = scmp.eq.s32.totalorder %s19, 0
      %p189 = por %p187, %p188
      %p190 = scmp.ne.s32.totalorder %s182, %s184
      %p191 = scmp.eq.s32.totalorder %s24, 1
      %p192 = por %p190, %p191
      %p193 = scmp.ne.s32.totalorder %s184, %s185
      %p194 = scmp.eq.s32.totalorder %s24, 0
      %p195 = por %p193, %p194
      %p196 = scmp.ne.s32.totalorder %s184, %s185
      %p197 = scmp.eq.s32.totalorder %s25, 1
      %p198 = por %p196, %p197
      %p200 = scmp.ne.s32.totalorder %s185, %s199
      %p201 = scmp.eq.s32.totalorder %s25, 0
      %p202 = por %p200, %p201
      %s204 = sadd.s32 %s203, 1
      %p207 = scmp.eq.s32.totalorder %s19, 1
      %p208 = scmp.ne.s32.totalorder %s203, %s205
      %p209 = scmp.eq.s32.totalorder %s19, 0
      %p210 = por %p208, %p209
      %p211 = scmp.ne.s32.totalorder %s203, %s205
      %p212 = scmp.eq.s32.totalorder %s24, 1
      %p213 = por %p211, %p212
      %p214 = scmp.ne.s32.totalorder %s205, %s206
      %p215 = scmp.eq.s32.totalorder %s24, 0
      %p216 = por %p214, %p215
      %p217 = scmp.ne.s32.totalorder %s205, %s206
      %p218 = scmp.eq.s32.totalorder %s25, 1
      %p219 = por %p217, %p218
      %p221 = scmp.ne.s32.totalorder %s206, %s220
      %p222 = scmp.eq.s32.totalorder %s25, 0
      %p223 = por %p221, %p222
      %s225 = sadd.s32 %s224, 1
      %p228 = scmp.eq.s32.totalorder %s19, 1
      %p229 = scmp.ne.s32.totalorder %s224, %s226
      %p230 = scmp.eq.s32.totalorder %s19, 0
      %p231 = por %p229, %p230
      %p232 = scmp.ne.s32.totalorder %s224, %s226
      %p233 = scmp.eq.s32.totalorder %s24, 1
      %p234 = por %p232, %p233
      %p235 = scmp.ne.s32.totalorder %s226, %s227
      %p236 = scmp.eq.s32.totalorder %s24, 0
      %p237 = por %p235, %p236
      %p238 = scmp.ne.s32.totalorder %s226, %s227
      %p239 = scmp.eq.s32.totalorder %s25, 1
      %p240 = por %p238, %p239
      %p242 = scmp.ne.s32.totalorder %s227, %s241
      %p243 = scmp.eq.s32.totalorder %s25, 0
      %p244 = por %p242, %p243
      %s245 = ssub.s32 %s26, %s38
      %p246 = scmp.eq.s32.totalorder %s245, 0
      %s248 = sadd.s32 %s247, 1
      %s249 = scalar_select %p246, %s247, %s248
      %p252 = pneg %p246
      %p253 = scmp.eq.s32.totalorder %s19, 1
      %p254 = por %p252, %p253
      %p255 = scmp.ne.s32.totalorder %s247, %s250
      %p256 = scmp.eq.s32.totalorder %s19, 0
      %p257 = por %p255, %p256
      %p258 = scmp.ne.s32.totalorder %s247, %s250
      %p259 = scmp.eq.s32.totalorder %s24, 1
      %p260 = por %p258, %p259
      %p261 = scmp.ne.s32.totalorder %s250, %s251
      %p262 = scmp.eq.s32.totalorder %s24, 0
      %p263 = por %p261, %p262
      %p264 = scmp.ne.s32.totalorder %s250, %s251
      %p265 = scmp.eq.s32.totalorder %s25, 1
      %p266 = por %p264, %p265
      %p268 = scmp.ne.s32.totalorder %s251, %s267
      %p269 = scmp.eq.s32.totalorder %s25, 0
      %p270 = por %p268, %p269
      %p271 = scmp.le.s32.totalorder 1, %s19
      %p272 = scmp.lt.s32.totalorder %s19, 3
      %p273 = pnand %p271, %p272
      %p274 = pneg %p273
      // Predicated region
      $region9: #{tpu_custom_call.1} parent=5 // pred_check
        _
      $region10: #{tpu_custom_call.1} parent=5 // pred_check_branch
        %276 = sbr.rel (%p273) target = $region12
      $region11: #{tpu_custom_call.1} parent=5 // pred_region
        %s277 = ssub.s32 %s19, 1
        // Predicated region
        $region13: #{tpu_custom_call.1} parent=11 // pred_check
          %p278 = pneg %p80
        $region14: #{tpu_custom_call.1} parent=11 // pred_check_branch
          %280 = sbr.rel (%p278) target = $region16
        $region15: #{tpu_custom_call.1} parent=11 // pred_region
          _
        $region16: #{tpu_custom_call.1} parent=11 // pred_fallthru
          _
        // Predicated region
        $region17: #{tpu_custom_call.1} parent=11 // pred_check
          %p281 = pneg %p153
        $region18: #{tpu_custom_call.1} parent=11 // pred_check_branch
          %283 = sbr.rel (%p281) target = $region20
        $region19: #{tpu_custom_call.1} parent=11 // pred_region
          _
        $region20: #{tpu_custom_call.1} parent=11 // pred_fallthru
          _
        // Predicated region
        $region21: #{tpu_custom_call.1} parent=11 // pred_check
          %p284 = pneg %p174
        $region22: #{tpu_custom_call.1} parent=11 // pred_check_branch
          %286 = sbr.rel (%p284) target = $region24
        $region23: #{tpu_custom_call.1} parent=11 // pred_region
          _
        $region24: #{tpu_custom_call.1} parent=11 // pred_fallthru
          _
        // Predicated region
        $region25: #{tpu_custom_call.1} parent=11 // pred_check
          %p287 = pneg %p195
        $region26: #{tpu_custom_call.1} parent=11 // pred_check_branch
          %289 = sbr.rel (%p287) target = $region28
        $region27: #{tpu_custom_call.1} parent=11 // pred_region
          _
        $region28: #{tpu_custom_call.1} parent=11 // pred_fallthru
          _
        // Predicated region
        $region29: #{tpu_custom_call.1} parent=11 // pred_check
          %p290 = pneg %p216
        $region30: #{tpu_custom_call.1} parent=11 // pred_check_branch
          %292 = sbr.rel (%p290) target = $region32
        $region31: #{tpu_custom_call.1} parent=11 // pred_region
          _
        $region32: #{tpu_custom_call.1} parent=11 // pred_fallthru
          _
        // Predicated region
        $region33: #{tpu_custom_call.1} parent=11 // pred_check
          %p293 = pneg %p237
        $region34: #{tpu_custom_call.1} parent=11 // pred_check_branch
          %295 = sbr.rel (%p293) target = $region36
        $region35: #{tpu_custom_call.1} parent=11 // pred_region
          %s297 = ssub.s32 64, 64
          %298 = vsyncadd [#allocation5], %s297
          %s300 = sshll.u32 %s8, 4
          %s301 = int_to_ptr.vmem [resolvable:$true] %s300
          %303 = dma.vmem_to_smem %s301, 64, [#allocation3], [#allocation5]
        $region36: #{tpu_custom_call.1} parent=11 // pred_fallthru
          _
      $region12: #{tpu_custom_call.1} parent=5 // pred_fallthru
        _
      %p304 = scmp.lt.s32.totalorder %s19, 2
      // Predicated region
      $region37: #{tpu_custom_call.1} parent=5 // pred_check
        %p305 = pneg %p304
      $region38: #{tpu_custom_call.1} parent=5 // pred_check_branch
        %307 = sbr.rel (%p305) target = $region40
      $region39: #{tpu_custom_call.1} parent=5 // pred_region
        // Predicated region
        $region41: #{tpu_custom_call.1} parent=39 // pred_check
          %p308 = pneg %p53
        $region42: #{tpu_custom_call.1} parent=39 // pred_check_branch
          %310 = sbr.rel (%p308) target = $region44
        $region43: #{tpu_custom_call.1} parent=39 // pred_region
          %s311 = smul.u32 8, %s26
          %s312 = smul.u32 4, %s27
          %p313 = scmp.lt.s32.totalorder %s311, 15
          %s314 = scalar_select %p313, %s311, 15
          %p315 = scmp.lt.s32.totalorder %s312, 3
          %s316 = scalar_select %p315, %s312, 3
          %s317 = smul.addr %s314, 4
          %s318 = sadd.s32 %s316, %s317
          %s319 = smul.addr %s318, 8
          %s320 = scalar_lea.vmem %s0, %s319
          %s321 = smul.u32 8, %s26
          %s322 = smul.u32 4, %s27
        $region44: #{tpu_custom_call.1} parent=39 // pred_fallthru
          _
        // Predicated region
        $region45: #{tpu_custom_call.1} parent=39 // pred_check
          %p323 = pneg %p100
        $region46: #{tpu_custom_call.1} parent=39 // pred_check_branch
          %325 = sbr.rel (%p323) target = $region48
        $region47: #{tpu_custom_call.1} parent=39 // pred_region
          %s326 = smul.u32 32, %s26
          %p327 = scmp.lt.s32.totalorder %s326, 63
          %s328 = scalar_select %p327, %s326, 63
          %s329 = smul.addr %s328, 8
          %s330 = scalar_lea.vmem %s2, %s329
          %s331 = smul.u32 32, %s26
        $region48: #{tpu_custom_call.1} parent=39 // pred_fallthru
          _
        // Predicated region
        $region49: #{tpu_custom_call.1} parent=39 // pred_check
          %p332 = pneg %p126
        $region50: #{tpu_custom_call.1} parent=39 // pred_check_branch
          %334 = sbr.rel (%p332) target = $region52
        $region51: #{tpu_custom_call.1} parent=39 // pred_region
          %s335 = smul.u32 32, %s26
          %p336 = scmp.lt.s32.totalorder %s335, 63
          %s337 = scalar_select %p336, %s335, 63
          %s338 = smul.addr %s337, 8
          %s339 = scalar_lea.vmem %s3, %s338
          %s340 = smul.u32 32, %s26
        $region52: #{tpu_custom_call.1} parent=39 // pred_fallthru
          _
      $region40: #{tpu_custom_call.1} parent=5 // pred_fallthru
        _
      %p341 = scmp.le.s32.totalorder 1, %s19
      %p342 = scmp.lt.s32.totalorder %s19, 3
      %p343 = pnand %p341, %p342
      %p344 = pneg %p343
      // Predicated region
      $region53: #{tpu_custom_call.1} parent=5 // pred_check
        _
      $region54: #{tpu_custom_call.1} parent=5 // pred_check_branch
        %346 = sbr.rel (%p343) target = $region56
      $region55: #{tpu_custom_call.1} parent=5 // pred_region
        %s347 = ssub.s32 %s19, 1
        // Predicated region
        $region57: #{tpu_custom_call.1} parent=55 // pred_check
          %p348 = pneg %p237
        $region58: #{tpu_custom_call.1} parent=55 // pred_check_branch
          %350 = sbr.rel (%p348) target = $region60
        $region59: #{tpu_custom_call.1} parent=55 // pred_region
          %351 = dma.done [#allocation5], 64
        $region60: #{tpu_custom_call.1} parent=55 // pred_fallthru
          _
        %352 = sfence
        %s353 = smul.u32 8, %s28
        %s354 = smul.u32 4, %s29
        %p355 = scmp.lt.s32.totalorder %s353, 15
        %s356 = scalar_select %p355, %s353, 15
        %p357 = scmp.lt.s32.totalorder %s354, 3
        %s358 = scalar_select %p357, %s354, 3
        %s359 = smul.addr %s356, 4
        %s360 = sadd.s32 %s358, %s359
        %s361 = smul.addr %s360, 8
        %s362 = scalar_lea.vmem %s0, %s361
        %p363 = pneg %p59
        %p364 = pneg %p56
        %p365 = pneg %p80
        %p366 = pneg %p77
        %s367 = smul.u32 32, %s28
        %p368 = scmp.lt.s32.totalorder %s367, 63
        %s369 = scalar_select %p368, %s367, 63
        %s370 = smul.addr %s369, 8
        %s371 = scalar_lea.vmem %s2, %s370
        %p372 = pneg %p106
        %p373 = pneg %p103
        %s374 = smul.u32 32, %s28
        %p375 = scmp.lt.s32.totalorder %s374, 63
        %s376 = scalar_select %p375, %s374, 63
        %s377 = smul.addr %s376, 8
        %s378 = scalar_lea.vmem %s3, %s377
        %p379 = pneg %p132
        %p380 = pneg %p129
        %p381 = pneg %p153
        %p382 = pneg %p150
        %p383 = pneg %p174
        %p384 = pneg %p171
        %p385 = pneg %p195
        %p386 = pneg %p192
        %p387 = pneg %p216
        %p388 = pneg %p213
        %p389 = pneg %p237
        %p390 = pneg %p234
        %p391 = pneg %p263
        %p392 = pneg %p260
        %s393 = sand.u32 %s250, 1
        %s394 = scalar_lea.sflag [#allocation4], %s393
        %s395 = sand.u32 %s250, 1
        %s396 = smul.addr %s395, 256
        %s397 = scalar_lea.vmem [#allocation6], %s396
        %s398 = smul.u32 8, %s28
        %s399 = smul.u32 4, %s29
        %p400 = scmp.lt.s32.totalorder %s398, 15
        %s401 = scalar_select %p400, %s398, 15
        %p402 = scmp.lt.s32.totalorder %s399, 3
        %s403 = scalar_select %p402, %s399, 3
        %s404 = smul.addr %s401, 4
        %s405 = sadd.s32 %s403, %s404
        %s406 = smul.addr %s405, 8
        %s407 = scalar_lea.vmem %s0, %s406
        %s408 = smul.u32 8, %s28
        %s409 = smul.u32 4, %s29
        %s410 = smul.u32 32, %s28
        %p411 = scmp.lt.s32.totalorder %s410, 63
        %s412 = scalar_select %p411, %s410, 63
        %s413 = smul.addr %s412, 8
        %s414 = scalar_lea.vmem %s2, %s413
        %s415 = smul.u32 32, %s28
        %s416 = smul.u32 32, %s28
        %p417 = scmp.lt.s32.totalorder %s416, 63
        %s418 = scalar_select %p417, %s416, 63
        %s419 = smul.addr %s418, 8
        %s420 = scalar_lea.vmem %s3, %s419
        %s421 = smul.u32 32, %s28
        %s422 = smul.u32 32, %s28
        %p424 = scmp.eq.s32.totalorder %s29, 0
        // Predicated region
        $region61: #{tpu_custom_call.1} parent=55 // pred_check
          %p425 = pneg %p424
        $region62: #{tpu_custom_call.1} parent=55 // pred_check_branch
          %427 = sbr.rel (%p425) target = $region64
        $region63: #{tpu_custom_call.1} parent=55 // pred_region
          %vm428 = vcmask 261120
          %429 = vst.msk [vmem:[#allocation2] sm:$0xff] %vm428, 0.0
          %430 = vst.msk [vmem:[#allocation2 + $0x8] sm:$0xff] %vm428, 0.0
          %431 = vst.msk [vmem:[#allocation2 + $0x10] sm:$0xff] %vm428, 0.0
          %432 = vst.msk [vmem:[#allocation2 + $0x18] sm:$0xff] %vm428, 0.0
          %433 = vst.msk [vmem:[#allocation2 + $0x20] sm:$0xff] %vm428, 0.0
          %434 = vst.msk [vmem:[#allocation2 + $0x28] sm:$0xff] %vm428, 0.0
          %435 = vst.msk [vmem:[#allocation2 + $0x30] sm:$0xff] %vm428, 0.0
          %436 = vst.msk [vmem:[#allocation2 + $0x38] sm:$0xff] %vm428, 0.0
          %437 = vst.msk [vmem:[#allocation2 + $0x40] sm:$0xff] %vm428, 0.0
          %438 = vst.msk [vmem:[#allocation2 + $0x48] sm:$0xff] %vm428, 0.0
          %439 = vst.msk [vmem:[#allocation2 + $0x50] sm:$0xff] %vm428, 0.0
          %440 = vst.msk [vmem:[#allocation2 + $0x58] sm:$0xff] %vm428, 0.0
          %441 = vst.msk [vmem:[#allocation2 + $0x60] sm:$0xff] %vm428, 0.0
          %442 = vst.msk [vmem:[#allocation2 + $0x68] sm:$0xff] %vm428, 0.0
          %443 = vst.msk [vmem:[#allocation2 + $0x70] sm:$0xff] %vm428, 0.0
          %444 = vst.msk [vmem:[#allocation2 + $0x78] sm:$0xff] %vm428, 0.0
          %445 = vst.msk [vmem:[#allocation2 + $0x80] sm:$0xff] %vm428, 0.0
          %446 = vst.msk [vmem:[#allocation2 + $0x88] sm:$0xff] %vm428, 0.0
          %447 = vst.msk [vmem:[#allocation2 + $0x90] sm:$0xff] %vm428, 0.0
          %448 = vst.msk [vmem:[#allocation2 + $0x98] sm:$0xff] %vm428, 0.0
          %449 = vst.msk [vmem:[#allocation2 + $0xa0] sm:$0xff] %vm428, 0.0
          %450 = vst.msk [vmem:[#allocation2 + $0xa8] sm:$0xff] %vm428, 0.0
          %451 = vst.msk [vmem:[#allocation2 + $0xb0] sm:$0xff] %vm428, 0.0
          %452 = vst.msk [vmem:[#allocation2 + $0xb8] sm:$0xff] %vm428, 0.0
          %453 = vst.msk [vmem:[#allocation2 + $0xc0] sm:$0xff] %vm428, 0.0
          %454 = vst.msk [vmem:[#allocation2 + $0xc8] sm:$0xff] %vm428, 0.0
          %455 = vst.msk [vmem:[#allocation2 + $0xd0] sm:$0xff] %vm428, 0.0
          %456 = vst.msk [vmem:[#allocation2 + $0xd8] sm:$0xff] %vm428, 0.0
          %457 = vst.msk [vmem:[#allocation2 + $0xe0] sm:$0xff] %vm428, 0.0
          %458 = vst.msk [vmem:[#allocation2 + $0xe8] sm:$0xff] %vm428, 0.0
          %459 = vst.msk [vmem:[#allocation2 + $0xf0] sm:$0xff] %vm428, 0.0
          %460 = vst.msk [vmem:[#allocation2 + $0xf8] sm:$0xff] %vm428, 0.0
        $region64: #{tpu_custom_call.1} parent=55 // pred_fallthru
          _
        %v461 = vld [vmem:[%s407] sm:$0xff]
        %v462 = vld [vmem:[%s407 + $0x8] sm:$0xff]
        %v463 = vld [vmem:[%s407 + $0x10] sm:$0xff]
        %v464 = vld [vmem:[%s407 + $0x18] sm:$0xff]
        %v465 = vld [vmem:[%s407 + $0x20] sm:$0xff]
        %v466 = vld [vmem:[%s407 + $0x28] sm:$0xff]
        %v467 = vld [vmem:[%s407 + $0x30] sm:$0xff]
        %v468 = vld [vmem:[%s407 + $0x38] sm:$0xff]
        %v469 = vld [vmem:[%s407 + $0x40] sm:$0xff]
        %v470 = vld [vmem:[%s407 + $0x48] sm:$0xff]
        %v471 = vld [vmem:[%s407 + $0x50] sm:$0xff]
        %v472 = vld [vmem:[%s407 + $0x58] sm:$0xff]
        %v473 = vld [vmem:[%s407 + $0x60] sm:$0xff]
        %v474 = vld [vmem:[%s407 + $0x68] sm:$0xff]
        %v475 = vld [vmem:[%s407 + $0x70] sm:$0xff]
        %v476 = vld [vmem:[%s407 + $0x78] sm:$0xff]
        %v477 = vld [vmem:[%s407 + $0x80] sm:$0xff]
        %v478 = vld [vmem:[%s407 + $0x88] sm:$0xff]
        %v479 = vld [vmem:[%s407 + $0x90] sm:$0xff]
        %v480 = vld [vmem:[%s407 + $0x98] sm:$0xff]
        %v481 = vld [vmem:[%s407 + $0xa0] sm:$0xff]
        %v482 = vld [vmem:[%s407 + $0xa8] sm:$0xff]
        %v483 = vld [vmem:[%s407 + $0xb0] sm:$0xff]
        %v484 = vld [vmem:[%s407 + $0xb8] sm:$0xff]
        %v485 = vld [vmem:[%s407 + $0xc0] sm:$0xff]
        %v486 = vld [vmem:[%s407 + $0xc8] sm:$0xff]
        %v487 = vld [vmem:[%s407 + $0xd0] sm:$0xff]
        %v488 = vld [vmem:[%s407 + $0xd8] sm:$0xff]
        %v489 = vld [vmem:[%s407 + $0xe0] sm:$0xff]
        %v490 = vld [vmem:[%s407 + $0xe8] sm:$0xff]
        %v491 = vld [vmem:[%s407 + $0xf0] sm:$0xff]
        %v492 = vld [vmem:[%s407 + $0xf8] sm:$0xff]
        %v493 = vunpack.c.l.s8.bf16 %v461
        %v494 = vunpack.c.l.s8.bf16 %v462
        %v495 = vunpack.c.l.s8.bf16 %v463
        %v496 = vunpack.c.l.s8.bf16 %v464
        %v497 = vunpack.c.h.s8.bf16 %v461
        %v498 = vunpack.c.h.s8.bf16 %v462
        %v499 = vunpack.c.h.s8.bf16 %v463
        %v500 = vunpack.c.h.s8.bf16 %v464
        %v501 = vunpack.c.l.s8.bf16 %v465
        %v502 = vunpack.c.l.s8.bf16 %v466
        %v503 = vunpack.c.l.s8.bf16 %v467
        %v504 = vunpack.c.l.s8.bf16 %v468
        %v505 = vunpack.c.h.s8.bf16 %v465
        %v506 = vunpack.c.h.s8.bf16 %v466
        %v507 = vunpack.c.h.s8.bf16 %v467
        %v508 = vunpack.c.h.s8.bf16 %v468
        %v509 = vunpack.c.l.s8.bf16 %v469
        %v510 = vunpack.c.l.s8.bf16 %v470
        %v511 = vunpack.c.l.s8.bf16 %v471
        %v512 = vunpack.c.l.s8.bf16 %v472
        %v513 = vunpack.c.h.s8.bf16 %v469
        %v514 = vunpack.c.h.s8.bf16 %v470
        %v515 = vunpack.c.h.s8.bf16 %v471
        %v516 = vunpack.c.h.s8.bf16 %v472
        %v517 = vunpack.c.l.s8.bf16 %v473
        %v518 = vunpack.c.l.s8.bf16 %v474
        %v519 = vunpack.c.l.s8.bf16 %v475
        %v520 = vunpack.c.l.s8.bf16 %v476
        %v521 = vunpack.c.h.s8.bf16 %v473
        %v522 = vunpack.c.h.s8.bf16 %v474
        %v523 = vunpack.c.h.s8.bf16 %v475
        %v524 = vunpack.c.h.s8.bf16 %v476
        %v525 = vunpack.c.l.s8.bf16 %v477
        %v526 = vunpack.c.l.s8.bf16 %v478
        %v527 = vunpack.c.l.s8.bf16 %v479
        %v528 = vunpack.c.l.s8.bf16 %v480
        %v529 = vunpack.c.h.s8.bf16 %v477
        %v530 = vunpack.c.h.s8.bf16 %v478
        %v531 = vunpack.c.h.s8.bf16 %v479
        %v532 = vunpack.c.h.s8.bf16 %v480
        %v533 = vunpack.c.l.s8.bf16 %v481
        %v534 = vunpack.c.l.s8.bf16 %v482
        %v535 = vunpack.c.l.s8.bf16 %v483
        %v536 = vunpack.c.l.s8.bf16 %v484
        %v537 = vunpack.c.h.s8.bf16 %v481
        %v538 = vunpack.c.h.s8.bf16 %v482
        %v539 = vunpack.c.h.s8.bf16 %v483
        %v540 = vunpack.c.h.s8.bf16 %v484
        %v541 = vunpack.c.l.s8.bf16 %v485
        %v542 = vunpack.c.l.s8.bf16 %v486
        %v543 = vunpack.c.l.s8.bf16 %v487
        %v544 = vunpack.c.l.s8.bf16 %v488
        %v545 = vunpack.c.h.s8.bf16 %v485
        %v546 = vunpack.c.h.s8.bf16 %v486
        %v547 = vunpack.c.h.s8.bf16 %v487
        %v548 = vunpack.c.h.s8.bf16 %v488
        %v549 = vunpack.c.l.s8.bf16 %v489
        %v550 = vunpack.c.l.s8.bf16 %v490
        %v551 = vunpack.c.l.s8.bf16 %v491
        %v552 = vunpack.c.l.s8.bf16 %v492
        %v553 = vunpack.c.h.s8.bf16 %v489
        %v554 = vunpack.c.h.s8.bf16 %v490
        %v555 = vunpack.c.h.s8.bf16 %v491
        %v556 = vunpack.c.h.s8.bf16 %v492
        %s557 = smul.u32 %s29, 512
        %s558 = sshra.s32 %s557, 3
        %s559 = sand.u32 %s557, 7
        %s560 = smul.addr %s558, 4
        %s561 = scalar_lea.vmem %s1, %s560
        %v562 = vld [vmem:[%s561] sm:$0xf]
        %v563 = vld [vmem:[%s561 + $0x4] sm:$0xf]
        %v564 = vld [vmem:[%s561 + $0x8] sm:$0xf]
        %v565 = vld [vmem:[%s561 + $0xc] sm:$0xf]
        %v566 = vld [vmem:[%s561 + $0x10] sm:$0xf]
        %v567 = vld [vmem:[%s561 + $0x14] sm:$0xf]
        %v568 = vld [vmem:[%s561 + $0x18] sm:$0xf]
        %v569 = vld [vmem:[%s561 + $0x1c] sm:$0xf]
        %v570 = vld [vmem:[%s561 + $0x20] sm:$0xf]
        %v571 = vld [vmem:[%s561 + $0x24] sm:$0xf]
        %v572 = vld [vmem:[%s561 + $0x28] sm:$0xf]
        %v573 = vld [vmem:[%s561 + $0x2c] sm:$0xf]
        %v574 = vld [vmem:[%s561 + $0x30] sm:$0xf]
        %v575 = vld [vmem:[%s561 + $0x34] sm:$0xf]
        %v576 = vld [vmem:[%s561 + $0x38] sm:$0xf]
        %v577 = vld [vmem:[%s561 + $0x3c] sm:$0xf]
        %v578 = vld [vmem:[%s561 + $0x40] sm:$0xf]
        %v579 = vld [vmem:[%s561 + $0x44] sm:$0xf]
        %v580 = vld [vmem:[%s561 + $0x48] sm:$0xf]
        %v581 = vld [vmem:[%s561 + $0x4c] sm:$0xf]
        %v582 = vld [vmem:[%s561 + $0x50] sm:$0xf]
        %v583 = vld [vmem:[%s561 + $0x54] sm:$0xf]
        %v584 = vld [vmem:[%s561 + $0x58] sm:$0xf]
        %v585 = vld [vmem:[%s561 + $0x5c] sm:$0xf]
        %v586 = vld [vmem:[%s561 + $0x60] sm:$0xf]
        %v587 = vld [vmem:[%s561 + $0x64] sm:$0xf]
        %v588 = vld [vmem:[%s561 + $0x68] sm:$0xf]
        %v589 = vld [vmem:[%s561 + $0x6c] sm:$0xf]
        %v590 = vld [vmem:[%s561 + $0x70] sm:$0xf]
        %v591 = vld [vmem:[%s561 + $0x74] sm:$0xf]
        %v592 = vld [vmem:[%s561 + $0x78] sm:$0xf]
        %v593 = vld [vmem:[%s561 + $0x7c] sm:$0xf]
        %v594 = vld [vmem:[%s561 + $0x80] sm:$0xf]
        %v595 = vld [vmem:[%s561 + $0x84] sm:$0xf]
        %v596 = vld [vmem:[%s561 + $0x88] sm:$0xf]
        %v597 = vld [vmem:[%s561 + $0x8c] sm:$0xf]
        %v598 = vld [vmem:[%s561 + $0x90] sm:$0xf]
        %v599 = vld [vmem:[%s561 + $0x94] sm:$0xf]
        %v600 = vld [vmem:[%s561 + $0x98] sm:$0xf]
        %v601 = vld [vmem:[%s561 + $0x9c] sm:$0xf]
        %v602 = vld [vmem:[%s561 + $0xa0] sm:$0xf]
        %v603 = vld [vmem:[%s561 + $0xa4] sm:$0xf]
        %v604 = vld [vmem:[%s561 + $0xa8] sm:$0xf]
        %v605 = vld [vmem:[%s561 + $0xac] sm:$0xf]
        %v606 = vld [vmem:[%s561 + $0xb0] sm:$0xf]
        %v607 = vld [vmem:[%s561 + $0xb4] sm:$0xf]
        %v608 = vld [vmem:[%s561 + $0xb8] sm:$0xf]
        %v609 = vld [vmem:[%s561 + $0xbc] sm:$0xf]
        %v610 = vld [vmem:[%s561 + $0xc0] sm:$0xf]
        %v611 = vld [vmem:[%s561 + $0xc4] sm:$0xf]
        %v612 = vld [vmem:[%s561 + $0xc8] sm:$0xf]
        %v613 = vld [vmem:[%s561 + $0xcc] sm:$0xf]
        %v614 = vld [vmem:[%s561 + $0xd0] sm:$0xf]
        %v615 = vld [vmem:[%s561 + $0xd4] sm:$0xf]
        %v616 = vld [vmem:[%s561 + $0xd8] sm:$0xf]
        %v617 = vld [vmem:[%s561 + $0xdc] sm:$0xf]
        %v618 = vld [vmem:[%s561 + $0xe0] sm:$0xf]
        %v619 = vld [vmem:[%s561 + $0xe4] sm:$0xf]
        %v620 = vld [vmem:[%s561 + $0xe8] sm:$0xf]
        %v621 = vld [vmem:[%s561 + $0xec] sm:$0xf]
        %v622 = vld [vmem:[%s561 + $0xf0] sm:$0xf]
        %v623 = vld [vmem:[%s561 + $0xf4] sm:$0xf]
        %v624 = vld [vmem:[%s561 + $0xf8] sm:$0xf]
        %v625 = vld [vmem:[%s561 + $0xfc] sm:$0xf]
        %v626 = vld [vmem:[#allocation2] sm:$0xff]
        %v627 = vld [vmem:[#allocation2 + $0x8] sm:$0xff]
        %v628 = vld [vmem:[#allocation2 + $0x10] sm:$0xff]
        %v629 = vld [vmem:[#allocation2 + $0x18] sm:$0xff]
        %v630 = vld [vmem:[#allocation2 + $0x20] sm:$0xff]
        %v631 = vld [vmem:[#allocation2 + $0x28] sm:$0xff]
        %v632 = vld [vmem:[#allocation2 + $0x30] sm:$0xff]
        %v633 = vld [vmem:[#allocation2 + $0x38] sm:$0xff]
        %v634 = vld [vmem:[#allocation2 + $0x40] sm:$0xff]
        %v635 = vld [vmem:[#allocation2 + $0x48] sm:$0xff]
        %v636 = vld [vmem:[#allocation2 + $0x50] sm:$0xff]
        %v637 = vld [vmem:[#allocation2 + $0x58] sm:$0xff]
        %v638 = vld [vmem:[#allocation2 + $0x60] sm:$0xff]
        %v639 = vld [vmem:[#allocation2 + $0x68] sm:$0xff]
        %v640 = vld [vmem:[#allocation2 + $0x70] sm:$0xff]
        %v641 = vld [vmem:[#allocation2 + $0x78] sm:$0xff]
        %v642 = vld [vmem:[#allocation2 + $0x80] sm:$0xff]
        %v643 = vld [vmem:[#allocation2 + $0x88] sm:$0xff]
        %v644 = vld [vmem:[#allocation2 + $0x90] sm:$0xff]
        %v645 = vld [vmem:[#allocation2 + $0x98] sm:$0xff]
        %v646 = vld [vmem:[#allocation2 + $0xa0] sm:$0xff]
        %v647 = vld [vmem:[#allocation2 + $0xa8] sm:$0xff]
        %v648 = vld [vmem:[#allocation2 + $0xb0] sm:$0xff]
        %v649 = vld [vmem:[#allocation2 + $0xb8] sm:$0xff]
        %v650 = vld [vmem:[#allocation2 + $0xc0] sm:$0xff]
        %v651 = vld [vmem:[#allocation2 + $0xc8] sm:$0xff]
        %v652 = vld [vmem:[#allocation2 + $0xd0] sm:$0xff]
        %v653 = vld [vmem:[#allocation2 + $0xd8] sm:$0xff]
        %v654 = vld [vmem:[#allocation2 + $0xe0] sm:$0xff]
        %v655 = vld [vmem:[#allocation2 + $0xe8] sm:$0xff]
        %v656 = vld [vmem:[#allocation2 + $0xf0] sm:$0xff]
        %v657 = vld [vmem:[#allocation2 + $0xf8] sm:$0xff]
        %v722 = vunpack.c.l.b16 %v562
        %v723 = vunpack.c.l.b16 %v563
        %v724 = vunpack.c.l.b16 %v564
        %v725 = vunpack.c.l.b16 %v565
        %v726 = vunpack.c.l.b16 %v566
        %v727 = vunpack.c.l.b16 %v567
        %v728 = vunpack.c.l.b16 %v568
        %v729 = vunpack.c.l.b16 %v569
        %v730 = vunpack.c.l.b16 %v570
        %v731 = vunpack.c.l.b16 %v571
        %v732 = vunpack.c.l.b16 %v572
        %v733 = vunpack.c.l.b16 %v573
        %v734 = vunpack.c.l.b16 %v574
        %v735 = vunpack.c.l.b16 %v575
        %v736 = vunpack.c.l.b16 %v576
        %v737 = vunpack.c.l.b16 %v577
        %v738 = vunpack.c.l.b16 %v578
        %v739 = vunpack.c.l.b16 %v579
        %v740 = vunpack.c.l.b16 %v580
        %v741 = vunpack.c.l.b16 %v581
        %v742 = vunpack.c.l.b16 %v582
        %v743 = vunpack.c.l.b16 %v583
        %v744 = vunpack.c.l.b16 %v584
        %v745 = vunpack.c.l.b16 %v585
        %v746 = vunpack.c.l.b16 %v586
        %v747 = vunpack.c.l.b16 %v587
        %v748 = vunpack.c.l.b16 %v588
        %v749 = vunpack.c.l.b16 %v589
        %v750 = vunpack.c.l.b16 %v590
        %v751 = vunpack.c.l.b16 %v591
        %v752 = vunpack.c.l.b16 %v592
        %v753 = vunpack.c.l.b16 %v593
        %v754 = vunpack.c.l.b16 %v594
        %v755 = vunpack.c.l.b16 %v595
        %v756 = vunpack.c.l.b16 %v596
        %v757 = vunpack.c.l.b16 %v597
        %v758 = vunpack.c.l.b16 %v598
        %v759 = vunpack.c.l.b16 %v599
        %v760 = vunpack.c.l.b16 %v600
        %v761 = vunpack.c.l.b16 %v601
        %v762 = vunpack.c.l.b16 %v602
        %v763 = vunpack.c.l.b16 %v603
        %v764 = vunpack.c.l.b16 %v604
        %v765 = vunpack.c.l.b16 %v605
        %v766 = vunpack.c.l.b16 %v606
        %v767 = vunpack.c.l.b16 %v607
        %v768 = vunpack.c.l.b16 %v608
        %v769 = vunpack.c.l.b16 %v609
        %v770 = vunpack.c.l.b16 %v610
        %v771 = vunpack.c.l.b16 %v611
        %v772 = vunpack.c.l.b16 %v612
        %v773 = vunpack.c.l.b16 %v613
        %v774 = vunpack.c.l.b16 %v614
        %v775 = vunpack.c.l.b16 %v615
        %v776 = vunpack.c.l.b16 %v616
        %v777 = vunpack.c.l.b16 %v617
        %v778 = vunpack.c.l.b16 %v618
        %v779 = vunpack.c.l.b16 %v619
        %v780 = vunpack.c.l.b16 %v620
        %v781 = vunpack.c.l.b16 %v621
        %v782 = vunpack.c.l.b16 %v622
        %v783 = vunpack.c.l.b16 %v623
        %v784 = vunpack.c.l.b16 %v624
        %v785 = vunpack.c.l.b16 %v625
        %v786 = vpack.c.b16 %v723, %v722
        %v787 = vpack.c.b16 %v725, %v724
        %v788 = vpack.c.b16 %v727, %v726
        %v789 = vpack.c.b16 %v729, %v728
        %v790 = vpack.c.b16 %v731, %v730
        %v791 = vpack.c.b16 %v733, %v732
        %v792 = vpack.c.b16 %v735, %v734
        %v793 = vpack.c.b16 %v737, %v736
        %v794 = vpack.c.b16 %v739, %v738
        %v795 = vpack.c.b16 %v741, %v740
        %v796 = vpack.c.b16 %v743, %v742
        %v797 = vpack.c.b16 %v745, %v744
        %v798 = vpack.c.b16 %v747, %v746
        %v799 = vpack.c.b16 %v749, %v748
        %v800 = vpack.c.b16 %v751, %v750
        %v801 = vpack.c.b16 %v753, %v752
        %v802 = vpack.c.b16 %v755, %v754
        %v803 = vpack.c.b16 %v757, %v756
        %v804 = vpack.c.b16 %v759, %v758
        %v805 = vpack.c.b16 %v761, %v760
        %v806 = vpack.c.b16 %v763, %v762
        %v807 = vpack.c.b16 %v765, %v764
        %v808 = vpack.c.b16 %v767, %v766
        %v809 = vpack.c.b16 %v769, %v768
        %v810 = vpack.c.b16 %v771, %v770
        %v811 = vpack.c.b16 %v773, %v772
        %v812 = vpack.c.b16 %v775, %v774
        %v813 = vpack.c.b16 %v777, %v776
        %v814 = vpack.c.b16 %v779, %v778
        %v815 = vpack.c.b16 %v781, %v780
        %v816 = vpack.c.b16 %v783, %v782
        %v817 = vpack.c.b16 %v785, %v784
        %850 = vmatprep.subr.bf16.mxu0 0
        %851 = vmatpush1.bf16.msra.mxu0 %v786
        %852 = vmatprep.subr.bf16.mxu0 0
        %853 = vmatpush1.bf16.msra.mxu0 %v787
        %854 = vmatprep.subr.bf16.mxu0 0
        %855 = vmatpush1.bf16.msra.mxu0 %v788
        %856 = vmatprep.subr.bf16.mxu0 0
        %857 = vmatpush1.bf16.msra.mxu0 %v789
        %858 = vmatprep.subr.bf16.mxu0 0
        %859 = vmatpush1.bf16.msra.mxu0 %v790
        %860 = vmatprep.subr.bf16.mxu0 0
        %861 = vmatpush1.bf16.msra.mxu0 %v791
        %862 = vmatprep.subr.bf16.mxu0 0
        %863 = vmatpush1.bf16.msra.mxu0 %v792
        %864 = vmatprep.subr.bf16.mxu0 0
        %865 = vmatpush1.bf16.msra.mxu0 %v793
        %866 = vmatprep.subr.bf16.mxu0 0
        %867 = vmatpush1.bf16.msra.mxu0 %v794
        %868 = vmatprep.subr.bf16.mxu0 0
        %869 = vmatpush1.bf16.msra.mxu0 %v795
        %870 = vmatprep.subr.bf16.mxu0 0
        %871 = vmatpush1.bf16.msra.mxu0 %v796
        %872 = vmatprep.subr.bf16.mxu0 0
        %873 = vmatpush1.bf16.msra.mxu0 %v797
        %874 = vmatprep.subr.bf16.mxu0 0
        %875 = vmatpush1.bf16.msra.mxu0 %v798
        %876 = vmatprep.subr.bf16.mxu0 0
        %877 = vmatpush1.bf16.msra.mxu0 %v799
        %878 = vmatprep.subr.bf16.mxu0 0
        %879 = vmatpush1.bf16.msra.mxu0 %v800
        %880 = vmatprep.subr.bf16.mxu0 0
        %881 = vmatpush1.bf16.msra.mxu0 %v801
        %882 = vmatprep.mubr.bf16.mxu0 %v494
        %883 = vmatmul.mubr.bf16.gmra.mrb[0].mxu0 %v493
        %v884 = vpop.f32.mrb[0].mxu0
        %v885 = vadd.f32 0.0, %v884
        %v886 = vpop.f32.mrb[0].mxu0
        %v887 = vpop.f32.mrb[0].mxu0
        %v888 = vadd.f32 0.0, %v887
        %v889 = vpop.f32.mrb[0].mxu0
        %890 = vmatprep.mubr.bf16.mxu0 %v498
        %891 = vmatmul.mubr.bf16.gmra.mrb[0].mxu0 %v497
        %v892 = vpop.f32.mrb[0].mxu0
        %v893 = vadd.f32 0.0, %v892
        %v894 = vpop.f32.mrb[0].mxu0
        %v895 = vpop.f32.mrb[0].mxu0
        %v896 = vadd.f32 0.0, %v895
        %v897 = vpop.f32.mrb[0].mxu0
        %898 = vmatprep.mubr.bf16.mxu0 %v502
        %899 = vmatmul.mubr.bf16.gmra.mrb[0].mxu0 %v501
        %v900 = vpop.f32.mrb[0].mxu0
        %v901 = vadd.f32 0.0, %v900
        %v902 = vpop.f32.mrb[0].mxu0
        %v903 = vpop.f32.mrb[0].mxu0
        %v904 = vadd.f32 0.0, %v903
        %v905 = vpop.f32.mrb[0].mxu0
        %906 = vmatprep.mubr.bf16.mxu0 %v506
        %907 = vmatmul.mubr.bf16.gmra.mrb[0].mxu0 %v505
        %v908 = vpop.f32.mrb[0].mxu0
        %v909 = vadd.f32 0.0, %v908
        %v910 = vpop.f32.mrb[0].mxu0
        %v911 = vpop.f32.mrb[0].mxu0
        %v912 = vadd.f32 0.0, %v911
        %v913 = vpop.f32.mrb[0].mxu0
        %914 = vmatprep.mubr.bf16.mxu0 %v510
        %915 = vmatmul.mubr.bf16.gmra.mrb[0].mxu0 %v509
        %v916 = vpop.f32.mrb[0].mxu0
        %v917 = vadd.f32 0.0, %v916
        %v918 = vpop.f32.mrb[0].mxu0
        %v919 = vpop.f32.mrb[0].mxu0
        %v920 = vadd.f32 0.0, %v919
        %v921 = vpop.f32.mrb[0].mxu0
        %922 = vmatprep.mubr.bf16.mxu0 %v514
        %923 = vmatmul.mubr.bf16.gmra.mrb[0].mxu0 %v513
        %v924 = vpop.f32.mrb[0].mxu0
        %v925 = vadd.f32 0.0, %v924
        %v926 = vpop.f32.mrb[0].mxu0
        %v927 = vpop.f32.mrb[0].mxu0
        %v928 = vadd.f32 0.0, %v927
        %v929 = vpop.f32.mrb[0].mxu0
        %930 = vmatprep.mubr.bf16.mxu0 %v518
        %931 = vmatmul.mubr.bf16.gmra.mrb[0].mxu0 %v517
        %v932 = vpop.f32.mrb[0].mxu0
        %v933 = vadd.f32 0.0, %v932
        %v934 = vpop.f32.mrb[0].mxu0
        %v935 = vpop.f32.mrb[0].mxu0
        %v936 = vadd.f32 0.0, %v935
        %v937 = vpop.f32.mrb[0].mxu0
        %938 = vmatprep.mubr.bf16.mxu0 %v522
        %939 = vmatmul.mubr.bf16.gmra.mrb[0].mxu0 %v521
        %v940 = vpop.f32.mrb[0].mxu0
        %v941 = vadd.f32 0.0, %v940
        %v942 = vpop.f32.mrb[0].mxu0
        %v943 = vpop.f32.mrb[0].mxu0
        %v944 = vadd.f32 0.0, %v943
        %v945 = vpop.f32.mrb[0].mxu0
        %946 = vmatprep.mubr.bf16.mxu0 %v526
        %947 = vmatmul.mubr.bf16.gmra.mrb[0].mxu0 %v525
        %v948 = vpop.f32.mrb[0].mxu0
        %v949 = vadd.f32 0.0, %v948
        %v950 = vpop.f32.mrb[0].mxu0
        %v951 = vpop.f32.mrb[0].mxu0
        %v952 = vadd.f32 0.0, %v951
        %v953 = vpop.f32.mrb[0].mxu0
        %954 = vmatprep.mubr.bf16.mxu0 %v530
        %955 = vmatmul.mubr.bf16.gmra.mrb[0].mxu0 %v529
        %v956 = vpop.f32.mrb[0].mxu0
        %v957 = vadd.f32 0.0, %v956
        %v958 = vpop.f32.mrb[0].mxu0
        %v959 = vpop.f32.mrb[0].mxu0
        %v960 = vadd.f32 0.0, %v959
        %v961 = vpop.f32.mrb[0].mxu0
        %962 = vmatprep.mubr.bf16.mxu0 %v534
        %963 = vmatmul.mubr.bf16.gmra.mrb[0].mxu0 %v533
        %v964 = vpop.f32.mrb[0].mxu0
        %v965 = vadd.f32 0.0, %v964
        %v966 = vpop.f32.mrb[0].mxu0
        %v967 = vpop.f32.mrb[0].mxu0
        %v968 = vadd.f32 0.0, %v967
        %v969 = vpop.f32.mrb[0].mxu0
        %970 = vmatprep.mubr.bf16.mxu0 %v538
        %971 = vmatmul.mubr.bf16.gmra.mrb[0].mxu0 %v537
        %v972 = vpop.f32.mrb[0].mxu0
        %v973 = vadd.f32 0.0, %v972
        %v974 = vpop.f32.mrb[0].mxu0
        %v975 = vpop.f32.mrb[0].mxu0
        %v976 = vadd.f32 0.0, %v975
        %v977 = vpop.f32.mrb[0].mxu0
        %978 = vmatprep.mubr.bf16.mxu0 %v542
        %979 = vmatmul.mubr.bf16.gmra.mrb[0].mxu0 %v541
        %v980 = vpop.f32.mrb[0].mxu0
        %v981 = vadd.f32 0.0, %v980
        %v982 = vpop.f32.mrb[0].mxu0
        %v983 = vpop.f32.mrb[0].mxu0
        %v984 = vadd.f32 0.0, %v983
        %v985 = vpop.f32.mrb[0].mxu0
        %986 = vmatprep.mubr.bf16.mxu0 %v546
        %987 = vmatmul.mubr.bf16.gmra.mrb[0].mxu0 %v545
        %v988 = vpop.f32.mrb[0].mxu0
        %v989 = vadd.f32 0.0, %v988
        %v990 = vpop.f32.mrb[0].mxu0
        %v991 = vpop.f32.mrb[0].mxu0
        %v992 = vadd.f32 0.0, %v991
        %v993 = vpop.f32.mrb[0].mxu0
        %994 = vmatprep.mubr.bf16.mxu0 %v550
        %995 = vmatmul.mubr.bf16.gmra.mrb[0].mxu0 %v549
        %v996 = vpop.f32.mrb[0].mxu0
        %v997 = vadd.f32 0.0, %v996
        %v998 = vpop.f32.mrb[0].mxu0
        %v999 = vpop.f32.mrb[0].mxu0
        %v1000 = vadd.f32 0.0, %v999
        %v1001 = vpop.f32.mrb[0].mxu0
        %1002 = vmatprep.mubr.bf16.mxu0 %v554
        %1003 = vmatmul.mubr.bf16.gmra.mrb[0].mxu0 %v553
        %v1004 = vpop.f32.mrb[0].mxu0
        %v1005 = vadd.f32 0.0, %v1004
        %v1006 = vpop.f32.mrb[0].mxu0
        %v1007 = vpop.f32.mrb[0].mxu0
        %v1008 = vadd.f32 0.0, %v1007
        %v1009 = vpop.f32.mrb[0].mxu0
        %1010 = vdwg.mxu0
        %1011 = vmatprep.subr.bf16.mxu0 0
        %1012 = vmatpush1.bf16.msra.mxu0 %v802
        %1013 = vmatprep.subr.bf16.mxu0 0
        %1014 = vmatpush1.bf16.msra.mxu0 %v803
        %1015 = vmatprep.subr.bf16.mxu0 0
        %1016 = vmatpush1.bf16.msra.mxu0 %v804
        %1017 = vmatprep.subr.bf16.mxu0 0
        %1018 = vmatpush1.bf16.msra.mxu0 %v805
        %1019 = vmatprep.subr.bf16.mxu0 0
        %1020 = vmatpush1.bf16.msra.mxu0 %v806
        %1021 = vmatprep.subr.bf16.mxu0 0
        %1022 = vmatpush1.bf16.msra.mxu0 %v807
        %1023 = vmatprep.subr.bf16.mxu0 0
        %1024 = vmatpush1.bf16.msra.mxu0 %v808
        %1025 = vmatprep.subr.bf16.mxu0 0
        %1026 = vmatpush1.bf16.msra.mxu0 %v809
        %1027 = vmatprep.subr.bf16.mxu0 0
        %1028 = vmatpush1.bf16.msra.mxu0 %v810
        %1029 = vmatprep.subr.bf16.mxu0 0
        %1030 = vmatpush1.bf16.msra.mxu0 %v811
        %1031 = vmatprep.subr.bf16.mxu0 0
        %1032 = vmatpush1.bf16.msra.mxu0 %v812
        %1033 = vmatprep.subr.bf16.mxu0 0
        %1034 = vmatpush1.bf16.msra.mxu0 %v813
        %1035 = vmatprep.subr.bf16.mxu0 0
        %1036 = vmatpush1.bf16.msra.mxu0 %v814
        %1037 = vmatprep.subr.bf16.mxu0 0
        %1038 = vmatpush1.bf16.msra.mxu0 %v815
        %1039 = vmatprep.subr.bf16.mxu0 0
        %1040 = vmatpush1.bf16.msra.mxu0 %v816
        %1041 = vmatprep.subr.bf16.mxu0 0
        %1042 = vmatpush1.bf16.msra.mxu0 %v817
        %1043 = vmatprep.mubr.bf16.mxu0 %v496
        %1044 = vmatmul.mubr.bf16.gmra.mrb[0].mxu0 %v495
        %v1045 = vpop.f32.mrb[0].mxu0
        %v1046 = vadd.f32 %v885, %v1045
        %v1047 = vpop.f32.mrb[0].mxu0
        %v1048 = vpop.f32.mrb[0].mxu0
        %v1049 = vadd.f32 %v888, %v1048
        %v1050 = vpop.f32.mrb[0].mxu0
        %1051 = vmatprep.mubr.bf16.mxu0 %v500
        %1052 = vmatmul.mubr.bf16.gmra.mrb[0].mxu0 %v499
        %v1053 = vpop.f32.mrb[0].mxu0
        %v1054 = vadd.f32 %v893, %v1053
        %v1055 = vpop.f32.mrb[0].mxu0
        %v1056 = vpop.f32.mrb[0].mxu0
        %v1057 = vadd.f32 %v896, %v1056
        %v1058 = vpop.f32.mrb[0].mxu0
        %1059 = vmatprep.mubr.bf16.mxu0 %v504
        %1060 = vmatmul.mubr.bf16.gmra.mrb[0].mxu0 %v503
        %v1061 = vpop.f32.mrb[0].mxu0
        %v1062 = vadd.f32 %v901, %v1061
        %v1063 = vpop.f32.mrb[0].mxu0
        %v1064 = vpop.f32.mrb[0].mxu0
        %v1065 = vadd.f32 %v904, %v1064
        %v1066 = vpop.f32.mrb[0].mxu0
        %1067 = vmatprep.mubr.bf16.mxu0 %v508
        %1068 = vmatmul.mubr.bf16.gmra.mrb[0].mxu0 %v507
        %v1069 = vpop.f32.mrb[0].mxu0
        %v1070 = vadd.f32 %v909, %v1069
        %v1071 = vpop.f32.mrb[0].mxu0
        %v1072 = vpop.f32.mrb[0].mxu0
        %v1073 = vadd.f32 %v912, %v1072
        %v1074 = vpop.f32.mrb[0].mxu0
        %1075 = vmatprep.mubr.bf16.mxu0 %v512
        %1076 = vmatmul.mubr.bf16.gmra.mrb[0].mxu0 %v511
        %v1077 = vpop.f32.mrb[0].mxu0
        %v1078 = vadd.f32 %v917, %v1077
        %v1079 = vpop.f32.mrb[0].mxu0
        %v1080 = vpop.f32.mrb[0].mxu0
        %v1081 = vadd.f32 %v920, %v1080
        %v1082 = vpop.f32.mrb[0].mxu0
        %1083 = vmatprep.mubr.bf16.mxu0 %v516
        %1084 = vmatmul.mubr.bf16.gmra.mrb[0].mxu0 %v515
        %v1085 = vpop.f32.mrb[0].mxu0
        %v1086 = vadd.f32 %v925, %v1085
        %v1087 = vpop.f32.mrb[0].mxu0
        %v1088 = vpop.f32.mrb[0].mxu0
        %v1089 = vadd.f32 %v928, %v1088
        %v1090 = vpop.f32.mrb[0].mxu0
        %1091 = vmatprep.mubr.bf16.mxu0 %v520
        %1092 = vmatmul.mubr.bf16.gmra.mrb[0].mxu0 %v519
        %v1093 = vpop.f32.mrb[0].mxu0
        %v1094 = vadd.f32 %v933, %v1093
        %v1095 = vpop.f32.mrb[0].mxu0
        %v1096 = vpop.f32.mrb[0].mxu0
        %v1097 = vadd.f32 %v936, %v1096
        %v1098 = vpop.f32.mrb[0].mxu0
        %1099 = vmatprep.mubr.bf16.mxu0 %v524
        %1100 = vmatmul.mubr.bf16.gmra.mrb[0].mxu0 %v523
        %v1101 = vpop.f32.mrb[0].mxu0
        %v1102 = vadd.f32 %v941, %v1101
        %v1103 = vpop.f32.mrb[0].mxu0
        %v1104 = vpop.f32.mrb[0].mxu0
        %v1105 = vadd.f32 %v944, %v1104
        %v1106 = vpop.f32.mrb[0].mxu0
        %1107 = vmatprep.mubr.bf16.mxu0 %v528
        %1108 = vmatmul.mubr.bf16.gmra.mrb[0].mxu0 %v527
        %v1109 = vpop.f32.mrb[0].mxu0
        %v1110 = vadd.f32 %v949, %v1109
        %v1111 = vpop.f32.mrb[0].mxu0
        %v1112 = vpop.f32.mrb[0].mxu0
        %v1113 = vadd.f32 %v952, %v1112
        %v1114 = vpop.f32.mrb[0].mxu0
        %1115 = vmatprep.mubr.bf16.mxu0 %v532
        %1116 = vmatmul.mubr.bf16.gmra.mrb[0].mxu0 %v531
        %v1117 = vpop.f32.mrb[0].mxu0
        %v1118 = vadd.f32 %v957, %v1117
        %v1119 = vpop.f32.mrb[0].mxu0
        %v1120 = vpop.f32.mrb[0].mxu0
        %v1121 = vadd.f32 %v960, %v1120
        %v1122 = vpop.f32.mrb[0].mxu0
        %1123 = vmatprep.mubr.bf16.mxu0 %v536
        %1124 = vmatmul.mubr.bf16.gmra.mrb[0].mxu0 %v535
        %v1125 = vpop.f32.mrb[0].mxu0
        %v1126 = vadd.f32 %v965, %v1125
        %v1127 = vpop.f32.mrb[0].mxu0
        %v1128 = vpop.f32.mrb[0].mxu0
        %v1129 = vadd.f32 %v968, %v1128
        %v1130 = vpop.f32.mrb[0].mxu0
        %1131 = vmatprep.mubr.bf16.mxu0 %v540
        %1132 = vmatmul.mubr.bf16.gmra.mrb[0].mxu0 %v539
        %v1133 = vpop.f32.mrb[0].mxu0
        %v1134 = vadd.f32 %v973, %v1133
        %v1135 = vpop.f32.mrb[0].mxu0
        %v1136 = vpop.f32.mrb[0].mxu0
        %v1137 = vadd.f32 %v976, %v1136
        %v1138 = vpop.f32.mrb[0].mxu0
        %1139 = vmatprep.mubr.bf16.mxu0 %v544
        %1140 = vmatmul.mubr.bf16.gmra.mrb[0].mxu0 %v543
        %v1141 = vpop.f32.mrb[0].mxu0
        %v1142 = vadd.f32 %v981, %v1141
        %v1143 = vpop.f32.mrb[0].mxu0
        %v1144 = vpop.f32.mrb[0].mxu0
        %v1145 = vadd.f32 %v984, %v1144
        %v1146 = vpop.f32.mrb[0].mxu0
        %1147 = vmatprep.mubr.bf16.mxu0 %v548
        %1148 = vmatmul.mubr.bf16.gmra.mrb[0].mxu0 %v547
        %v1149 = vpop.f32.mrb[0].mxu0
        %v1150 = vadd.f32 %v989, %v1149
        %v1151 = vpop.f32.mrb[0].mxu0
        %v1152 = vpop.f32.mrb[0].mxu0
        %v1153 = vadd.f32 %v992, %v1152
        %v1154 = vpop.f32.mrb[0].mxu0
        %1155 = vmatprep.mubr.bf16.mxu0 %v552
        %1156 = vmatmul.mubr.bf16.gmra.mrb[0].mxu0 %v551
        %v1157 = vpop.f32.mrb[0].mxu0
        %v1158 = vadd.f32 %v997, %v1157
        %v1159 = vpop.f32.mrb[0].mxu0
        %v1160 = vpop.f32.mrb[0].mxu0
        %v1161 = vadd.f32 %v1000, %v1160
        %v1162 = vpop.f32.mrb[0].mxu0
        %1163 = vmatprep.mubr.bf16.mxu0 %v556
        %1164 = vmatmul.mubr.bf16.gmra.mrb[0].mxu0 %v555
        %v1165 = vpop.f32.mrb[0].mxu0
        %v1166 = vadd.f32 %v1005, %v1165
        %v1167 = vpop.f32.mrb[0].mxu0
        %v1168 = vpop.f32.mrb[0].mxu0
        %v1169 = vadd.f32 %v1008, %v1168
        %v1170 = vpop.f32.mrb[0].mxu0
        %1171 = vdwg.mxu0
        %v1172 = vadd.f32 %v626, %v1046
        %v1173 = vadd.f32 %v627, %v1049
        %v1174 = vadd.f32 %v628, %v1054
        %v1175 = vadd.f32 %v629, %v1057
        %v1176 = vadd.f32 %v630, %v1062
        %v1177 = vadd.f32 %v631, %v1065
        %v1178 = vadd.f32 %v632, %v1070
        %v1179 = vadd.f32 %v633, %v1073
        %v1180 = vadd.f32 %v634, %v1078
        %v1181 = vadd.f32 %v635, %v1081
        %v1182 = vadd.f32 %v636, %v1086
        %v1183 = vadd.f32 %v637, %v1089
        %v1184 = vadd.f32 %v638, %v1094
        %v1185 = vadd.f32 %v639, %v1097
        %v1186 = vadd.f32 %v640, %v1102
        %v1187 = vadd.f32 %v641, %v1105
        %v1188 = vadd.f32 %v642, %v1110
        %v1189 = vadd.f32 %v643, %v1113
        %v1190 = vadd.f32 %v644, %v1118
        %v1191 = vadd.f32 %v645, %v1121
        %v1192 = vadd.f32 %v646, %v1126
        %v1193 = vadd.f32 %v647, %v1129
        %v1194 = vadd.f32 %v648, %v1134
        %v1195 = vadd.f32 %v649, %v1137
        %v1196 = vadd.f32 %v650, %v1142
        %v1197 = vadd.f32 %v651, %v1145
        %v1198 = vadd.f32 %v652, %v1150
        %v1199 = vadd.f32 %v653, %v1153
        %v1200 = vadd.f32 %v654, %v1158
        %v1201 = vadd.f32 %v655, %v1161
        %v1202 = vadd.f32 %v656, %v1166
        %v1203 = vadd.f32 %v657, %v1169
        %vm1204 = vcmask 261120
        %1205 = vst.msk [vmem:[#allocation2] sm:$0xff] %vm1204, %v1172
        %1206 = vst.msk [vmem:[#allocation2 + $0x8] sm:$0xff] %vm1204, %v1173
        %1207 = vst.msk [vmem:[#allocation2 + $0x10] sm:$0xff] %vm1204, %v1174
        %1208 = vst.msk [vmem:[#allocation2 + $0x18] sm:$0xff] %vm1204, %v1175
        %1209 = vst.msk [vmem:[#allocation2 + $0x20] sm:$0xff] %vm1204, %v1176
        %1210 = vst.msk [vmem:[#allocation2 + $0x28] sm:$0xff] %vm1204, %v1177
        %1211 = vst.msk [vmem:[#allocation2 + $0x30] sm:$0xff] %vm1204, %v1178
        %1212 = vst.msk [vmem:[#allocation2 + $0x38] sm:$0xff] %vm1204, %v1179
        %1213 = vst.msk [vmem:[#allocation2 + $0x40] sm:$0xff] %vm1204, %v1180
        %1214 = vst.msk [vmem:[#allocation2 + $0x48] sm:$0xff] %vm1204, %v1181
        %1215 = vst.msk [vmem:[#allocation2 + $0x50] sm:$0xff] %vm1204, %v1182
        %1216 = vst.msk [vmem:[#allocation2 + $0x58] sm:$0xff] %vm1204, %v1183
        %1217 = vst.msk [vmem:[#allocation2 + $0x60] sm:$0xff] %vm1204, %v1184
        %1218 = vst.msk [vmem:[#allocation2 + $0x68] sm:$0xff] %vm1204, %v1185
        %1219 = vst.msk [vmem:[#allocation2 + $0x70] sm:$0xff] %vm1204, %v1186
        %1220 = vst.msk [vmem:[#allocation2 + $0x78] sm:$0xff] %vm1204, %v1187
        %1221 = vst.msk [vmem:[#allocation2 + $0x80] sm:$0xff] %vm1204, %v1188
        %1222 = vst.msk [vmem:[#allocation2 + $0x88] sm:$0xff] %vm1204, %v1189
        %1223 = vst.msk [vmem:[#allocation2 + $0x90] sm:$0xff] %vm1204, %v1190
        %1224 = vst.msk [vmem:[#allocation2 + $0x98] sm:$0xff] %vm1204, %v1191
        %1225 = vst.msk [vmem:[#allocation2 + $0xa0] sm:$0xff] %vm1204, %v1192
        %1226 = vst.msk [vmem:[#allocation2 + $0xa8] sm:$0xff] %vm1204, %v1193
        %1227 = vst.msk [vmem:[#allocation2 + $0xb0] sm:$0xff] %vm1204, %v1194
        %1228 = vst.msk [vmem:[#allocation2 + $0xb8] sm:$0xff] %vm1204, %v1195
        %1229 = vst.msk [vmem:[#allocation2 + $0xc0] sm:$0xff] %vm1204, %v1196
        %1230 = vst.msk [vmem:[#allocation2 + $0xc8] sm:$0xff] %vm1204, %v1197
        %1231 = vst.msk [vmem:[#allocation2 + $0xd0] sm:$0xff] %vm1204, %v1198
        %1232 = vst.msk [vmem:[#allocation2 + $0xd8] sm:$0xff] %vm1204, %v1199
        %1233 = vst.msk [vmem:[#allocation2 + $0xe0] sm:$0xff] %vm1204, %v1200
        %1234 = vst.msk [vmem:[#allocation2 + $0xe8] sm:$0xff] %vm1204, %v1201
        %1235 = vst.msk [vmem:[#allocation2 + $0xf0] sm:$0xff] %vm1204, %v1202
        %1236 = vst.msk [vmem:[#allocation2 + $0xf8] sm:$0xff] %vm1204, %v1203
        // Predicated region
        $region65: #{tpu_custom_call.1} parent=55 // pred_check
          %p1237 = pneg %p424
        $region66: #{tpu_custom_call.1} parent=55 // pred_check_branch
          %1239 = sbr.rel (%p1237) target = $region68
        $region67: #{tpu_custom_call.1} parent=55 // pred_region
          %v1240 = vld [vmem:[%s414] sm:$0xff]
          %v1241 = vld [vmem:[%s414 + $0x8] sm:$0xff]
          %v1242 = vld [vmem:[%s414 + $0x10] sm:$0xff]
          %v1243 = vld [vmem:[%s414 + $0x18] sm:$0xff]
          %v1244 = vld [vmem:[%s414 + $0x20] sm:$0xff]
          %v1245 = vld [vmem:[%s414 + $0x28] sm:$0xff]
          %v1246 = vld [vmem:[%s414 + $0x30] sm:$0xff]
          %v1247 = vld [vmem:[%s414 + $0x38] sm:$0xff]
          %v1248 = vld [vmem:[%s414 + $0x40] sm:$0xff]
          %v1249 = vld [vmem:[%s414 + $0x48] sm:$0xff]
          %v1250 = vld [vmem:[%s414 + $0x50] sm:$0xff]
          %v1251 = vld [vmem:[%s414 + $0x58] sm:$0xff]
          %v1252 = vld [vmem:[%s414 + $0x60] sm:$0xff]
          %v1253 = vld [vmem:[%s414 + $0x68] sm:$0xff]
          %v1254 = vld [vmem:[%s414 + $0x70] sm:$0xff]
          %v1255 = vld [vmem:[%s414 + $0x78] sm:$0xff]
          %v1256 = vld [vmem:[%s414 + $0x80] sm:$0xff]
          %v1257 = vld [vmem:[%s414 + $0x88] sm:$0xff]
          %v1258 = vld [vmem:[%s414 + $0x90] sm:$0xff]
          %v1259 = vld [vmem:[%s414 + $0x98] sm:$0xff]
          %v1260 = vld [vmem:[%s414 + $0xa0] sm:$0xff]
          %v1261 = vld [vmem:[%s414 + $0xa8] sm:$0xff]
          %v1262 = vld [vmem:[%s414 + $0xb0] sm:$0xff]
          %v1263 = vld [vmem:[%s414 + $0xb8] sm:$0xff]
          %v1264 = vld [vmem:[%s414 + $0xc0] sm:$0xff]
          %v1265 = vld [vmem:[%s414 + $0xc8] sm:$0xff]
          %v1266 = vld [vmem:[%s414 + $0xd0] sm:$0xff]
          %v1267 = vld [vmem:[%s414 + $0xd8] sm:$0xff]
          %v1268 = vld [vmem:[%s414 + $0xe0] sm:$0xff]
          %v1269 = vld [vmem:[%s414 + $0xe8] sm:$0xff]
          %v1270 = vld [vmem:[%s414 + $0xf0] sm:$0xff]
          %v1271 = vld [vmem:[%s414 + $0xf8] sm:$0xff]
          %v1272 = vld [vmem:[#allocation2] sm:$0xff]
          %v1273 = vld [vmem:[#allocation2 + $0x8] sm:$0xff]
          %v1274 = vld [vmem:[#allocation2 + $0x10] sm:$0xff]
          %v1275 = vld [vmem:[#allocation2 + $0x18] sm:$0xff]
          %v1276 = vld [vmem:[#allocation2 + $0x20] sm:$0xff]
          %v1277 = vld [vmem:[#allocation2 + $0x28] sm:$0xff]
          %v1278 = vld [vmem:[#allocation2 + $0x30] sm:$0xff]
          %v1279 = vld [vmem:[#allocation2 + $0x38] sm:$0xff]
          %v1280 = vld [vmem:[#allocation2 + $0x40] sm:$0xff]
          %v1281 = vld [vmem:[#allocation2 + $0x48] sm:$0xff]
          %v1282 = vld [vmem:[#allocation2 + $0x50] sm:$0xff]
          %v1283 = vld [vmem:[#allocation2 + $0x58] sm:$0xff]
          %v1284 = vld [vmem:[#allocation2 + $0x60] sm:$0xff]
          %v1285 = vld [vmem:[#allocation2 + $0x68] sm:$0xff]
          %v1286 = vld [vmem:[#allocation2 + $0x70] sm:$0xff]
          %v1287 = vld [vmem:[#allocation2 + $0x78] sm:$0xff]
          %v1288 = vld [vmem:[#allocation2 + $0x80] sm:$0xff]
          %v1289 = vld [vmem:[#allocation2 + $0x88] sm:$0xff]
          %v1290 = vld [vmem:[#allocation2 + $0x90] sm:$0xff]
          %v1291 = vld [vmem:[#allocation2 + $0x98] sm:$0xff]
          %v1292 = vld [vmem:[#allocation2 + $0xa0] sm:$0xff]
          %v1293 = vld [vmem:[#allocation2 + $0xa8] sm:$0xff]
          %v1294 = vld [vmem:[#allocation2 + $0xb0] sm:$0xff]
          %v1295 = vld [vmem:[#allocation2 + $0xb8] sm:$0xff]
          %v1296 = vld [vmem:[#allocation2 + $0xc0] sm:$0xff]
          %v1297 = vld [vmem:[#allocation2 + $0xc8] sm:$0xff]
          %v1298 = vld [vmem:[#allocation2 + $0xd0] sm:$0xff]
          %v1299 = vld [vmem:[#allocation2 + $0xd8] sm:$0xff]
          %v1300 = vld [vmem:[#allocation2 + $0xe0] sm:$0xff]
          %v1301 = vld [vmem:[#allocation2 + $0xe8] sm:$0xff]
          %v1302 = vld [vmem:[#allocation2 + $0xf0] sm:$0xff]
          %v1303 = vld [vmem:[#allocation2 + $0xf8] sm:$0xff]
          %v1304 = vld [vmem:[%s420] sm:$0xff]
          %v1305 = vld [vmem:[%s420 + $0x8] sm:$0xff]
          %v1306 = vld [vmem:[%s420 + $0x10] sm:$0xff]
          %v1307 = vld [vmem:[%s420 + $0x18] sm:$0xff]
          %v1308 = vld [vmem:[%s420 + $0x20] sm:$0xff]
          %v1309 = vld [vmem:[%s420 + $0x28] sm:$0xff]
          %v1310 = vld [vmem:[%s420 + $0x30] sm:$0xff]
          %v1311 = vld [vmem:[%s420 + $0x38] sm:$0xff]
          %v1312 = vld [vmem:[%s420 + $0x40] sm:$0xff]
          %v1313 = vld [vmem:[%s420 + $0x48] sm:$0xff]
          %v1314 = vld [vmem:[%s420 + $0x50] sm:$0xff]
          %v1315 = vld [vmem:[%s420 + $0x58] sm:$0xff]
          %v1316 = vld [vmem:[%s420 + $0x60] sm:$0xff]
          %v1317 = vld [vmem:[%s420 + $0x68] sm:$0xff]
          %v1318 = vld [vmem:[%s420 + $0x70] sm:$0xff]
          %v1319 = vld [vmem:[%s420 + $0x78] sm:$0xff]
          %v1320 = vld [vmem:[%s420 + $0x80] sm:$0xff]
          %v1321 = vld [vmem:[%s420 + $0x88] sm:$0xff]
          %v1322 = vld [vmem:[%s420 + $0x90] sm:$0xff]
          %v1323 = vld [vmem:[%s420 + $0x98] sm:$0xff]
          %v1324 = vld [vmem:[%s420 + $0xa0] sm:$0xff]
          %v1325 = vld [vmem:[%s420 + $0xa8] sm:$0xff]
          %v1326 = vld [vmem:[%s420 + $0xb0] sm:$0xff]
          %v1327 = vld [vmem:[%s420 + $0xb8] sm:$0xff]
          %v1328 = vld [vmem:[%s420 + $0xc0] sm:$0xff]
          %v1329 = vld [vmem:[%s420 + $0xc8] sm:$0xff]
          %v1330 = vld [vmem:[%s420 + $0xd0] sm:$0xff]
          %v1331 = vld [vmem:[%s420 + $0xd8] sm:$0xff]
          %v1332 = vld [vmem:[%s420 + $0xe0] sm:$0xff]
          %v1333 = vld [vmem:[%s420 + $0xe8] sm:$0xff]
          %v1334 = vld [vmem:[%s420 + $0xf0] sm:$0xff]
          %v1335 = vld [vmem:[%s420 + $0xf8] sm:$0xff]
          %1337 = vset.pattern.permute.xlu0 0
          %1338 = vperm.xlu0 %1337, %v1304
          %v1339 = vpop.permute.xlu0 %1338
          %1342 = vset.pattern.permute.xlu0 0
          %1343 = vperm.xlu0 %1342, %v1305
          %v1344 = vpop.permute.xlu0 %1343
          %1347 = vset.pattern.permute.xlu0 0
          %1348 = vperm.xlu0 %1347, %v1306
          %v1349 = vpop.permute.xlu0 %1348
          %1352 = vset.pattern.permute.xlu0 0
          %1353 = vperm.xlu0 %1352, %v1307
          %v1354 = vpop.permute.xlu0 %1353
          %1357 = vset.pattern.permute.xlu0 0
          %1358 = vperm.xlu0 %1357, %v1308
          %v1359 = vpop.permute.xlu0 %1358
          %1362 = vset.pattern.permute.xlu0 0
          %1363 = vperm.xlu0 %1362, %v1309
          %v1364 = vpop.permute.xlu0 %1363
          %1367 = vset.pattern.permute.xlu0 0
          %1368 = vperm.xlu0 %1367, %v1310
          %v1369 = vpop.permute.xlu0 %1368
          %1372 = vset.pattern.permute.xlu0 0
          %1373 = vperm.xlu0 %1372, %v1311
          %v1374 = vpop.permute.xlu0 %1373
          %1377 = vset.pattern.permute.xlu0 0
          %1378 = vperm.xlu0 %1377, %v1312
          %v1379 = vpop.permute.xlu0 %1378
          %1382 = vset.pattern.permute.xlu0 0
          %1383 = vperm.xlu0 %1382, %v1313
          %v1384 = vpop.permute.xlu0 %1383
          %1387 = vset.pattern.permute.xlu0 0
          %1388 = vperm.xlu0 %1387, %v1314
          %v1389 = vpop.permute.xlu0 %1388
          %1392 = vset.pattern.permute.xlu0 0
          %1393 = vperm.xlu0 %1392, %v1315
          %v1394 = vpop.permute.xlu0 %1393
          %1397 = vset.pattern.permute.xlu0 0
          %1398 = vperm.xlu0 %1397, %v1316
          %v1399 = vpop.permute.xlu0 %1398
          %1402 = vset.pattern.permute.xlu0 0
          %1403 = vperm.xlu0 %1402, %v1317
          %v1404 = vpop.permute.xlu0 %1403
          %1407 = vset.pattern.permute.xlu0 0
          %1408 = vperm.xlu0 %1407, %v1318
          %v1409 = vpop.permute.xlu0 %1408
          %1412 = vset.pattern.permute.xlu0 0
          %1413 = vperm.xlu0 %1412, %v1319
          %v1414 = vpop.permute.xlu0 %1413
          %1417 = vset.pattern.permute.xlu0 0
          %1418 = vperm.xlu0 %1417, %v1320
          %v1419 = vpop.permute.xlu0 %1418
          %1422 = vset.pattern.permute.xlu0 0
          %1423 = vperm.xlu0 %1422, %v1321
          %v1424 = vpop.permute.xlu0 %1423
          %1427 = vset.pattern.permute.xlu0 0
          %1428 = vperm.xlu0 %1427, %v1322
          %v1429 = vpop.permute.xlu0 %1428
          %1432 = vset.pattern.permute.xlu0 0
          %1433 = vperm.xlu0 %1432, %v1323
          %v1434 = vpop.permute.xlu0 %1433
          %1437 = vset.pattern.permute.xlu0 0
          %1438 = vperm.xlu0 %1437, %v1324
          %v1439 = vpop.permute.xlu0 %1438
          %1442 = vset.pattern.permute.xlu0 0
          %1443 = vperm.xlu0 %1442, %v1325
          %v1444 = vpop.permute.xlu0 %1443
          %1447 = vset.pattern.permute.xlu0 0
          %1448 = vperm.xlu0 %1447, %v1326
          %v1449 = vpop.permute.xlu0 %1448
          %1452 = vset.pattern.permute.xlu0 0
          %1453 = vperm.xlu0 %1452, %v1327
          %v1454 = vpop.permute.xlu0 %1453
          %1457 = vset.pattern.permute.xlu0 0
          %1458 = vperm.xlu0 %1457, %v1328
          %v1459 = vpop.permute.xlu0 %1458
          %1462 = vset.pattern.permute.xlu0 0
          %1463 = vperm.xlu0 %1462, %v1329
          %v1464 = vpop.permute.xlu0 %1463
          %1467 = vset.pattern.permute.xlu0 0
          %1468 = vperm.xlu0 %1467, %v1330
          %v1469 = vpop.permute.xlu0 %1468
          %1472 = vset.pattern.permute.xlu0 0
          %1473 = vperm.xlu0 %1472, %v1331
          %v1474 = vpop.permute.xlu0 %1473
          %1477 = vset.pattern.permute.xlu0 0
          %1478 = vperm.xlu0 %1477, %v1332
          %v1479 = vpop.permute.xlu0 %1478
          %1482 = vset.pattern.permute.xlu0 0
          %1483 = vperm.xlu0 %1482, %v1333
          %v1484 = vpop.permute.xlu0 %1483
          %1487 = vset.pattern.permute.xlu0 0
          %1488 = vperm.xlu0 %1487, %v1334
          %v1489 = vpop.permute.xlu0 %1488
          %1492 = vset.pattern.permute.xlu0 0
          %1493 = vperm.xlu0 %1492, %v1335
          %v1494 = vpop.permute.xlu0 %1493
          %v1496 = vmul.f32 %v1272, %v1339
          %v1497 = vmul.f32 %v1273, %v1344
          %v1498 = vmul.f32 %v1274, %v1349
          %v1499 = vmul.f32 %v1275, %v1354
          %v1500 = vmul.f32 %v1276, %v1359
          %v1501 = vmul.f32 %v1277, %v1364
          %v1502 = vmul.f32 %v1278, %v1369
          %v1503 = vmul.f32 %v1279, %v1374
          %v1504 = vmul.f32 %v1280, %v1379
          %v1505 = vmul.f32 %v1281, %v1384
          %v1506 = vmul.f32 %v1282, %v1389
          %v1507 = vmul.f32 %v1283, %v1394
          %v1508 = vmul.f32 %v1284, %v1399
          %v1509 = vmul.f32 %v1285, %v1404
          %v1510 = vmul.f32 %v1286, %v1409
          %v1511 = vmul.f32 %v1287, %v1414
          %v1512 = vmul.f32 %v1288, %v1419
          %v1513 = vmul.f32 %v1289, %v1424
          %v1514 = vmul.f32 %v1290, %v1429
          %v1515 = vmul.f32 %v1291, %v1434
          %v1516 = vmul.f32 %v1292, %v1439
          %v1517 = vmul.f32 %v1293, %v1444
          %v1518 = vmul.f32 %v1294, %v1449
          %v1519 = vmul.f32 %v1295, %v1454
          %v1520 = vmul.f32 %v1296, %v1459
          %v1521 = vmul.f32 %v1297, %v1464
          %v1522 = vmul.f32 %v1298, %v1469
          %v1523 = vmul.f32 %v1299, %v1474
          %v1524 = vmul.f32 %v1300, %v1479
          %v1525 = vmul.f32 %v1301, %v1484
          %v1526 = vmul.f32 %v1302, %v1489
          %v1527 = vmul.f32 %v1303, %v1494
          %v1528 = vsub.f32 %v1240, %v1496
          %v1529 = vsub.f32 %v1241, %v1497
          %v1530 = vsub.f32 %v1242, %v1498
          %v1531 = vsub.f32 %v1243, %v1499
          %v1532 = vsub.f32 %v1244, %v1500
          %v1533 = vsub.f32 %v1245, %v1501
          %v1534 = vsub.f32 %v1246, %v1502
          %v1535 = vsub.f32 %v1247, %v1503
          %v1536 = vsub.f32 %v1248, %v1504
          %v1537 = vsub.f32 %v1249, %v1505
          %v1538 = vsub.f32 %v1250, %v1506
          %v1539 = vsub.f32 %v1251, %v1507
          %v1540 = vsub.f32 %v1252, %v1508
          %v1541 = vsub.f32 %v1253, %v1509
          %v1542 = vsub.f32 %v1254, %v1510
          %v1543 = vsub.f32 %v1255, %v1511
          %v1544 = vsub.f32 %v1256, %v1512
          %v1545 = vsub.f32 %v1257, %v1513
          %v1546 = vsub.f32 %v1258, %v1514
          %v1547 = vsub.f32 %v1259, %v1515
          %v1548 = vsub.f32 %v1260, %v1516
          %v1549 = vsub.f32 %v1261, %v1517
          %v1550 = vsub.f32 %v1262, %v1518
          %v1551 = vsub.f32 %v1263, %v1519
          %v1552 = vsub.f32 %v1264, %v1520
          %v1553 = vsub.f32 %v1265, %v1521
          %v1554 = vsub.f32 %v1266, %v1522
          %v1555 = vsub.f32 %v1267, %v1523
          %v1556 = vsub.f32 %v1268, %v1524
          %v1557 = vsub.f32 %v1269, %v1525
          %v1558 = vsub.f32 %v1270, %v1526
          %v1559 = vsub.f32 %v1271, %v1527
          %v1560 = vpack.c.bf16 %v1497, %v1496
          %v1561 = vpack.c.bf16 %v1499, %v1498
          %v1562 = vpack.c.bf16 %v1501, %v1500
          %v1563 = vpack.c.bf16 %v1503, %v1502
          %v1564 = vpack.c.bf16 %v1505, %v1504
          %v1565 = vpack.c.bf16 %v1507, %v1506
          %v1566 = vpack.c.bf16 %v1509, %v1508
          %v1567 = vpack.c.bf16 %v1511, %v1510
          %v1568 = vpack.c.bf16 %v1513, %v1512
          %v1569 = vpack.c.bf16 %v1515, %v1514
          %v1570 = vpack.c.bf16 %v1517, %v1516
          %v1571 = vpack.c.bf16 %v1519, %v1518
          %v1572 = vpack.c.bf16 %v1521, %v1520
          %v1573 = vpack.c.bf16 %v1523, %v1522
          %v1574 = vpack.c.bf16 %v1525, %v1524
          %v1575 = vpack.c.bf16 %v1527, %v1526
          %v1576 = vld [vmem:[%s4] sm:$0xf]
          %v1577 = vld [vmem:[%s4 + $0x4] sm:$0xf]
          %v1578 = vld [vmem:[%s4 + $0x8] sm:$0xf]
          %v1579 = vld [vmem:[%s4 + $0xc] sm:$0xf]
          %v1584 = vunpack.c.l.b16 %v1576
          %v1585 = vunpack.c.l.b16 %v1577
          %v1586 = vunpack.c.l.b16 %v1578
          %v1587 = vunpack.c.l.b16 %v1579
          %v1588 = vpack.c.b16 %v1585, %v1584
          %v1589 = vpack.c.b16 %v1587, %v1586
          %v1593 = vsel %vm1204, %v1560, 0
          %v1596 = vsel %vm1204, %v1561, 0
          %v1599 = vsel %vm1204, %v1562, 0
          %v1602 = vsel %vm1204, %v1563, 0
          %v1605 = vsel %vm1204, %v1564, 0
          %v1608 = vsel %vm1204, %v1565, 0
          %v1611 = vsel %vm1204, %v1566, 0
          %v1614 = vsel %vm1204, %v1567, 0
          %v1617 = vsel %vm1204, %v1568, 0
          %v1620 = vsel %vm1204, %v1569, 0
          %v1623 = vsel %vm1204, %v1570, 0
          %v1626 = vsel %vm1204, %v1571, 0
          %v1629 = vsel %vm1204, %v1572, 0
          %v1632 = vsel %vm1204, %v1573, 0
          %v1635 = vsel %vm1204, %v1574, 0
          %v1638 = vsel %vm1204, %v1575, 0
          %1640 = vmatprep.subr.bf16.mxu0 0
          %1641 = vmatpush1.bf16.msra.mxu0 %v1588
          %1642 = vmatprep.subr.bf16.mxu0 0
          %1643 = vmatpush1.bf16.msra.mxu0 %v1589
          %1644 = vmatprep.subr.bf16.mxu0 0
          %1645 = vmatpush1.bf16.msra.mxu0 0
          %1646 = vmatprep.subr.bf16.mxu0 0
          %1647 = vmatpush1.bf16.msra.mxu0 0
          %1648 = vmatprep.subr.bf16.mxu0 0
          %1649 = vmatpush1.bf16.msra.mxu0 0
          %1650 = vmatprep.subr.bf16.mxu0 0
          %1651 = vmatpush1.bf16.msra.mxu0 0
          %1652 = vmatprep.subr.bf16.mxu0 0
          %1653 = vmatpush1.bf16.msra.mxu0 0
          %1654 = vmatprep.subr.bf16.mxu0 0
          %1655 = vmatpush1.bf16.msra.mxu0 0
          %1656 = vmatprep.subr.bf16.mxu0 0
          %1657 = vmatpush1.bf16.msra.mxu0 0
          %1658 = vmatprep.subr.bf16.mxu0 0
          %1659 = vmatpush1.bf16.msra.mxu0 0
          %1660 = vmatprep.subr.bf16.mxu0 0
          %1661 = vmatpush1.bf16.msra.mxu0 0
          %1662 = vmatprep.subr.bf16.mxu0 0
          %1663 = vmatpush1.bf16.msra.mxu0 0
          %1664 = vmatprep.subr.bf16.mxu0 0
          %1665 = vmatpush1.bf16.msra.mxu0 0
          %1666 = vmatprep.subr.bf16.mxu0 0
          %1667 = vmatpush1.bf16.msra.mxu0 0
          %1668 = vmatprep.subr.bf16.mxu0 0
          %1669 = vmatpush1.bf16.msra.mxu0 0
          %1670 = vmatprep.subr.bf16.mxu0 0
          %1671 = vmatpush1.bf16.msra.mxu0 0
          %1672 = vmatprep.mubr.bf16.mxu0 0
          %1673 = vmatmul.mubr.bf16.gmra.mrb[0].mxu0 %v1593
          %v1674 = vpop.f32.mrb[0].mxu0
          %v1675 = vadd.f32 0.0, %v1674
          %v1676 = vpop.f32.mrb[0].mxu0
          %v1677 = vpop.f32.mrb[0].mxu0
          %v1678 = vadd.f32 0.0, %v1677
          %v1679 = vpop.f32.mrb[0].mxu0
          %1680 = vmatprep.mubr.bf16.mxu0 0
          %1681 = vmatmul.mubr.bf16.gmra.mrb[0].mxu0 %v1596
          %v1682 = vpop.f32.mrb[0].mxu0
          %v1683 = vadd.f32 0.0, %v1682
          %v1684 = vpop.f32.mrb[0].mxu0
          %v1685 = vpop.f32.mrb[0].mxu0
          %v1686 = vadd.f32 0.0, %v1685
          %v1687 = vpop.f32.mrb[0].mxu0
          %1688 = vmatprep.mubr.bf16.mxu0 0
          %1689 = vmatmul.mubr.bf16.gmra.mrb[0].mxu0 %v1599
          %v1690 = vpop.f32.mrb[0].mxu0
          %v1691 = vadd.f32 0.0, %v1690
          %v1692 = vpop.f32.mrb[0].mxu0
          %v1693 = vpop.f32.mrb[0].mxu0
          %v1694 = vadd.f32 0.0, %v1693
          %v1695 = vpop.f32.mrb[0].mxu0
          %1696 = vmatprep.mubr.bf16.mxu0 0
          %1697 = vmatmul.mubr.bf16.gmra.mrb[0].mxu0 %v1602
          %v1698 = vpop.f32.mrb[0].mxu0
          %v1699 = vadd.f32 0.0, %v1698
          %v1700 = vpop.f32.mrb[0].mxu0
          %v1701 = vpop.f32.mrb[0].mxu0
          %v1702 = vadd.f32 0.0, %v1701
          %v1703 = vpop.f32.mrb[0].mxu0
          %1704 = vmatprep.mubr.bf16.mxu0 0
          %1705 = vmatmul.mubr.bf16.gmra.mrb[0].mxu0 %v1605
          %v1706 = vpop.f32.mrb[0].mxu0
          %v1707 = vadd.f32 0.0, %v1706
          %v1708 = vpop.f32.mrb[0].mxu0
          %v1709 = vpop.f32.mrb[0].mxu0
          %v1710 = vadd.f32 0.0, %v1709
          %v1711 = vpop.f32.mrb[0].mxu0
          %1712 = vmatprep.mubr.bf16.mxu0 0
          %1713 = vmatmul.mubr.bf16.gmra.mrb[0].mxu0 %v1608
          %v1714 = vpop.f32.mrb[0].mxu0
          %v1715 = vadd.f32 0.0, %v1714
          %v1716 = vpop.f32.mrb[0].mxu0
          %v1717 = vpop.f32.mrb[0].mxu0
          %v1718 = vadd.f32 0.0, %v1717
          %v1719 = vpop.f32.mrb[0].mxu0
          %1720 = vmatprep.mubr.bf16.mxu0 0
          %1721 = vmatmul.mubr.bf16.gmra.mrb[0].mxu0 %v1611
          %v1722 = vpop.f32.mrb[0].mxu0
          %v1723 = vadd.f32 0.0, %v1722
          %v1724 = vpop.f32.mrb[0].mxu0
          %v1725 = vpop.f32.mrb[0].mxu0
          %v1726 = vadd.f32 0.0, %v1725
          %v1727 = vpop.f32.mrb[0].mxu0
          %1728 = vmatprep.mubr.bf16.mxu0 0
          %1729 = vmatmul.mubr.bf16.gmra.mrb[0].mxu0 %v1614
          %v1730 = vpop.f32.mrb[0].mxu0
          %v1731 = vadd.f32 0.0, %v1730
          %v1732 = vpop.f32.mrb[0].mxu0
          %v1733 = vpop.f32.mrb[0].mxu0
          %v1734 = vadd.f32 0.0, %v1733
          %v1735 = vpop.f32.mrb[0].mxu0
          %1736 = vmatprep.mubr.bf16.mxu0 0
          %1737 = vmatmul.mubr.bf16.gmra.mrb[0].mxu0 %v1617
          %v1738 = vpop.f32.mrb[0].mxu0
          %v1739 = vadd.f32 0.0, %v1738
          %v1740 = vpop.f32.mrb[0].mxu0
          %v1741 = vpop.f32.mrb[0].mxu0
          %v1742 = vadd.f32 0.0, %v1741
          %v1743 = vpop.f32.mrb[0].mxu0
          %1744 = vmatprep.mubr.bf16.mxu0 0
          %1745 = vmatmul.mubr.bf16.gmra.mrb[0].mxu0 %v1620
          %v1746 = vpop.f32.mrb[0].mxu0
          %v1747 = vadd.f32 0.0, %v1746
          %v1748 = vpop.f32.mrb[0].mxu0
          %v1749 = vpop.f32.mrb[0].mxu0
          %v1750 = vadd.f32 0.0, %v1749
          %v1751 = vpop.f32.mrb[0].mxu0
          %1752 = vmatprep.mubr.bf16.mxu0 0
          %1753 = vmatmul.mubr.bf16.gmra.mrb[0].mxu0 %v1623
          %v1754 = vpop.f32.mrb[0].mxu0
          %v1755 = vadd.f32 0.0, %v1754
          %v1756 = vpop.f32.mrb[0].mxu0
          %v1757 = vpop.f32.mrb[0].mxu0
          %v1758 = vadd.f32 0.0, %v1757
          %v1759 = vpop.f32.mrb[0].mxu0
          %1760 = vmatprep.mubr.bf16.mxu0 0
          %1761 = vmatmul.mubr.bf16.gmra.mrb[0].mxu0 %v1626
          %v1762 = vpop.f32.mrb[0].mxu0
          %v1763 = vadd.f32 0.0, %v1762
          %v1764 = vpop.f32.mrb[0].mxu0
          %v1765 = vpop.f32.mrb[0].mxu0
          %v1766 = vadd.f32 0.0, %v1765
          %v1767 = vpop.f32.mrb[0].mxu0
          %1768 = vmatprep.mubr.bf16.mxu0 0
          %1769 = vmatmul.mubr.bf16.gmra.mrb[0].mxu0 %v1629
          %v1770 = vpop.f32.mrb[0].mxu0
          %v1771 = vadd.f32 0.0, %v1770
          %v1772 = vpop.f32.mrb[0].mxu0
          %v1773 = vpop.f32.mrb[0].mxu0
          %v1774 = vadd.f32 0.0, %v1773
          %v1775 = vpop.f32.mrb[0].mxu0
          %1776 = vmatprep.mubr.bf16.mxu0 0
          %1777 = vmatmul.mubr.bf16.gmra.mrb[0].mxu0 %v1632
          %v1778 = vpop.f32.mrb[0].mxu0
          %v1779 = vadd.f32 0.0, %v1778
          %v1780 = vpop.f32.mrb[0].mxu0
          %v1781 = vpop.f32.mrb[0].mxu0
          %v1782 = vadd.f32 0.0, %v1781
          %v1783 = vpop.f32.mrb[0].mxu0
          %1784 = vmatprep.mubr.bf16.mxu0 0
          %1785 = vmatmul.mubr.bf16.gmra.mrb[0].mxu0 %v1635
          %v1786 = vpop.f32.mrb[0].mxu0
          %v1787 = vadd.f32 0.0, %v1786
          %v1788 = vpop.f32.mrb[0].mxu0
          %v1789 = vpop.f32.mrb[0].mxu0
          %v1790 = vadd.f32 0.0, %v1789
          %v1791 = vpop.f32.mrb[0].mxu0
          %1792 = vmatprep.mubr.bf16.mxu0 0
          %1793 = vmatmul.mubr.bf16.gmra.mrb[0].mxu0 %v1638
          %v1794 = vpop.f32.mrb[0].mxu0
          %v1795 = vadd.f32 0.0, %v1794
          %v1796 = vpop.f32.mrb[0].mxu0
          %v1797 = vpop.f32.mrb[0].mxu0
          %v1798 = vadd.f32 0.0, %v1797
          %v1799 = vpop.f32.mrb[0].mxu0
          %1800 = vdwg.mxu0
          %v1801 = vmax.f32 %v1675, 0.0
          %v1802 = vmax.f32 %v1678, 0.0
          %v1803 = vmax.f32 %v1683, 0.0
          %v1804 = vmax.f32 %v1686, 0.0
          %v1805 = vmax.f32 %v1691, 0.0
          %v1806 = vmax.f32 %v1694, 0.0
          %v1807 = vmax.f32 %v1699, 0.0
          %v1808 = vmax.f32 %v1702, 0.0
          %v1809 = vmax.f32 %v1707, 0.0
          %v1810 = vmax.f32 %v1710, 0.0
          %v1811 = vmax.f32 %v1715, 0.0
          %v1812 = vmax.f32 %v1718, 0.0
          %v1813 = vmax.f32 %v1723, 0.0
          %v1814 = vmax.f32 %v1726, 0.0
          %v1815 = vmax.f32 %v1731, 0.0
          %v1816 = vmax.f32 %v1734, 0.0
          %v1817 = vmax.f32 %v1739, 0.0
          %v1818 = vmax.f32 %v1742, 0.0
          %v1819 = vmax.f32 %v1747, 0.0
          %v1820 = vmax.f32 %v1750, 0.0
          %v1821 = vmax.f32 %v1755, 0.0
          %v1822 = vmax.f32 %v1758, 0.0
          %v1823 = vmax.f32 %v1763, 0.0
          %v1824 = vmax.f32 %v1766, 0.0
          %v1825 = vmax.f32 %v1771, 0.0
          %v1826 = vmax.f32 %v1774, 0.0
          %v1827 = vmax.f32 %v1779, 0.0
          %v1828 = vmax.f32 %v1782, 0.0
          %v1829 = vmax.f32 %v1787, 0.0
          %v1830 = vmax.f32 %v1790, 0.0
          %v1831 = vmax.f32 %v1795, 0.0
          %v1832 = vmax.f32 %v1798, 0.0
          %v1833 = vpack.c.bf16 %v1529, %v1528
          %v1834 = vpack.c.bf16 %v1531, %v1530
          %v1835 = vpack.c.bf16 %v1533, %v1532
          %v1836 = vpack.c.bf16 %v1535, %v1534
          %v1837 = vpack.c.bf16 %v1537, %v1536
          %v1838 = vpack.c.bf16 %v1539, %v1538
          %v1839 = vpack.c.bf16 %v1541, %v1540
          %v1840 = vpack.c.bf16 %v1543, %v1542
          %v1841 = vpack.c.bf16 %v1545, %v1544
          %v1842 = vpack.c.bf16 %v1547, %v1546
          %v1843 = vpack.c.bf16 %v1549, %v1548
          %v1844 = vpack.c.bf16 %v1551, %v1550
          %v1845 = vpack.c.bf16 %v1553, %v1552
          %v1846 = vpack.c.bf16 %v1555, %v1554
          %v1847 = vpack.c.bf16 %v1557, %v1556
          %v1848 = vpack.c.bf16 %v1559, %v1558
          %v1849 = vld [vmem:[%s5] sm:$0xf]
          %v1850 = vld [vmem:[%s5 + $0x4] sm:$0xf]
          %v1851 = vld [vmem:[%s5 + $0x8] sm:$0xf]
          %v1852 = vld [vmem:[%s5 + $0xc] sm:$0xf]
          %v1857 = vunpack.c.l.b16 %v1849
          %v1858 = vunpack.c.l.b16 %v1850
          %v1859 = vunpack.c.l.b16 %v1851
          %v1860 = vunpack.c.l.b16 %v1852
          %v1861 = vpack.c.b16 %v1858, %v1857
          %v1862 = vpack.c.b16 %v1860, %v1859
          %v1866 = vsel %vm1204, %v1833, 0
          %v1869 = vsel %vm1204, %v1834, 0
          %v1872 = vsel %vm1204, %v1835, 0
          %v1875 = vsel %vm1204, %v1836, 0
          %v1878 = vsel %vm1204, %v1837, 0
          %v1881 = vsel %vm1204, %v1838, 0
          %v1884 = vsel %vm1204, %v1839, 0
          %v1887 = vsel %vm1204, %v1840, 0
          %v1890 = vsel %vm1204, %v1841, 0
          %v1893 = vsel %vm1204, %v1842, 0
          %v1896 = vsel %vm1204, %v1843, 0
          %v1899 = vsel %vm1204, %v1844, 0
          %v1902 = vsel %vm1204, %v1845, 0
          %v1905 = vsel %vm1204, %v1846, 0
          %v1908 = vsel %vm1204, %v1847, 0
          %v1911 = vsel %vm1204, %v1848, 0
          %1913 = vmatprep.subr.bf16.mxu0 0
          %1914 = vmatpush1.bf16.msra.mxu0 %v1861
          %1915 = vmatprep.subr.bf16.mxu0 0
          %1916 = vmatpush1.bf16.msra.mxu0 %v1862
          %1917 = vmatprep.subr.bf16.mxu0 0
          %1918 = vmatpush1.bf16.msra.mxu0 0
          %1919 = vmatprep.subr.bf16.mxu0 0
          %1920 = vmatpush1.bf16.msra.mxu0 0
          %1921 = vmatprep.subr.bf16.mxu0 0
          %1922 = vmatpush1.bf16.msra.mxu0 0
          %1923 = vmatprep.subr.bf16.mxu0 0
          %1924 = vmatpush1.bf16.msra.mxu0 0
          %1925 = vmatprep.subr.bf16.mxu0 0
          %1926 = vmatpush1.bf16.msra.mxu0 0
          %1927 = vmatprep.subr.bf16.mxu0 0
          %1928 = vmatpush1.bf16.msra.mxu0 0
          %1929 = vmatprep.subr.bf16.mxu0 0
          %1930 = vmatpush1.bf16.msra.mxu0 0
          %1931 = vmatprep.subr.bf16.mxu0 0
          %1932 = vmatpush1.bf16.msra.mxu0 0
          %1933 = vmatprep.subr.bf16.mxu0 0
          %1934 = vmatpush1.bf16.msra.mxu0 0
          %1935 = vmatprep.subr.bf16.mxu0 0
          %1936 = vmatpush1.bf16.msra.mxu0 0
          %1937 = vmatprep.subr.bf16.mxu0 0
          %1938 = vmatpush1.bf16.msra.mxu0 0
          %1939 = vmatprep.subr.bf16.mxu0 0
          %1940 = vmatpush1.bf16.msra.mxu0 0
          %1941 = vmatprep.subr.bf16.mxu0 0
          %1942 = vmatpush1.bf16.msra.mxu0 0
          %1943 = vmatprep.subr.bf16.mxu0 0
          %1944 = vmatpush1.bf16.msra.mxu0 0
          %1945 = vmatprep.mubr.bf16.mxu0 0
          %1946 = vmatmul.mubr.bf16.gmra.mrb[0].mxu0 %v1866
          %v1947 = vpop.f32.mrb[0].mxu0
          %v1948 = vadd.f32 0.0, %v1947
          %v1949 = vpop.f32.mrb[0].mxu0
          %v1950 = vpop.f32.mrb[0].mxu0
          %v1951 = vadd.f32 0.0, %v1950
          %v1952 = vpop.f32.mrb[0].mxu0
          %1953 = vmatprep.mubr.bf16.mxu0 0
          %1954 = vmatmul.mubr.bf16.gmra.mrb[0].mxu0 %v1869
          %v1955 = vpop.f32.mrb[0].mxu0
          %v1956 = vadd.f32 0.0, %v1955
          %v1957 = vpop.f32.mrb[0].mxu0
          %v1958 = vpop.f32.mrb[0].mxu0
          %v1959 = vadd.f32 0.0, %v1958
          %v1960 = vpop.f32.mrb[0].mxu0
          %1961 = vmatprep.mubr.bf16.mxu0 0
          %1962 = vmatmul.mubr.bf16.gmra.mrb[0].mxu0 %v1872
          %v1963 = vpop.f32.mrb[0].mxu0
          %v1964 = vadd.f32 0.0, %v1963
          %v1965 = vpop.f32.mrb[0].mxu0
          %v1966 = vpop.f32.mrb[0].mxu0
          %v1967 = vadd.f32 0.0, %v1966
          %v1968 = vpop.f32.mrb[0].mxu0
          %1969 = vmatprep.mubr.bf16.mxu0 0
          %1970 = vmatmul.mubr.bf16.gmra.mrb[0].mxu0 %v1875
          %v1971 = vpop.f32.mrb[0].mxu0
          %v1972 = vadd.f32 0.0, %v1971
          %v1973 = vpop.f32.mrb[0].mxu0
          %v1974 = vpop.f32.mrb[0].mxu0
          %v1975 = vadd.f32 0.0, %v1974
          %v1976 = vpop.f32.mrb[0].mxu0
          %1977 = vmatprep.mubr.bf16.mxu0 0
          %1978 = vmatmul.mubr.bf16.gmra.mrb[0].mxu0 %v1878
          %v1979 = vpop.f32.mrb[0].mxu0
          %v1980 = vadd.f32 0.0, %v1979
          %v1981 = vpop.f32.mrb[0].mxu0
          %v1982 = vpop.f32.mrb[0].mxu0
          %v1983 = vadd.f32 0.0, %v1982
          %v1984 = vpop.f32.mrb[0].mxu0
          %1985 = vmatprep.mubr.bf16.mxu0 0
          %1986 = vmatmul.mubr.bf16.gmra.mrb[0].mxu0 %v1881
          %v1987 = vpop.f32.mrb[0].mxu0
          %v1988 = vadd.f32 0.0, %v1987
          %v1989 = vpop.f32.mrb[0].mxu0
          %v1990 = vpop.f32.mrb[0].mxu0
          %v1991 = vadd.f32 0.0, %v1990
          %v1992 = vpop.f32.mrb[0].mxu0
          %1993 = vmatprep.mubr.bf16.mxu0 0
          %1994 = vmatmul.mubr.bf16.gmra.mrb[0].mxu0 %v1884
          %v1995 = vpop.f32.mrb[0].mxu0
          %v1996 = vadd.f32 0.0, %v1995
          %v1997 = vpop.f32.mrb[0].mxu0
          %v1998 = vpop.f32.mrb[0].mxu0
          %v1999 = vadd.f32 0.0, %v1998
          %v2000 = vpop.f32.mrb[0].mxu0
          %2001 = vmatprep.mubr.bf16.mxu0 0
          %2002 = vmatmul.mubr.bf16.gmra.mrb[0].mxu0 %v1887
          %v2003 = vpop.f32.mrb[0].mxu0
          %v2004 = vadd.f32 0.0, %v2003
          %v2005 = vpop.f32.mrb[0].mxu0
          %v2006 = vpop.f32.mrb[0].mxu0
          %v2007 = vadd.f32 0.0, %v2006
          %v2008 = vpop.f32.mrb[0].mxu0
          %2009 = vmatprep.mubr.bf16.mxu0 0
          %2010 = vmatmul.mubr.bf16.gmra.mrb[0].mxu0 %v1890
          %v2011 = vpop.f32.mrb[0].mxu0
          %v2012 = vadd.f32 0.0, %v2011
          %v2013 = vpop.f32.mrb[0].mxu0
          %v2014 = vpop.f32.mrb[0].mxu0
          %v2015 = vadd.f32 0.0, %v2014
          %v2016 = vpop.f32.mrb[0].mxu0
          %2017 = vmatprep.mubr.bf16.mxu0 0
          %2018 = vmatmul.mubr.bf16.gmra.mrb[0].mxu0 %v1893
          %v2019 = vpop.f32.mrb[0].mxu0
          %v2020 = vadd.f32 0.0, %v2019
          %v2021 = vpop.f32.mrb[0].mxu0
          %v2022 = vpop.f32.mrb[0].mxu0
          %v2023 = vadd.f32 0.0, %v2022
          %v2024 = vpop.f32.mrb[0].mxu0
          %2025 = vmatprep.mubr.bf16.mxu0 0
          %2026 = vmatmul.mubr.bf16.gmra.mrb[0].mxu0 %v1896
          %v2027 = vpop.f32.mrb[0].mxu0
          %v2028 = vadd.f32 0.0, %v2027
          %v2029 = vpop.f32.mrb[0].mxu0
          %v2030 = vpop.f32.mrb[0].mxu0
          %v2031 = vadd.f32 0.0, %v2030
          %v2032 = vpop.f32.mrb[0].mxu0
          %2033 = vmatprep.mubr.bf16.mxu0 0
          %2034 = vmatmul.mubr.bf16.gmra.mrb[0].mxu0 %v1899
          %v2035 = vpop.f32.mrb[0].mxu0
          %v2036 = vadd.f32 0.0, %v2035
          %v2037 = vpop.f32.mrb[0].mxu0
          %v2038 = vpop.f32.mrb[0].mxu0
          %v2039 = vadd.f32 0.0, %v2038
          %v2040 = vpop.f32.mrb[0].mxu0
          %2041 = vmatprep.mubr.bf16.mxu0 0
          %2042 = vmatmul.mubr.bf16.gmra.mrb[0].mxu0 %v1902
          %v2043 = vpop.f32.mrb[0].mxu0
          %v2044 = vadd.f32 0.0, %v2043
          %v2045 = vpop.f32.mrb[0].mxu0
          %v2046 = vpop.f32.mrb[0].mxu0
          %v2047 = vadd.f32 0.0, %v2046
          %v2048 = vpop.f32.mrb[0].mxu0
          %2049 = vmatprep.mubr.bf16.mxu0 0
          %2050 = vmatmul.mubr.bf16.gmra.mrb[0].mxu0 %v1905
          %v2051 = vpop.f32.mrb[0].mxu0
          %v2052 = vadd.f32 0.0, %v2051
          %v2053 = vpop.f32.mrb[0].mxu0
          %v2054 = vpop.f32.mrb[0].mxu0
          %v2055 = vadd.f32 0.0, %v2054
          %v2056 = vpop.f32.mrb[0].mxu0
          %2057 = vmatprep.mubr.bf16.mxu0 0
          %2058 = vmatmul.mubr.bf16.gmra.mrb[0].mxu0 %v1908
          %v2059 = vpop.f32.mrb[0].mxu0
          %v2060 = vadd.f32 0.0, %v2059
          %v2061 = vpop.f32.mrb[0].mxu0
          %v2062 = vpop.f32.mrb[0].mxu0
          %v2063 = vadd.f32 0.0, %v2062
          %v2064 = vpop.f32.mrb[0].mxu0
          %2065 = vmatprep.mubr.bf16.mxu0 0
          %2066 = vmatmul.mubr.bf16.gmra.mrb[0].mxu0 %v1911
          %v2067 = vpop.f32.mrb[0].mxu0
          %v2068 = vadd.f32 0.0, %v2067
          %v2069 = vpop.f32.mrb[0].mxu0
          %v2070 = vpop.f32.mrb[0].mxu0
          %v2071 = vadd.f32 0.0, %v2070
          %v2072 = vpop.f32.mrb[0].mxu0
          %2073 = vdwg.mxu0
          %v2074 = vmax.f32 %v1948, 0.0
          %v2075 = vmax.f32 %v1951, 0.0
          %v2076 = vmax.f32 %v1956, 0.0
          %v2077 = vmax.f32 %v1959, 0.0
          %v2078 = vmax.f32 %v1964, 0.0
          %v2079 = vmax.f32 %v1967, 0.0
          %v2080 = vmax.f32 %v1972, 0.0
          %v2081 = vmax.f32 %v1975, 0.0
          %v2082 = vmax.f32 %v1980, 0.0
          %v2083 = vmax.f32 %v1983, 0.0
          %v2084 = vmax.f32 %v1988, 0.0
          %v2085 = vmax.f32 %v1991, 0.0
          %v2086 = vmax.f32 %v1996, 0.0
          %v2087 = vmax.f32 %v1999, 0.0
          %v2088 = vmax.f32 %v2004, 0.0
          %v2089 = vmax.f32 %v2007, 0.0
          %v2090 = vmax.f32 %v2012, 0.0
          %v2091 = vmax.f32 %v2015, 0.0
          %v2092 = vmax.f32 %v2020, 0.0
          %v2093 = vmax.f32 %v2023, 0.0
          %v2094 = vmax.f32 %v2028, 0.0
          %v2095 = vmax.f32 %v2031, 0.0
          %v2096 = vmax.f32 %v2036, 0.0
          %v2097 = vmax.f32 %v2039, 0.0
          %v2098 = vmax.f32 %v2044, 0.0
          %v2099 = vmax.f32 %v2047, 0.0
          %v2100 = vmax.f32 %v2052, 0.0
          %v2101 = vmax.f32 %v2055, 0.0
          %v2102 = vmax.f32 %v2060, 0.0
          %v2103 = vmax.f32 %v2063, 0.0
          %v2104 = vmax.f32 %v2068, 0.0
          %v2105 = vmax.f32 %v2071, 0.0
          %v2106 = vpack.c.bf16 %v1241, %v1240
          %v2107 = vpack.c.bf16 %v1243, %v1242
          %v2108 = vpack.c.bf16 %v1245, %v1244
          %v2109 = vpack.c.bf16 %v1247, %v1246
          %v2110 = vpack.c.bf16 %v1249, %v1248
          %v2111 = vpack.c.bf16 %v1251, %v1250
          %v2112 = vpack.c.bf16 %v1253, %v1252
          %v2113 = vpack.c.bf16 %v1255, %v1254
          %v2114 = vpack.c.bf16 %v1257, %v1256
          %v2115 = vpack.c.bf16 %v1259, %v1258
          %v2116 = vpack.c.bf16 %v1261, %v1260
          %v2117 = vpack.c.bf16 %v1263, %v1262
          %v2118 = vpack.c.bf16 %v1265, %v1264
          %v2119 = vpack.c.bf16 %v1267, %v1266
          %v2120 = vpack.c.bf16 %v1269, %v1268
          %v2121 = vpack.c.bf16 %v1271, %v1270
          %v2122 = vld [vmem:[%s6] sm:$0xf]
          %v2123 = vld [vmem:[%s6 + $0x4] sm:$0xf]
          %v2124 = vld [vmem:[%s6 + $0x8] sm:$0xf]
          %v2125 = vld [vmem:[%s6 + $0xc] sm:$0xf]
          %v2130 = vunpack.c.l.b16 %v2122
          %v2131 = vunpack.c.l.b16 %v2123
          %v2132 = vunpack.c.l.b16 %v2124
          %v2133 = vunpack.c.l.b16 %v2125
          %v2134 = vpack.c.b16 %v2131, %v2130
          %v2135 = vpack.c.b16 %v2133, %v2132
          %v2139 = vsel %vm1204, %v2106, 0
          %v2142 = vsel %vm1204, %v2107, 0
          %v2145 = vsel %vm1204, %v2108, 0
          %v2148 = vsel %vm1204, %v2109, 0
          %v2151 = vsel %vm1204, %v2110, 0
          %v2154 = vsel %vm1204, %v2111, 0
          %v2157 = vsel %vm1204, %v2112, 0
          %v2160 = vsel %vm1204, %v2113, 0
          %v2163 = vsel %vm1204, %v2114, 0
          %v2166 = vsel %vm1204, %v2115, 0
          %v2169 = vsel %vm1204, %v2116, 0
          %v2172 = vsel %vm1204, %v2117, 0
          %v2175 = vsel %vm1204, %v2118, 0
          %v2178 = vsel %vm1204, %v2119, 0
          %v2181 = vsel %vm1204, %v2120, 0
          %v2184 = vsel %vm1204, %v2121, 0
          %2186 = vmatprep.subr.bf16.mxu0 0
          %2187 = vmatpush1.bf16.msra.mxu0 %v2134
          %2188 = vmatprep.subr.bf16.mxu0 0
          %2189 = vmatpush1.bf16.msra.mxu0 %v2135
          %2190 = vmatprep.subr.bf16.mxu0 0
          %2191 = vmatpush1.bf16.msra.mxu0 0
          %2192 = vmatprep.subr.bf16.mxu0 0
          %2193 = vmatpush1.bf16.msra.mxu0 0
          %2194 = vmatprep.subr.bf16.mxu0 0
          %2195 = vmatpush1.bf16.msra.mxu0 0
          %2196 = vmatprep.subr.bf16.mxu0 0
          %2197 = vmatpush1.bf16.msra.mxu0 0
          %2198 = vmatprep.subr.bf16.mxu0 0
          %2199 = vmatpush1.bf16.msra.mxu0 0
          %2200 = vmatprep.subr.bf16.mxu0 0
          %2201 = vmatpush1.bf16.msra.mxu0 0
          %2202 = vmatprep.subr.bf16.mxu0 0
          %2203 = vmatpush1.bf16.msra.mxu0 0
          %2204 = vmatprep.subr.bf16.mxu0 0
          %2205 = vmatpush1.bf16.msra.mxu0 0
          %2206 = vmatprep.subr.bf16.mxu0 0
          %2207 = vmatpush1.bf16.msra.mxu0 0
          %2208 = vmatprep.subr.bf16.mxu0 0
          %2209 = vmatpush1.bf16.msra.mxu0 0
          %2210 = vmatprep.subr.bf16.mxu0 0
          %2211 = vmatpush1.bf16.msra.mxu0 0
          %2212 = vmatprep.subr.bf16.mxu0 0
          %2213 = vmatpush1.bf16.msra.mxu0 0
          %2214 = vmatprep.subr.bf16.mxu0 0
          %2215 = vmatpush1.bf16.msra.mxu0 0
          %2216 = vmatprep.subr.bf16.mxu0 0
          %2217 = vmatpush1.bf16.msra.mxu0 0
          %2218 = vmatprep.mubr.bf16.mxu0 0
          %2219 = vmatmul.mubr.bf16.gmra.mrb[0].mxu0 %v2139
          %v2220 = vpop.f32.mrb[0].mxu0
          %v2221 = vadd.f32 0.0, %v2220
          %v2222 = vpop.f32.mrb[0].mxu0
          %v2223 = vpop.f32.mrb[0].mxu0
          %v2224 = vadd.f32 0.0, %v2223
          %v2225 = vpop.f32.mrb[0].mxu0
          %2226 = vmatprep.mubr.bf16.mxu0 0
          %2227 = vmatmul.mubr.bf16.gmra.mrb[0].mxu0 %v2142
          %v2228 = vpop.f32.mrb[0].mxu0
          %v2229 = vadd.f32 0.0, %v2228
          %v2230 = vpop.f32.mrb[0].mxu0
          %v2231 = vpop.f32.mrb[0].mxu0
          %v2232 = vadd.f32 0.0, %v2231
          %v2233 = vpop.f32.mrb[0].mxu0
          %2234 = vmatprep.mubr.bf16.mxu0 0
          %2235 = vmatmul.mubr.bf16.gmra.mrb[0].mxu0 %v2145
          %v2236 = vpop.f32.mrb[0].mxu0
          %v2237 = vadd.f32 0.0, %v2236
          %v2238 = vpop.f32.mrb[0].mxu0
          %v2239 = vpop.f32.mrb[0].mxu0
          %v2240 = vadd.f32 0.0, %v2239
          %v2241 = vpop.f32.mrb[0].mxu0
          %2242 = vmatprep.mubr.bf16.mxu0 0
          %2243 = vmatmul.mubr.bf16.gmra.mrb[0].mxu0 %v2148
          %v2244 = vpop.f32.mrb[0].mxu0
          %v2245 = vadd.f32 0.0, %v2244
          %v2246 = vpop.f32.mrb[0].mxu0
          %v2247 = vpop.f32.mrb[0].mxu0
          %v2248 = vadd.f32 0.0, %v2247
          %v2249 = vpop.f32.mrb[0].mxu0
          %2250 = vmatprep.mubr.bf16.mxu0 0
          %2251 = vmatmul.mubr.bf16.gmra.mrb[0].mxu0 %v2151
          %v2252 = vpop.f32.mrb[0].mxu0
          %v2253 = vadd.f32 0.0, %v2252
          %v2254 = vpop.f32.mrb[0].mxu0
          %v2255 = vpop.f32.mrb[0].mxu0
          %v2256 = vadd.f32 0.0, %v2255
          %v2257 = vpop.f32.mrb[0].mxu0
          %2258 = vmatprep.mubr.bf16.mxu0 0
          %2259 = vmatmul.mubr.bf16.gmra.mrb[0].mxu0 %v2154
          %v2260 = vpop.f32.mrb[0].mxu0
          %v2261 = vadd.f32 0.0, %v2260
          %v2262 = vpop.f32.mrb[0].mxu0
          %v2263 = vpop.f32.mrb[0].mxu0
          %v2264 = vadd.f32 0.0, %v2263
          %v2265 = vpop.f32.mrb[0].mxu0
          %2266 = vmatprep.mubr.bf16.mxu0 0
          %2267 = vmatmul.mubr.bf16.gmra.mrb[0].mxu0 %v2157
          %v2268 = vpop.f32.mrb[0].mxu0
          %v2269 = vadd.f32 0.0, %v2268
          %v2270 = vpop.f32.mrb[0].mxu0
          %v2271 = vpop.f32.mrb[0].mxu0
          %v2272 = vadd.f32 0.0, %v2271
          %v2273 = vpop.f32.mrb[0].mxu0
          %2274 = vmatprep.mubr.bf16.mxu0 0
          %2275 = vmatmul.mubr.bf16.gmra.mrb[0].mxu0 %v2160
          %v2276 = vpop.f32.mrb[0].mxu0
          %v2277 = vadd.f32 0.0, %v2276
          %v2278 = vpop.f32.mrb[0].mxu0
          %v2279 = vpop.f32.mrb[0].mxu0
          %v2280 = vadd.f32 0.0, %v2279
          %v2281 = vpop.f32.mrb[0].mxu0
          %2282 = vmatprep.mubr.bf16.mxu0 0
          %2283 = vmatmul.mubr.bf16.gmra.mrb[0].mxu0 %v2163
          %v2284 = vpop.f32.mrb[0].mxu0
          %v2285 = vadd.f32 0.0, %v2284
          %v2286 = vpop.f32.mrb[0].mxu0
          %v2287 = vpop.f32.mrb[0].mxu0
          %v2288 = vadd.f32 0.0, %v2287
          %v2289 = vpop.f32.mrb[0].mxu0
          %2290 = vmatprep.mubr.bf16.mxu0 0
          %2291 = vmatmul.mubr.bf16.gmra.mrb[0].mxu0 %v2166
          %v2292 = vpop.f32.mrb[0].mxu0
          %v2293 = vadd.f32 0.0, %v2292
          %v2294 = vpop.f32.mrb[0].mxu0
          %v2295 = vpop.f32.mrb[0].mxu0
          %v2296 = vadd.f32 0.0, %v2295
          %v2297 = vpop.f32.mrb[0].mxu0
          %2298 = vmatprep.mubr.bf16.mxu0 0
          %2299 = vmatmul.mubr.bf16.gmra.mrb[0].mxu0 %v2169
          %v2300 = vpop.f32.mrb[0].mxu0
          %v2301 = vadd.f32 0.0, %v2300
          %v2302 = vpop.f32.mrb[0].mxu0
          %v2303 = vpop.f32.mrb[0].mxu0
          %v2304 = vadd.f32 0.0, %v2303
          %v2305 = vpop.f32.mrb[0].mxu0
          %2306 = vmatprep.mubr.bf16.mxu0 0
          %2307 = vmatmul.mubr.bf16.gmra.mrb[0].mxu0 %v2172
          %v2308 = vpop.f32.mrb[0].mxu0
          %v2309 = vadd.f32 0.0, %v2308
          %v2310 = vpop.f32.mrb[0].mxu0
          %v2311 = vpop.f32.mrb[0].mxu0
          %v2312 = vadd.f32 0.0, %v2311
          %v2313 = vpop.f32.mrb[0].mxu0
          %2314 = vmatprep.mubr.bf16.mxu0 0
          %2315 = vmatmul.mubr.bf16.gmra.mrb[0].mxu0 %v2175
          %v2316 = vpop.f32.mrb[0].mxu0
          %v2317 = vadd.f32 0.0, %v2316
          %v2318 = vpop.f32.mrb[0].mxu0
          %v2319 = vpop.f32.mrb[0].mxu0
          %v2320 = vadd.f32 0.0, %v2319
          %v2321 = vpop.f32.mrb[0].mxu0
          %2322 = vmatprep.mubr.bf16.mxu0 0
          %2323 = vmatmul.mubr.bf16.gmra.mrb[0].mxu0 %v2178
          %v2324 = vpop.f32.mrb[0].mxu0
          %v2325 = vadd.f32 0.0, %v2324
          %v2326 = vpop.f32.mrb[0].mxu0
          %v2327 = vpop.f32.mrb[0].mxu0
          %v2328 = vadd.f32 0.0, %v2327
          %v2329 = vpop.f32.mrb[0].mxu0
          %2330 = vmatprep.mubr.bf16.mxu0 0
          %2331 = vmatmul.mubr.bf16.gmra.mrb[0].mxu0 %v2181
          %v2332 = vpop.f32.mrb[0].mxu0
          %v2333 = vadd.f32 0.0, %v2332
          %v2334 = vpop.f32.mrb[0].mxu0
          %v2335 = vpop.f32.mrb[0].mxu0
          %v2336 = vadd.f32 0.0, %v2335
          %v2337 = vpop.f32.mrb[0].mxu0
          %2338 = vmatprep.mubr.bf16.mxu0 0
          %2339 = vmatmul.mubr.bf16.gmra.mrb[0].mxu0 %v2184
          %v2340 = vpop.f32.mrb[0].mxu0
          %v2341 = vadd.f32 0.0, %v2340
          %v2342 = vpop.f32.mrb[0].mxu0
          %v2343 = vpop.f32.mrb[0].mxu0
          %v2344 = vadd.f32 0.0, %v2343
          %v2345 = vpop.f32.mrb[0].mxu0
          %2346 = vdwg.mxu0
          %v2347 = vmax.f32 %v2221, 0.0
          %v2348 = vmax.f32 %v2224, 0.0
          %v2349 = vmax.f32 %v2229, 0.0
          %v2350 = vmax.f32 %v2232, 0.0
          %v2351 = vmax.f32 %v2237, 0.0
          %v2352 = vmax.f32 %v2240, 0.0
          %v2353 = vmax.f32 %v2245, 0.0
          %v2354 = vmax.f32 %v2248, 0.0
          %v2355 = vmax.f32 %v2253, 0.0
          %v2356 = vmax.f32 %v2256, 0.0
          %v2357 = vmax.f32 %v2261, 0.0
          %v2358 = vmax.f32 %v2264, 0.0
          %v2359 = vmax.f32 %v2269, 0.0
          %v2360 = vmax.f32 %v2272, 0.0
          %v2361 = vmax.f32 %v2277, 0.0
          %v2362 = vmax.f32 %v2280, 0.0
          %v2363 = vmax.f32 %v2285, 0.0
          %v2364 = vmax.f32 %v2288, 0.0
          %v2365 = vmax.f32 %v2293, 0.0
          %v2366 = vmax.f32 %v2296, 0.0
          %v2367 = vmax.f32 %v2301, 0.0
          %v2368 = vmax.f32 %v2304, 0.0
          %v2369 = vmax.f32 %v2309, 0.0
          %v2370 = vmax.f32 %v2312, 0.0
          %v2371 = vmax.f32 %v2317, 0.0
          %v2372 = vmax.f32 %v2320, 0.0
          %v2373 = vmax.f32 %v2325, 0.0
          %v2374 = vmax.f32 %v2328, 0.0
          %v2375 = vmax.f32 %v2333, 0.0
          %v2376 = vmax.f32 %v2336, 0.0
          %v2377 = vmax.f32 %v2341, 0.0
          %v2378 = vmax.f32 %v2344, 0.0
          %v2379 = vld [vmem:[%s7] sm:$0x7]
          %v2380 = vlaneseq
          %v2381 = vshrl.u32 %v2380, 7
          %v2382 = vsub.s32 0, %v2381
          %v2383 = vrot.slane %v2379, %v2382
          %v2384 = vmul.f32 %v1801, %v2383
          %v2385 = vmul.f32 %v1802, %v2383
          %v2386 = vmul.f32 %v1803, %v2383
          %v2387 = vmul.f32 %v1804, %v2383
          %v2388 = vmul.f32 %v1805, %v2383
          %v2389 = vmul.f32 %v1806, %v2383
          %v2390 = vmul.f32 %v1807, %v2383
          %v2391 = vmul.f32 %v1808, %v2383
          %v2392 = vmul.f32 %v1809, %v2383
          %v2393 = vmul.f32 %v1810, %v2383
          %v2394 = vmul.f32 %v1811, %v2383
          %v2395 = vmul.f32 %v1812, %v2383
          %v2396 = vmul.f32 %v1813, %v2383
          %v2397 = vmul.f32 %v1814, %v2383
          %v2398 = vmul.f32 %v1815, %v2383
          %v2399 = vmul.f32 %v1816, %v2383
          %v2400 = vmul.f32 %v1817, %v2383
          %v2401 = vmul.f32 %v1818, %v2383
          %v2402 = vmul.f32 %v1819, %v2383
          %v2403 = vmul.f32 %v1820, %v2383
          %v2404 = vmul.f32 %v1821, %v2383
          %v2405 = vmul.f32 %v1822, %v2383
          %v2406 = vmul.f32 %v1823, %v2383
          %v2407 = vmul.f32 %v1824, %v2383
          %v2408 = vmul.f32 %v1825, %v2383
          %v2409 = vmul.f32 %v1826, %v2383
          %v2410 = vmul.f32 %v1827, %v2383
          %v2411 = vmul.f32 %v1828, %v2383
          %v2412 = vmul.f32 %v1829, %v2383
          %v2413 = vmul.f32 %v1830, %v2383
          %v2414 = vmul.f32 %v1831, %v2383
          %v2415 = vmul.f32 %v1832, %v2383
          %2416 = vadd.xlane.f32.xlu0 %v2384
          %v2417 = vpop.xlane.xlu0 %2416
          %2418 = vadd.xlane.f32.xlu0 %v2385
          %v2419 = vpop.xlane.xlu0 %2418
          %2420 = vadd.xlane.f32.xlu0 %v2386
          %v2421 = vpop.xlane.xlu0 %2420
          %2422 = vadd.xlane.f32.xlu0 %v2387
          %v2423 = vpop.xlane.xlu0 %2422
          %2424 = vadd.xlane.f32.xlu0 %v2388
          %v2425 = vpop.xlane.xlu0 %2424
          %2426 = vadd.xlane.f32.xlu0 %v2389
          %v2427 = vpop.xlane.xlu0 %2426
          %2428 = vadd.xlane.f32.xlu0 %v2390
          %v2429 = vpop.xlane.xlu0 %2428
          %2430 = vadd.xlane.f32.xlu0 %v2391
          %v2431 = vpop.xlane.xlu0 %2430
          %2432 = vadd.xlane.f32.xlu0 %v2392
          %v2433 = vpop.xlane.xlu0 %2432
          %2434 = vadd.xlane.f32.xlu0 %v2393
          %v2435 = vpop.xlane.xlu0 %2434
          %2436 = vadd.xlane.f32.xlu0 %v2394
          %v2437 = vpop.xlane.xlu0 %2436
          %2438 = vadd.xlane.f32.xlu0 %v2395
          %v2439 = vpop.xlane.xlu0 %2438
          %2440 = vadd.xlane.f32.xlu0 %v2396
          %v2441 = vpop.xlane.xlu0 %2440
          %2442 = vadd.xlane.f32.xlu0 %v2397
          %v2443 = vpop.xlane.xlu0 %2442
          %2444 = vadd.xlane.f32.xlu0 %v2398
          %v2445 = vpop.xlane.xlu0 %2444
          %2446 = vadd.xlane.f32.xlu0 %v2399
          %v2447 = vpop.xlane.xlu0 %2446
          %2448 = vadd.xlane.f32.xlu0 %v2400
          %v2449 = vpop.xlane.xlu0 %2448
          %2450 = vadd.xlane.f32.xlu0 %v2401
          %v2451 = vpop.xlane.xlu0 %2450
          %2452 = vadd.xlane.f32.xlu0 %v2402
          %v2453 = vpop.xlane.xlu0 %2452
          %2454 = vadd.xlane.f32.xlu0 %v2403
          %v2455 = vpop.xlane.xlu0 %2454
          %2456 = vadd.xlane.f32.xlu0 %v2404
          %v2457 = vpop.xlane.xlu0 %2456
          %2458 = vadd.xlane.f32.xlu0 %v2405
          %v2459 = vpop.xlane.xlu0 %2458
          %2460 = vadd.xlane.f32.xlu0 %v2406
          %v2461 = vpop.xlane.xlu0 %2460
          %2462 = vadd.xlane.f32.xlu0 %v2407
          %v2463 = vpop.xlane.xlu0 %2462
          %2464 = vadd.xlane.f32.xlu0 %v2408
          %v2465 = vpop.xlane.xlu0 %2464
          %2466 = vadd.xlane.f32.xlu0 %v2409
          %v2467 = vpop.xlane.xlu0 %2466
          %2468 = vadd.xlane.f32.xlu0 %v2410
          %v2469 = vpop.xlane.xlu0 %2468
          %2470 = vadd.xlane.f32.xlu0 %v2411
          %v2471 = vpop.xlane.xlu0 %2470
          %2472 = vadd.xlane.f32.xlu0 %v2412
          %v2473 = vpop.xlane.xlu0 %2472
          %2474 = vadd.xlane.f32.xlu0 %v2413
          %v2475 = vpop.xlane.xlu0 %2474
          %2476 = vadd.xlane.f32.xlu0 %v2414
          %v2477 = vpop.xlane.xlu0 %2476
          %2478 = vadd.xlane.f32.xlu0 %v2415
          %v2479 = vpop.xlane.xlu0 %2478
          %v2480 = vxor.u32 %v2417, 2147483648
          %v2481 = vxor.u32 %v2419, 2147483648
          %v2482 = vxor.u32 %v2421, 2147483648
          %v2483 = vxor.u32 %v2423, 2147483648
          %v2484 = vxor.u32 %v2425, 2147483648
          %v2485 = vxor.u32 %v2427, 2147483648
          %v2486 = vxor.u32 %v2429, 2147483648
          %v2487 = vxor.u32 %v2431, 2147483648
          %v2488 = vxor.u32 %v2433, 2147483648
          %v2489 = vxor.u32 %v2435, 2147483648
          %v2490 = vxor.u32 %v2437, 2147483648
          %v2491 = vxor.u32 %v2439, 2147483648
          %v2492 = vxor.u32 %v2441, 2147483648
          %v2493 = vxor.u32 %v2443, 2147483648
          %v2494 = vxor.u32 %v2445, 2147483648
          %v2495 = vxor.u32 %v2447, 2147483648
          %v2496 = vxor.u32 %v2449, 2147483648
          %v2497 = vxor.u32 %v2451, 2147483648
          %v2498 = vxor.u32 %v2453, 2147483648
          %v2499 = vxor.u32 %v2455, 2147483648
          %v2500 = vxor.u32 %v2457, 2147483648
          %v2501 = vxor.u32 %v2459, 2147483648
          %v2502 = vxor.u32 %v2461, 2147483648
          %v2503 = vxor.u32 %v2463, 2147483648
          %v2504 = vxor.u32 %v2465, 2147483648
          %v2505 = vxor.u32 %v2467, 2147483648
          %v2506 = vxor.u32 %v2469, 2147483648
          %v2507 = vxor.u32 %v2471, 2147483648
          %v2508 = vxor.u32 %v2473, 2147483648
          %v2509 = vxor.u32 %v2475, 2147483648
          %v2510 = vxor.u32 %v2477, 2147483648
          %v2511 = vxor.u32 %v2479, 2147483648
          %v2512 = vmul.f32 %v2480, 1.442695
          %v2513 = vpow.pop %v2512
          %v2514 = vmul.f32 %v2481, 1.442695
          %v2515 = vpow.pop %v2514
          %v2516 = vmul.f32 %v2482, 1.442695
          %v2517 = vpow.pop %v2516
          %v2518 = vmul.f32 %v2483, 1.442695
          %v2519 = vpow.pop %v2518
          %v2520 = vmul.f32 %v2484, 1.442695
          %v2521 = vpow.pop %v2520
          %v2522 = vmul.f32 %v2485, 1.442695
          %v2523 = vpow.pop %v2522
          %v2524 = vmul.f32 %v2486, 1.442695
          %v2525 = vpow.pop %v2524
          %v2526 = vmul.f32 %v2487, 1.442695
          %v2527 = vpow.pop %v2526
          %v2528 = vmul.f32 %v2488, 1.442695
          %v2529 = vpow.pop %v2528
          %v2530 = vmul.f32 %v2489, 1.442695
          %v2531 = vpow.pop %v2530
          %v2532 = vmul.f32 %v2490, 1.442695
          %v2533 = vpow.pop %v2532
          %v2534 = vmul.f32 %v2491, 1.442695
          %v2535 = vpow.pop %v2534
          %v2536 = vmul.f32 %v2492, 1.442695
          %v2537 = vpow.pop %v2536
          %v2538 = vmul.f32 %v2493, 1.442695
          %v2539 = vpow.pop %v2538
          %v2540 = vmul.f32 %v2494, 1.442695
          %v2541 = vpow.pop %v2540
          %v2542 = vmul.f32 %v2495, 1.442695
          %v2543 = vpow.pop %v2542
          %v2544 = vmul.f32 %v2496, 1.442695
          %v2545 = vpow.pop %v2544
          %v2546 = vmul.f32 %v2497, 1.442695
          %v2547 = vpow.pop %v2546
          %v2548 = vmul.f32 %v2498, 1.442695
          %v2549 = vpow.pop %v2548
          %v2550 = vmul.f32 %v2499, 1.442695
          %v2551 = vpow.pop %v2550
          %v2552 = vmul.f32 %v2500, 1.442695
          %v2553 = vpow.pop %v2552
          %v2554 = vmul.f32 %v2501, 1.442695
          %v2555 = vpow.pop %v2554
          %v2556 = vmul.f32 %v2502, 1.442695
          %v2557 = vpow.pop %v2556
          %v2558 = vmul.f32 %v2503, 1.442695
          %v2559 = vpow.pop %v2558
          %v2560 = vmul.f32 %v2504, 1.442695
          %v2561 = vpow.pop %v2560
          %v2562 = vmul.f32 %v2505, 1.442695
          %v2563 = vpow.pop %v2562
          %v2564 = vmul.f32 %v2506, 1.442695
          %v2565 = vpow.pop %v2564
          %v2566 = vmul.f32 %v2507, 1.442695
          %v2567 = vpow.pop %v2566
          %v2568 = vmul.f32 %v2508, 1.442695
          %v2569 = vpow.pop %v2568
          %v2570 = vmul.f32 %v2509, 1.442695
          %v2571 = vpow.pop %v2570
          %v2572 = vmul.f32 %v2510, 1.442695
          %v2573 = vpow.pop %v2572
          %v2574 = vmul.f32 %v2511, 1.442695
          %v2575 = vpow.pop %v2574
          %v2576 = vadd.f32 %v2513, 1.0
          %v2577 = vadd.f32 %v2515, 1.0
          %v2578 = vadd.f32 %v2517, 1.0
          %v2579 = vadd.f32 %v2519, 1.0
          %v2580 = vadd.f32 %v2521, 1.0
          %v2581 = vadd.f32 %v2523, 1.0
          %v2582 = vadd.f32 %v2525, 1.0
          %v2583 = vadd.f32 %v2527, 1.0
          %v2584 = vadd.f32 %v2529, 1.0
          %v2585 = vadd.f32 %v2531, 1.0
          %v2586 = vadd.f32 %v2533, 1.0
          %v2587 = vadd.f32 %v2535, 1.0
          %v2588 = vadd.f32 %v2537, 1.0
          %v2589 = vadd.f32 %v2539, 1.0
          %v2590 = vadd.f32 %v2541, 1.0
          %v2591 = vadd.f32 %v2543, 1.0
          %v2592 = vadd.f32 %v2545, 1.0
          %v2593 = vadd.f32 %v2547, 1.0
          %v2594 = vadd.f32 %v2549, 1.0
          %v2595 = vadd.f32 %v2551, 1.0
          %v2596 = vadd.f32 %v2553, 1.0
          %v2597 = vadd.f32 %v2555, 1.0
          %v2598 = vadd.f32 %v2557, 1.0
          %v2599 = vadd.f32 %v2559, 1.0
          %v2600 = vadd.f32 %v2561, 1.0
          %v2601 = vadd.f32 %v2563, 1.0
          %v2602 = vadd.f32 %v2565, 1.0
          %v2603 = vadd.f32 %v2567, 1.0
          %v2604 = vadd.f32 %v2569, 1.0
          %v2605 = vadd.f32 %v2571, 1.0
          %v2606 = vadd.f32 %v2573, 1.0
          %v2607 = vadd.f32 %v2575, 1.0
          %v2608 = vrcp.pop %v2576
          %v2609 = vmul.f32 1.0, %v2608
          %v2610 = vrcp.pop %v2577
          %v2611 = vmul.f32 1.0, %v2610
          %v2612 = vrcp.pop %v2578
          %v2613 = vmul.f32 1.0, %v2612
          %v2614 = vrcp.pop %v2579
          %v2615 = vmul.f32 1.0, %v2614
          %v2616 = vrcp.pop %v2580
          %v2617 = vmul.f32 1.0, %v2616
          %v2618 = vrcp.pop %v2581
          %v2619 = vmul.f32 1.0, %v2618
          %v2620 = vrcp.pop %v2582
          %v2621 = vmul.f32 1.0, %v2620
          %v2622 = vrcp.pop %v2583
          %v2623 = vmul.f32 1.0, %v2622
          %v2624 = vrcp.pop %v2584
          %v2625 = vmul.f32 1.0, %v2624
          %v2626 = vrcp.pop %v2585
          %v2627 = vmul.f32 1.0, %v2626
          %v2628 = vrcp.pop %v2586
          %v2629 = vmul.f32 1.0, %v2628
          %v2630 = vrcp.pop %v2587
          %v2631 = vmul.f32 1.0, %v2630
          %v2632 = vrcp.pop %v2588
          %v2633 = vmul.f32 1.0, %v2632
          %v2634 = vrcp.pop %v2589
          %v2635 = vmul.f32 1.0, %v2634
          %v2636 = vrcp.pop %v2590
          %v2637 = vmul.f32 1.0, %v2636
          %v2638 = vrcp.pop %v2591
          %v2639 = vmul.f32 1.0, %v2638
          %v2640 = vrcp.pop %v2592
          %v2641 = vmul.f32 1.0, %v2640
          %v2642 = vrcp.pop %v2593
          %v2643 = vmul.f32 1.0, %v2642
          %v2644 = vrcp.pop %v2594
          %v2645 = vmul.f32 1.0, %v2644
          %v2646 = vrcp.pop %v2595
          %v2647 = vmul.f32 1.0, %v2646
          %v2648 = vrcp.pop %v2596
          %v2649 = vmul.f32 1.0, %v2648
          %v2650 = vrcp.pop %v2597
          %v2651 = vmul.f32 1.0, %v2650
          %v2652 = vrcp.pop %v2598
          %v2653 = vmul.f32 1.0, %v2652
          %v2654 = vrcp.pop %v2599
          %v2655 = vmul.f32 1.0, %v2654
          %v2656 = vrcp.pop %v2600
          %v2657 = vmul.f32 1.0, %v2656
          %v2658 = vrcp.pop %v2601
          %v2659 = vmul.f32 1.0, %v2658
          %v2660 = vrcp.pop %v2602
          %v2661 = vmul.f32 1.0, %v2660
          %v2662 = vrcp.pop %v2603
          %v2663 = vmul.f32 1.0, %v2662
          %v2664 = vrcp.pop %v2604
          %v2665 = vmul.f32 1.0, %v2664
          %v2666 = vrcp.pop %v2605
          %v2667 = vmul.f32 1.0, %v2666
          %v2668 = vrcp.pop %v2606
          %v2669 = vmul.f32 1.0, %v2668
          %v2670 = vrcp.pop %v2607
          %v2671 = vmul.f32 1.0, %v2670
          %v2672 = vlaneseq
          %v2673 = vshrl.u32 %v2672, 7
          %v2674 = vsub.s32 1, %v2673
          %v2675 = vrot.slane %v2379, %v2674
          %v2676 = vmul.f32 %v2074, %v2675
          %v2677 = vmul.f32 %v2075, %v2675
          %v2678 = vmul.f32 %v2076, %v2675
          %v2679 = vmul.f32 %v2077, %v2675
          %v2680 = vmul.f32 %v2078, %v2675
          %v2681 = vmul.f32 %v2079, %v2675
          %v2682 = vmul.f32 %v2080, %v2675
          %v2683 = vmul.f32 %v2081, %v2675
          %v2684 = vmul.f32 %v2082, %v2675
          %v2685 = vmul.f32 %v2083, %v2675
          %v2686 = vmul.f32 %v2084, %v2675
          %v2687 = vmul.f32 %v2085, %v2675
          %v2688 = vmul.f32 %v2086, %v2675
          %v2689 = vmul.f32 %v2087, %v2675
          %v2690 = vmul.f32 %v2088, %v2675
          %v2691 = vmul.f32 %v2089, %v2675
          %v2692 = vmul.f32 %v2090, %v2675
          %v2693 = vmul.f32 %v2091, %v2675
          %v2694 = vmul.f32 %v2092, %v2675
          %v2695 = vmul.f32 %v2093, %v2675
          %v2696 = vmul.f32 %v2094, %v2675
          %v2697 = vmul.f32 %v2095, %v2675
          %v2698 = vmul.f32 %v2096, %v2675
          %v2699 = vmul.f32 %v2097, %v2675
          %v2700 = vmul.f32 %v2098, %v2675
          %v2701 = vmul.f32 %v2099, %v2675
          %v2702 = vmul.f32 %v2100, %v2675
          %v2703 = vmul.f32 %v2101, %v2675
          %v2704 = vmul.f32 %v2102, %v2675
          %v2705 = vmul.f32 %v2103, %v2675
          %v2706 = vmul.f32 %v2104, %v2675
          %v2707 = vmul.f32 %v2105, %v2675
          %2708 = vadd.xlane.f32.xlu0 %v2676
          %v2709 = vpop.xlane.xlu0 %2708
          %2710 = vadd.xlane.f32.xlu0 %v2677
          %v2711 = vpop.xlane.xlu0 %2710
          %2712 = vadd.xlane.f32.xlu0 %v2678
          %v2713 = vpop.xlane.xlu0 %2712
          %2714 = vadd.xlane.f32.xlu0 %v2679
          %v2715 = vpop.xlane.xlu0 %2714
          %2716 = vadd.xlane.f32.xlu0 %v2680
          %v2717 = vpop.xlane.xlu0 %2716
          %2718 = vadd.xlane.f32.xlu0 %v2681
          %v2719 = vpop.xlane.xlu0 %2718
          %2720 = vadd.xlane.f32.xlu0 %v2682
          %v2721 = vpop.xlane.xlu0 %2720
          %2722 = vadd.xlane.f32.xlu0 %v2683
          %v2723 = vpop.xlane.xlu0 %2722
          %2724 = vadd.xlane.f32.xlu0 %v2684
          %v2725 = vpop.xlane.xlu0 %2724
          %2726 = vadd.xlane.f32.xlu0 %v2685
          %v2727 = vpop.xlane.xlu0 %2726
          %2728 = vadd.xlane.f32.xlu0 %v2686
          %v2729 = vpop.xlane.xlu0 %2728
          %2730 = vadd.xlane.f32.xlu0 %v2687
          %v2731 = vpop.xlane.xlu0 %2730
          %2732 = vadd.xlane.f32.xlu0 %v2688
          %v2733 = vpop.xlane.xlu0 %2732
          %2734 = vadd.xlane.f32.xlu0 %v2689
          %v2735 = vpop.xlane.xlu0 %2734
          %2736 = vadd.xlane.f32.xlu0 %v2690
          %v2737 = vpop.xlane.xlu0 %2736
          %2738 = vadd.xlane.f32.xlu0 %v2691
          %v2739 = vpop.xlane.xlu0 %2738
          %2740 = vadd.xlane.f32.xlu0 %v2692
          %v2741 = vpop.xlane.xlu0 %2740
          %2742 = vadd.xlane.f32.xlu0 %v2693
          %v2743 = vpop.xlane.xlu0 %2742
          %2744 = vadd.xlane.f32.xlu0 %v2694
          %v2745 = vpop.xlane.xlu0 %2744
          %2746 = vadd.xlane.f32.xlu0 %v2695
          %v2747 = vpop.xlane.xlu0 %2746
          %2748 = vadd.xlane.f32.xlu0 %v2696
          %v2749 = vpop.xlane.xlu0 %2748
          %2750 = vadd.xlane.f32.xlu0 %v2697
          %v2751 = vpop.xlane.xlu0 %2750
          %2752 = vadd.xlane.f32.xlu0 %v2698
          %v2753 = vpop.xlane.xlu0 %2752
          %2754 = vadd.xlane.f32.xlu0 %v2699
          %v2755 = vpop.xlane.xlu0 %2754
          %2756 = vadd.xlane.f32.xlu0 %v2700
          %v2757 = vpop.xlane.xlu0 %2756
          %2758 = vadd.xlane.f32.xlu0 %v2701
          %v2759 = vpop.xlane.xlu0 %2758
          %2760 = vadd.xlane.f32.xlu0 %v2702
          %v2761 = vpop.xlane.xlu0 %2760
          %2762 = vadd.xlane.f32.xlu0 %v2703
          %v2763 = vpop.xlane.xlu0 %2762
          %2764 = vadd.xlane.f32.xlu0 %v2704
          %v2765 = vpop.xlane.xlu0 %2764
          %2766 = vadd.xlane.f32.xlu0 %v2705
          %v2767 = vpop.xlane.xlu0 %2766
          %2768 = vadd.xlane.f32.xlu0 %v2706
          %v2769 = vpop.xlane.xlu0 %2768
          %2770 = vadd.xlane.f32.xlu0 %v2707
          %v2771 = vpop.xlane.xlu0 %2770
          %v2772 = vxor.u32 %v2709, 2147483648
          %v2773 = vxor.u32 %v2711, 2147483648
          %v2774 = vxor.u32 %v2713, 2147483648
          %v2775 = vxor.u32 %v2715, 2147483648
          %v2776 = vxor.u32 %v2717, 2147483648
          %v2777 = vxor.u32 %v2719, 2147483648
          %v2778 = vxor.u32 %v2721, 2147483648
          %v2779 = vxor.u32 %v2723, 2147483648
          %v2780 = vxor.u32 %v2725, 2147483648
          %v2781 = vxor.u32 %v2727, 2147483648
          %v2782 = vxor.u32 %v2729, 2147483648
          %v2783 = vxor.u32 %v2731, 2147483648
          %v2784 = vxor.u32 %v2733, 2147483648
          %v2785 = vxor.u32 %v2735, 2147483648
          %v2786 = vxor.u32 %v2737, 2147483648
          %v2787 = vxor.u32 %v2739, 2147483648
          %v2788 = vxor.u32 %v2741, 2147483648
          %v2789 = vxor.u32 %v2743, 2147483648
          %v2790 = vxor.u32 %v2745, 2147483648
          %v2791 = vxor.u32 %v2747, 2147483648
          %v2792 = vxor.u32 %v2749, 2147483648
          %v2793 = vxor.u32 %v2751, 2147483648
          %v2794 = vxor.u32 %v2753, 2147483648
          %v2795 = vxor.u32 %v2755, 2147483648
          %v2796 = vxor.u32 %v2757, 2147483648
          %v2797 = vxor.u32 %v2759, 2147483648
          %v2798 = vxor.u32 %v2761, 2147483648
          %v2799 = vxor.u32 %v2763, 2147483648
          %v2800 = vxor.u32 %v2765, 2147483648
          %v2801 = vxor.u32 %v2767, 2147483648
          %v2802 = vxor.u32 %v2769, 2147483648
          %v2803 = vxor.u32 %v2771, 2147483648
          %v2804 = vmul.f32 %v2772, 1.442695
          %v2805 = vpow.pop %v2804
          %v2806 = vmul.f32 %v2773, 1.442695
          %v2807 = vpow.pop %v2806
          %v2808 = vmul.f32 %v2774, 1.442695
          %v2809 = vpow.pop %v2808
          %v2810 = vmul.f32 %v2775, 1.442695
          %v2811 = vpow.pop %v2810
          %v2812 = vmul.f32 %v2776, 1.442695
          %v2813 = vpow.pop %v2812
          %v2814 = vmul.f32 %v2777, 1.442695
          %v2815 = vpow.pop %v2814
          %v2816 = vmul.f32 %v2778, 1.442695
          %v2817 = vpow.pop %v2816
          %v2818 = vmul.f32 %v2779, 1.442695
          %v2819 = vpow.pop %v2818
          %v2820 = vmul.f32 %v2780, 1.442695
          %v2821 = vpow.pop %v2820
          %v2822 = vmul.f32 %v2781, 1.442695
          %v2823 = vpow.pop %v2822
          %v2824 = vmul.f32 %v2782, 1.442695
          %v2825 = vpow.pop %v2824
          %v2826 = vmul.f32 %v2783, 1.442695
          %v2827 = vpow.pop %v2826
          %v2828 = vmul.f32 %v2784, 1.442695
          %v2829 = vpow.pop %v2828
          %v2830 = vmul.f32 %v2785, 1.442695
          %v2831 = vpow.pop %v2830
          %v2832 = vmul.f32 %v2786, 1.442695
          %v2833 = vpow.pop %v2832
          %v2834 = vmul.f32 %v2787, 1.442695
          %v2835 = vpow.pop %v2834
          %v2836 = vmul.f32 %v2788, 1.442695
          %v2837 = vpow.pop %v2836
          %v2838 = vmul.f32 %v2789, 1.442695
          %v2839 = vpow.pop %v2838
          %v2840 = vmul.f32 %v2790, 1.442695
          %v2841 = vpow.pop %v2840
          %v2842 = vmul.f32 %v2791, 1.442695
          %v2843 = vpow.pop %v2842
          %v2844 = vmul.f32 %v2792, 1.442695
          %v2845 = vpow.pop %v2844
          %v2846 = vmul.f32 %v2793, 1.442695
          %v2847 = vpow.pop %v2846
          %v2848 = vmul.f32 %v2794, 1.442695
          %v2849 = vpow.pop %v2848
          %v2850 = vmul.f32 %v2795, 1.442695
          %v2851 = vpow.pop %v2850
          %v2852 = vmul.f32 %v2796, 1.442695
          %v2853 = vpow.pop %v2852
          %v2854 = vmul.f32 %v2797, 1.442695
          %v2855 = vpow.pop %v2854
          %v2856 = vmul.f32 %v2798, 1.442695
          %v2857 = vpow.pop %v2856
          %v2858 = vmul.f32 %v2799, 1.442695
          %v2859 = vpow.pop %v2858
          %v2860 = vmul.f32 %v2800, 1.442695
          %v2861 = vpow.pop %v2860
          %v2862 = vmul.f32 %v2801, 1.442695
          %v2863 = vpow.pop %v2862
          %v2864 = vmul.f32 %v2802, 1.442695
          %v2865 = vpow.pop %v2864
          %v2866 = vmul.f32 %v2803, 1.442695
          %v2867 = vpow.pop %v2866
          %v2868 = vadd.f32 %v2805, 1.0
          %v2869 = vadd.f32 %v2807, 1.0
          %v2870 = vadd.f32 %v2809, 1.0
          %v2871 = vadd.f32 %v2811, 1.0
          %v2872 = vadd.f32 %v2813, 1.0
          %v2873 = vadd.f32 %v2815, 1.0
          %v2874 = vadd.f32 %v2817, 1.0
          %v2875 = vadd.f32 %v2819, 1.0
          %v2876 = vadd.f32 %v2821, 1.0
          %v2877 = vadd.f32 %v2823, 1.0
          %v2878 = vadd.f32 %v2825, 1.0
          %v2879 = vadd.f32 %v2827, 1.0
          %v2880 = vadd.f32 %v2829, 1.0
          %v2881 = vadd.f32 %v2831, 1.0
          %v2882 = vadd.f32 %v2833, 1.0
          %v2883 = vadd.f32 %v2835, 1.0
          %v2884 = vadd.f32 %v2837, 1.0
          %v2885 = vadd.f32 %v2839, 1.0
          %v2886 = vadd.f32 %v2841, 1.0
          %v2887 = vadd.f32 %v2843, 1.0
          %v2888 = vadd.f32 %v2845, 1.0
          %v2889 = vadd.f32 %v2847, 1.0
          %v2890 = vadd.f32 %v2849, 1.0
          %v2891 = vadd.f32 %v2851, 1.0
          %v2892 = vadd.f32 %v2853, 1.0
          %v2893 = vadd.f32 %v2855, 1.0
          %v2894 = vadd.f32 %v2857, 1.0
          %v2895 = vadd.f32 %v2859, 1.0
          %v2896 = vadd.f32 %v2861, 1.0
          %v2897 = vadd.f32 %v2863, 1.0
          %v2898 = vadd.f32 %v2865, 1.0
          %v2899 = vadd.f32 %v2867, 1.0
          %v2900 = vrcp.pop %v2868
          %v2901 = vmul.f32 1.0, %v2900
          %v2902 = vrcp.pop %v2869
          %v2903 = vmul.f32 1.0, %v2902
          %v2904 = vrcp.pop %v2870
          %v2905 = vmul.f32 1.0, %v2904
          %v2906 = vrcp.pop %v2871
          %v2907 = vmul.f32 1.0, %v2906
          %v2908 = vrcp.pop %v2872
          %v2909 = vmul.f32 1.0, %v2908
          %v2910 = vrcp.pop %v2873
          %v2911 = vmul.f32 1.0, %v2910
          %v2912 = vrcp.pop %v2874
          %v2913 = vmul.f32 1.0, %v2912
          %v2914 = vrcp.pop %v2875
          %v2915 = vmul.f32 1.0, %v2914
          %v2916 = vrcp.pop %v2876
          %v2917 = vmul.f32 1.0, %v2916
          %v2918 = vrcp.pop %v2877
          %v2919 = vmul.f32 1.0, %v2918
          %v2920 = vrcp.pop %v2878
          %v2921 = vmul.f32 1.0, %v2920
          %v2922 = vrcp.pop %v2879
          %v2923 = vmul.f32 1.0, %v2922
          %v2924 = vrcp.pop %v2880
          %v2925 = vmul.f32 1.0, %v2924
          %v2926 = vrcp.pop %v2881
          %v2927 = vmul.f32 1.0, %v2926
          %v2928 = vrcp.pop %v2882
          %v2929 = vmul.f32 1.0, %v2928
          %v2930 = vrcp.pop %v2883
          %v2931 = vmul.f32 1.0, %v2930
          %v2932 = vrcp.pop %v2884
          %v2933 = vmul.f32 1.0, %v2932
          %v2934 = vrcp.pop %v2885
          %v2935 = vmul.f32 1.0, %v2934
          %v2936 = vrcp.pop %v2886
          %v2937 = vmul.f32 1.0, %v2936
          %v2938 = vrcp.pop %v2887
          %v2939 = vmul.f32 1.0, %v2938
          %v2940 = vrcp.pop %v2888
          %v2941 = vmul.f32 1.0, %v2940
          %v2942 = vrcp.pop %v2889
          %v2943 = vmul.f32 1.0, %v2942
          %v2944 = vrcp.pop %v2890
          %v2945 = vmul.f32 1.0, %v2944
          %v2946 = vrcp.pop %v2891
          %v2947 = vmul.f32 1.0, %v2946
          %v2948 = vrcp.pop %v2892
          %v2949 = vmul.f32 1.0, %v2948
          %v2950 = vrcp.pop %v2893
          %v2951 = vmul.f32 1.0, %v2950
          %v2952 = vrcp.pop %v2894
          %v2953 = vmul.f32 1.0, %v2952
          %v2954 = vrcp.pop %v2895
          %v2955 = vmul.f32 1.0, %v2954
          %v2956 = vrcp.pop %v2896
          %v2957 = vmul.f32 1.0, %v2956
          %v2958 = vrcp.pop %v2897
          %v2959 = vmul.f32 1.0, %v2958
          %v2960 = vrcp.pop %v2898
          %v2961 = vmul.f32 1.0, %v2960
          %v2962 = vrcp.pop %v2899
          %v2963 = vmul.f32 1.0, %v2962
          %v2964 = vlaneseq
          %v2965 = vshrl.u32 %v2964, 7
          %v2966 = vsub.s32 2, %v2965
          %v2967 = vrot.slane %v2379, %v2966
          %v2968 = vmul.f32 %v2347, %v2967
          %v2969 = vmul.f32 %v2348, %v2967
          %v2970 = vmul.f32 %v2349, %v2967
          %v2971 = vmul.f32 %v2350, %v2967
          %v2972 = vmul.f32 %v2351, %v2967
          %v2973 = vmul.f32 %v2352, %v2967
          %v2974 = vmul.f32 %v2353, %v2967
          %v2975 = vmul.f32 %v2354, %v2967
          %v2976 = vmul.f32 %v2355, %v2967
          %v2977 = vmul.f32 %v2356, %v2967
          %v2978 = vmul.f32 %v2357, %v2967
          %v2979 = vmul.f32 %v2358, %v2967
          %v2980 = vmul.f32 %v2359, %v2967
          %v2981 = vmul.f32 %v2360, %v2967
          %v2982 = vmul.f32 %v2361, %v2967
          %v2983 = vmul.f32 %v2362, %v2967
          %v2984 = vmul.f32 %v2363, %v2967
          %v2985 = vmul.f32 %v2364, %v2967
          %v2986 = vmul.f32 %v2365, %v2967
          %v2987 = vmul.f32 %v2366, %v2967
          %v2988 = vmul.f32 %v2367, %v2967
          %v2989 = vmul.f32 %v2368, %v2967
          %v2990 = vmul.f32 %v2369, %v2967
          %v2991 = vmul.f32 %v2370, %v2967
          %v2992 = vmul.f32 %v2371, %v2967
          %v2993 = vmul.f32 %v2372, %v2967
          %v2994 = vmul.f32 %v2373, %v2967
          %v2995 = vmul.f32 %v2374, %v2967
          %v2996 = vmul.f32 %v2375, %v2967
          %v2997 = vmul.f32 %v2376, %v2967
          %v2998 = vmul.f32 %v2377, %v2967
          %v2999 = vmul.f32 %v2378, %v2967
          %3000 = vadd.xlane.f32.xlu0 %v2968
          %v3001 = vpop.xlane.xlu0 %3000
          %3002 = vadd.xlane.f32.xlu0 %v2969
          %v3003 = vpop.xlane.xlu0 %3002
          %3004 = vadd.xlane.f32.xlu0 %v2970
          %v3005 = vpop.xlane.xlu0 %3004
          %3006 = vadd.xlane.f32.xlu0 %v2971
          %v3007 = vpop.xlane.xlu0 %3006
          %3008 = vadd.xlane.f32.xlu0 %v2972
          %v3009 = vpop.xlane.xlu0 %3008
          %3010 = vadd.xlane.f32.xlu0 %v2973
          %v3011 = vpop.xlane.xlu0 %3010
          %3012 = vadd.xlane.f32.xlu0 %v2974
          %v3013 = vpop.xlane.xlu0 %3012
          %3014 = vadd.xlane.f32.xlu0 %v2975
          %v3015 = vpop.xlane.xlu0 %3014
          %3016 = vadd.xlane.f32.xlu0 %v2976
          %v3017 = vpop.xlane.xlu0 %3016
          %3018 = vadd.xlane.f32.xlu0 %v2977
          %v3019 = vpop.xlane.xlu0 %3018
          %3020 = vadd.xlane.f32.xlu0 %v2978
          %v3021 = vpop.xlane.xlu0 %3020
          %3022 = vadd.xlane.f32.xlu0 %v2979
          %v3023 = vpop.xlane.xlu0 %3022
          %3024 = vadd.xlane.f32.xlu0 %v2980
          %v3025 = vpop.xlane.xlu0 %3024
          %3026 = vadd.xlane.f32.xlu0 %v2981
          %v3027 = vpop.xlane.xlu0 %3026
          %3028 = vadd.xlane.f32.xlu0 %v2982
          %v3029 = vpop.xlane.xlu0 %3028
          %3030 = vadd.xlane.f32.xlu0 %v2983
          %v3031 = vpop.xlane.xlu0 %3030
          %3032 = vadd.xlane.f32.xlu0 %v2984
          %v3033 = vpop.xlane.xlu0 %3032
          %3034 = vadd.xlane.f32.xlu0 %v2985
          %v3035 = vpop.xlane.xlu0 %3034
          %3036 = vadd.xlane.f32.xlu0 %v2986
          %v3037 = vpop.xlane.xlu0 %3036
          %3038 = vadd.xlane.f32.xlu0 %v2987
          %v3039 = vpop.xlane.xlu0 %3038
          %3040 = vadd.xlane.f32.xlu0 %v2988
          %v3041 = vpop.xlane.xlu0 %3040
          %3042 = vadd.xlane.f32.xlu0 %v2989
          %v3043 = vpop.xlane.xlu0 %3042
          %3044 = vadd.xlane.f32.xlu0 %v2990
          %v3045 = vpop.xlane.xlu0 %3044
          %3046 = vadd.xlane.f32.xlu0 %v2991
          %v3047 = vpop.xlane.xlu0 %3046
          %3048 = vadd.xlane.f32.xlu0 %v2992
          %v3049 = vpop.xlane.xlu0 %3048
          %3050 = vadd.xlane.f32.xlu0 %v2993
          %v3051 = vpop.xlane.xlu0 %3050
          %3052 = vadd.xlane.f32.xlu0 %v2994
          %v3053 = vpop.xlane.xlu0 %3052
          %3054 = vadd.xlane.f32.xlu0 %v2995
          %v3055 = vpop.xlane.xlu0 %3054
          %3056 = vadd.xlane.f32.xlu0 %v2996
          %v3057 = vpop.xlane.xlu0 %3056
          %3058 = vadd.xlane.f32.xlu0 %v2997
          %v3059 = vpop.xlane.xlu0 %3058
          %3060 = vadd.xlane.f32.xlu0 %v2998
          %v3061 = vpop.xlane.xlu0 %3060
          %3062 = vadd.xlane.f32.xlu0 %v2999
          %v3063 = vpop.xlane.xlu0 %3062
          %v3064 = vxor.u32 %v3001, 2147483648
          %v3065 = vxor.u32 %v3003, 2147483648
          %v3066 = vxor.u32 %v3005, 2147483648
          %v3067 = vxor.u32 %v3007, 2147483648
          %v3068 = vxor.u32 %v3009, 2147483648
          %v3069 = vxor.u32 %v3011, 2147483648
          %v3070 = vxor.u32 %v3013, 2147483648
          %v3071 = vxor.u32 %v3015, 2147483648
          %v3072 = vxor.u32 %v3017, 2147483648
          %v3073 = vxor.u32 %v3019, 2147483648
          %v3074 = vxor.u32 %v3021, 2147483648
          %v3075 = vxor.u32 %v3023, 2147483648
          %v3076 = vxor.u32 %v3025, 2147483648
          %v3077 = vxor.u32 %v3027, 2147483648
          %v3078 = vxor.u32 %v3029, 2147483648
          %v3079 = vxor.u32 %v3031, 2147483648
          %v3080 = vxor.u32 %v3033, 2147483648
          %v3081 = vxor.u32 %v3035, 2147483648
          %v3082 = vxor.u32 %v3037, 2147483648
          %v3083 = vxor.u32 %v3039, 2147483648
          %v3084 = vxor.u32 %v3041, 2147483648
          %v3085 = vxor.u32 %v3043, 2147483648
          %v3086 = vxor.u32 %v3045, 2147483648
          %v3087 = vxor.u32 %v3047, 2147483648
          %v3088 = vxor.u32 %v3049, 2147483648
          %v3089 = vxor.u32 %v3051, 2147483648
          %v3090 = vxor.u32 %v3053, 2147483648
          %v3091 = vxor.u32 %v3055, 2147483648
          %v3092 = vxor.u32 %v3057, 2147483648
          %v3093 = vxor.u32 %v3059, 2147483648
          %v3094 = vxor.u32 %v3061, 2147483648
          %v3095 = vxor.u32 %v3063, 2147483648
          %v3096 = vmul.f32 %v3064, 1.442695
          %v3097 = vpow.pop %v3096
          %v3098 = vmul.f32 %v3065, 1.442695
          %v3099 = vpow.pop %v3098
          %v3100 = vmul.f32 %v3066, 1.442695
          %v3101 = vpow.pop %v3100
          %v3102 = vmul.f32 %v3067, 1.442695
          %v3103 = vpow.pop %v3102
          %v3104 = vmul.f32 %v3068, 1.442695
          %v3105 = vpow.pop %v3104
          %v3106 = vmul.f32 %v3069, 1.442695
          %v3107 = vpow.pop %v3106
          %v3108 = vmul.f32 %v3070, 1.442695
          %v3109 = vpow.pop %v3108
          %v3110 = vmul.f32 %v3071, 1.442695
          %v3111 = vpow.pop %v3110
          %v3112 = vmul.f32 %v3072, 1.442695
          %v3113 = vpow.pop %v3112
          %v3114 = vmul.f32 %v3073, 1.442695
          %v3115 = vpow.pop %v3114
          %v3116 = vmul.f32 %v3074, 1.442695
          %v3117 = vpow.pop %v3116
          %v3118 = vmul.f32 %v3075, 1.442695
          %v3119 = vpow.pop %v3118
          %v3120 = vmul.f32 %v3076, 1.442695
          %v3121 = vpow.pop %v3120
          %v3122 = vmul.f32 %v3077, 1.442695
          %v3123 = vpow.pop %v3122
          %v3124 = vmul.f32 %v3078, 1.442695
          %v3125 = vpow.pop %v3124
          %v3126 = vmul.f32 %v3079, 1.442695
          %v3127 = vpow.pop %v3126
          %v3128 = vmul.f32 %v3080, 1.442695
          %v3129 = vpow.pop %v3128
          %v3130 = vmul.f32 %v3081, 1.442695
          %v3131 = vpow.pop %v3130
          %v3132 = vmul.f32 %v3082, 1.442695
          %v3133 = vpow.pop %v3132
          %v3134 = vmul.f32 %v3083, 1.442695
          %v3135 = vpow.pop %v3134
          %v3136 = vmul.f32 %v3084, 1.442695
          %v3137 = vpow.pop %v3136
          %v3138 = vmul.f32 %v3085, 1.442695
          %v3139 = vpow.pop %v3138
          %v3140 = vmul.f32 %v3086, 1.442695
          %v3141 = vpow.pop %v3140
          %v3142 = vmul.f32 %v3087, 1.442695
          %v3143 = vpow.pop %v3142
          %v3144 = vmul.f32 %v3088, 1.442695
          %v3145 = vpow.pop %v3144
          %v3146 = vmul.f32 %v3089, 1.442695
          %v3147 = vpow.pop %v3146
          %v3148 = vmul.f32 %v3090, 1.442695
          %v3149 = vpow.pop %v3148
          %v3150 = vmul.f32 %v3091, 1.442695
          %v3151 = vpow.pop %v3150
          %v3152 = vmul.f32 %v3092, 1.442695
          %v3153 = vpow.pop %v3152
          %v3154 = vmul.f32 %v3093, 1.442695
          %v3155 = vpow.pop %v3154
          %v3156 = vmul.f32 %v3094, 1.442695
          %v3157 = vpow.pop %v3156
          %v3158 = vmul.f32 %v3095, 1.442695
          %v3159 = vpow.pop %v3158
          %v3160 = vadd.f32 %v3097, 1.0
          %v3161 = vadd.f32 %v3099, 1.0
          %v3162 = vadd.f32 %v3101, 1.0
          %v3163 = vadd.f32 %v3103, 1.0
          %v3164 = vadd.f32 %v3105, 1.0
          %v3165 = vadd.f32 %v3107, 1.0
          %v3166 = vadd.f32 %v3109, 1.0
          %v3167 = vadd.f32 %v3111, 1.0
          %v3168 = vadd.f32 %v3113, 1.0
          %v3169 = vadd.f32 %v3115, 1.0
          %v3170 = vadd.f32 %v3117, 1.0
          %v3171 = vadd.f32 %v3119, 1.0
          %v3172 = vadd.f32 %v3121, 1.0
          %v3173 = vadd.f32 %v3123, 1.0
          %v3174 = vadd.f32 %v3125, 1.0
          %v3175 = vadd.f32 %v3127, 1.0
          %v3176 = vadd.f32 %v3129, 1.0
          %v3177 = vadd.f32 %v3131, 1.0
          %v3178 = vadd.f32 %v3133, 1.0
          %v3179 = vadd.f32 %v3135, 1.0
          %v3180 = vadd.f32 %v3137, 1.0
          %v3181 = vadd.f32 %v3139, 1.0
          %v3182 = vadd.f32 %v3141, 1.0
          %v3183 = vadd.f32 %v3143, 1.0
          %v3184 = vadd.f32 %v3145, 1.0
          %v3185 = vadd.f32 %v3147, 1.0
          %v3186 = vadd.f32 %v3149, 1.0
          %v3187 = vadd.f32 %v3151, 1.0
          %v3188 = vadd.f32 %v3153, 1.0
          %v3189 = vadd.f32 %v3155, 1.0
          %v3190 = vadd.f32 %v3157, 1.0
          %v3191 = vadd.f32 %v3159, 1.0
          %v3192 = vrcp.pop %v3160
          %v3193 = vmul.f32 1.0, %v3192
          %v3194 = vrcp.pop %v3161
          %v3195 = vmul.f32 1.0, %v3194
          %v3196 = vrcp.pop %v3162
          %v3197 = vmul.f32 1.0, %v3196
          %v3198 = vrcp.pop %v3163
          %v3199 = vmul.f32 1.0, %v3198
          %v3200 = vrcp.pop %v3164
          %v3201 = vmul.f32 1.0, %v3200
          %v3202 = vrcp.pop %v3165
          %v3203 = vmul.f32 1.0, %v3202
          %v3204 = vrcp.pop %v3166
          %v3205 = vmul.f32 1.0, %v3204
          %v3206 = vrcp.pop %v3167
          %v3207 = vmul.f32 1.0, %v3206
          %v3208 = vrcp.pop %v3168
          %v3209 = vmul.f32 1.0, %v3208
          %v3210 = vrcp.pop %v3169
          %v3211 = vmul.f32 1.0, %v3210
          %v3212 = vrcp.pop %v3170
          %v3213 = vmul.f32 1.0, %v3212
          %v3214 = vrcp.pop %v3171
          %v3215 = vmul.f32 1.0, %v3214
          %v3216 = vrcp.pop %v3172
          %v3217 = vmul.f32 1.0, %v3216
          %v3218 = vrcp.pop %v3173
          %v3219 = vmul.f32 1.0, %v3218
          %v3220 = vrcp.pop %v3174
          %v3221 = vmul.f32 1.0, %v3220
          %v3222 = vrcp.pop %v3175
          %v3223 = vmul.f32 1.0, %v3222
          %v3224 = vrcp.pop %v3176
          %v3225 = vmul.f32 1.0, %v3224
          %v3226 = vrcp.pop %v3177
          %v3227 = vmul.f32 1.0, %v3226
          %v3228 = vrcp.pop %v3178
          %v3229 = vmul.f32 1.0, %v3228
          %v3230 = vrcp.pop %v3179
          %v3231 = vmul.f32 1.0, %v3230
          %v3232 = vrcp.pop %v3180
          %v3233 = vmul.f32 1.0, %v3232
          %v3234 = vrcp.pop %v3181
          %v3235 = vmul.f32 1.0, %v3234
          %v3236 = vrcp.pop %v3182
          %v3237 = vmul.f32 1.0, %v3236
          %v3238 = vrcp.pop %v3183
          %v3239 = vmul.f32 1.0, %v3238
          %v3240 = vrcp.pop %v3184
          %v3241 = vmul.f32 1.0, %v3240
          %v3242 = vrcp.pop %v3185
          %v3243 = vmul.f32 1.0, %v3242
          %v3244 = vrcp.pop %v3186
          %v3245 = vmul.f32 1.0, %v3244
          %v3246 = vrcp.pop %v3187
          %v3247 = vmul.f32 1.0, %v3246
          %v3248 = vrcp.pop %v3188
          %v3249 = vmul.f32 1.0, %v3248
          %v3250 = vrcp.pop %v3189
          %v3251 = vmul.f32 1.0, %v3250
          %v3252 = vrcp.pop %v3190
          %v3253 = vmul.f32 1.0, %v3252
          %v3254 = vrcp.pop %v3191
          %v3255 = vmul.f32 1.0, %v3254
          %s3256 = sld [smem:[#allocation3]]
          %v3257 = vstv %s3256
          %v3258 = vmul.f32 %v2609, %v3257
          %v3259 = vmul.f32 %v2611, %v3257
          %v3260 = vmul.f32 %v2613, %v3257
          %v3261 = vmul.f32 %v2615, %v3257
          %v3262 = vmul.f32 %v2617, %v3257
          %v3263 = vmul.f32 %v2619, %v3257
          %v3264 = vmul.f32 %v2621, %v3257
          %v3265 = vmul.f32 %v2623, %v3257
          %v3266 = vmul.f32 %v2625, %v3257
          %v3267 = vmul.f32 %v2627, %v3257
          %v3268 = vmul.f32 %v2629, %v3257
          %v3269 = vmul.f32 %v2631, %v3257
          %v3270 = vmul.f32 %v2633, %v3257
          %v3271 = vmul.f32 %v2635, %v3257
          %v3272 = vmul.f32 %v2637, %v3257
          %v3273 = vmul.f32 %v2639, %v3257
          %v3274 = vmul.f32 %v2641, %v3257
          %v3275 = vmul.f32 %v2643, %v3257
          %v3276 = vmul.f32 %v2645, %v3257
          %v3277 = vmul.f32 %v2647, %v3257
          %v3278 = vmul.f32 %v2649, %v3257
          %v3279 = vmul.f32 %v2651, %v3257
          %v3280 = vmul.f32 %v2653, %v3257
          %v3281 = vmul.f32 %v2655, %v3257
          %v3282 = vmul.f32 %v2657, %v3257
          %v3283 = vmul.f32 %v2659, %v3257
          %v3284 = vmul.f32 %v2661, %v3257
          %v3285 = vmul.f32 %v2663, %v3257
          %v3286 = vmul.f32 %v2665, %v3257
          %v3287 = vmul.f32 %v2667, %v3257
          %v3288 = vmul.f32 %v2669, %v3257
          %v3289 = vmul.f32 %v2671, %v3257
          %s3290 = sld [smem:[#allocation3 + $0x80]]
          %v3291 = vstv %s3290
          %v3292 = vmul.f32 %v2901, %v3291
          %v3293 = vmul.f32 %v2903, %v3291
          %v3294 = vmul.f32 %v2905, %v3291
          %v3295 = vmul.f32 %v2907, %v3291
          %v3296 = vmul.f32 %v2909, %v3291
          %v3297 = vmul.f32 %v2911, %v3291
          %v3298 = vmul.f32 %v2913, %v3291
          %v3299 = vmul.f32 %v2915, %v3291
          %v3300 = vmul.f32 %v2917, %v3291
          %v3301 = vmul.f32 %v2919, %v3291
          %v3302 = vmul.f32 %v2921, %v3291
          %v3303 = vmul.f32 %v2923, %v3291
          %v3304 = vmul.f32 %v2925, %v3291
          %v3305 = vmul.f32 %v2927, %v3291
          %v3306 = vmul.f32 %v2929, %v3291
          %v3307 = vmul.f32 %v2931, %v3291
          %v3308 = vmul.f32 %v2933, %v3291
          %v3309 = vmul.f32 %v2935, %v3291
          %v3310 = vmul.f32 %v2937, %v3291
          %v3311 = vmul.f32 %v2939, %v3291
          %v3312 = vmul.f32 %v2941, %v3291
          %v3313 = vmul.f32 %v2943, %v3291
          %v3314 = vmul.f32 %v2945, %v3291
          %v3315 = vmul.f32 %v2947, %v3291
          %v3316 = vmul.f32 %v2949, %v3291
          %v3317 = vmul.f32 %v2951, %v3291
          %v3318 = vmul.f32 %v2953, %v3291
          %v3319 = vmul.f32 %v2955, %v3291
          %v3320 = vmul.f32 %v2957, %v3291
          %v3321 = vmul.f32 %v2959, %v3291
          %v3322 = vmul.f32 %v2961, %v3291
          %v3323 = vmul.f32 %v2963, %v3291
          %v3324 = vadd.f32 %v3258, %v3292
          %v3325 = vadd.f32 %v3259, %v3293
          %v3326 = vadd.f32 %v3260, %v3294
          %v3327 = vadd.f32 %v3261, %v3295
          %v3328 = vadd.f32 %v3262, %v3296
          %v3329 = vadd.f32 %v3263, %v3297
          %v3330 = vadd.f32 %v3264, %v3298
          %v3331 = vadd.f32 %v3265, %v3299
          %v3332 = vadd.f32 %v3266, %v3300
          %v3333 = vadd.f32 %v3267, %v3301
          %v3334 = vadd.f32 %v3268, %v3302
          %v3335 = vadd.f32 %v3269, %v3303
          %v3336 = vadd.f32 %v3270, %v3304
          %v3337 = vadd.f32 %v3271, %v3305
          %v3338 = vadd.f32 %v3272, %v3306
          %v3339 = vadd.f32 %v3273, %v3307
          %v3340 = vadd.f32 %v3274, %v3308
          %v3341 = vadd.f32 %v3275, %v3309
          %v3342 = vadd.f32 %v3276, %v3310
          %v3343 = vadd.f32 %v3277, %v3311
          %v3344 = vadd.f32 %v3278, %v3312
          %v3345 = vadd.f32 %v3279, %v3313
          %v3346 = vadd.f32 %v3280, %v3314
          %v3347 = vadd.f32 %v3281, %v3315
          %v3348 = vadd.f32 %v3282, %v3316
          %v3349 = vadd.f32 %v3283, %v3317
          %v3350 = vadd.f32 %v3284, %v3318
          %v3351 = vadd.f32 %v3285, %v3319
          %v3352 = vadd.f32 %v3286, %v3320
          %v3353 = vadd.f32 %v3287, %v3321
          %v3354 = vadd.f32 %v3288, %v3322
          %v3355 = vadd.f32 %v3289, %v3323
          %s3356 = sld [smem:[#allocation3 + $0x100]]
          %v3357 = vstv %s3356
          %v3358 = vmul.f32 %v3193, %v3357
          %v3359 = vmul.f32 %v3195, %v3357
          %v3360 = vmul.f32 %v3197, %v3357
          %v3361 = vmul.f32 %v3199, %v3357
          %v3362 = vmul.f32 %v3201, %v3357
          %v3363 = vmul.f32 %v3203, %v3357
          %v3364 = vmul.f32 %v3205, %v3357
          %v3365 = vmul.f32 %v3207, %v3357
          %v3366 = vmul.f32 %v3209, %v3357
          %v3367 = vmul.f32 %v3211, %v3357
          %v3368 = vmul.f32 %v3213, %v3357
          %v3369 = vmul.f32 %v3215, %v3357
          %v3370 = vmul.f32 %v3217, %v3357
          %v3371 = vmul.f32 %v3219, %v3357
          %v3372 = vmul.f32 %v3221, %v3357
          %v3373 = vmul.f32 %v3223, %v3357
          %v3374 = vmul.f32 %v3225, %v3357
          %v3375 = vmul.f32 %v3227, %v3357
          %v3376 = vmul.f32 %v3229, %v3357
          %v3377 = vmul.f32 %v3231, %v3357
          %v3378 = vmul.f32 %v3233, %v3357
          %v3379 = vmul.f32 %v3235, %v3357
          %v3380 = vmul.f32 %v3237, %v3357
          %v3381 = vmul.f32 %v3239, %v3357
          %v3382 = vmul.f32 %v3241, %v3357
          %v3383 = vmul.f32 %v3243, %v3357
          %v3384 = vmul.f32 %v3245, %v3357
          %v3385 = vmul.f32 %v3247, %v3357
          %v3386 = vmul.f32 %v3249, %v3357
          %v3387 = vmul.f32 %v3251, %v3357
          %v3388 = vmul.f32 %v3253, %v3357
          %v3389 = vmul.f32 %v3255, %v3357
          %v3390 = vadd.f32 %v3324, %v3358
          %v3391 = vadd.f32 %v3325, %v3359
          %v3392 = vadd.f32 %v3326, %v3360
          %v3393 = vadd.f32 %v3327, %v3361
          %v3394 = vadd.f32 %v3328, %v3362
          %v3395 = vadd.f32 %v3329, %v3363
          %v3396 = vadd.f32 %v3330, %v3364
          %v3397 = vadd.f32 %v3331, %v3365
          %v3398 = vadd.f32 %v3332, %v3366
          %v3399 = vadd.f32 %v3333, %v3367
          %v3400 = vadd.f32 %v3334, %v3368
          %v3401 = vadd.f32 %v3335, %v3369
          %v3402 = vadd.f32 %v3336, %v3370
          %v3403 = vadd.f32 %v3337, %v3371
          %v3404 = vadd.f32 %v3338, %v3372
          %v3405 = vadd.f32 %v3339, %v3373
          %v3406 = vadd.f32 %v3340, %v3374
          %v3407 = vadd.f32 %v3341, %v3375
          %v3408 = vadd.f32 %v3342, %v3376
          %v3409 = vadd.f32 %v3343, %v3377
          %v3410 = vadd.f32 %v3344, %v3378
          %v3411 = vadd.f32 %v3345, %v3379
          %v3412 = vadd.f32 %v3346, %v3380
          %v3413 = vadd.f32 %v3347, %v3381
          %v3414 = vadd.f32 %v3348, %v3382
          %v3415 = vadd.f32 %v3349, %v3383
          %v3416 = vadd.f32 %v3350, %v3384
          %v3417 = vadd.f32 %v3351, %v3385
          %v3418 = vadd.f32 %v3352, %v3386
          %v3419 = vadd.f32 %v3353, %v3387
          %v3420 = vadd.f32 %v3354, %v3388
          %v3421 = vadd.f32 %v3355, %v3389
          %v3422 = vrcp.pop 3.0
          %v3423 = vmul.f32 %v3390, %v3422
          %v3424 = vmul.f32 %v3391, %v3422
          %v3425 = vmul.f32 %v3392, %v3422
          %v3426 = vmul.f32 %v3393, %v3422
          %v3427 = vmul.f32 %v3394, %v3422
          %v3428 = vmul.f32 %v3395, %v3422
          %v3429 = vmul.f32 %v3396, %v3422
          %v3430 = vmul.f32 %v3397, %v3422
          %v3431 = vmul.f32 %v3398, %v3422
          %v3432 = vmul.f32 %v3399, %v3422
          %v3433 = vmul.f32 %v3400, %v3422
          %v3434 = vmul.f32 %v3401, %v3422
          %v3435 = vmul.f32 %v3402, %v3422
          %v3436 = vmul.f32 %v3403, %v3422
          %v3437 = vmul.f32 %v3404, %v3422
          %v3438 = vmul.f32 %v3405, %v3422
          %v3439 = vmul.f32 %v3406, %v3422
          %v3440 = vmul.f32 %v3407, %v3422
          %v3441 = vmul.f32 %v3408, %v3422
          %v3442 = vmul.f32 %v3409, %v3422
          %v3443 = vmul.f32 %v3410, %v3422
          %v3444 = vmul.f32 %v3411, %v3422
          %v3445 = vmul.f32 %v3412, %v3422
          %v3446 = vmul.f32 %v3413, %v3422
          %v3447 = vmul.f32 %v3414, %v3422
          %v3448 = vmul.f32 %v3415, %v3422
          %v3449 = vmul.f32 %v3416, %v3422
          %v3450 = vmul.f32 %v3417, %v3422
          %v3451 = vmul.f32 %v3418, %v3422
          %v3452 = vmul.f32 %v3419, %v3422
          %v3453 = vmul.f32 %v3420, %v3422
          %v3454 = vmul.f32 %v3421, %v3422
          %s3455 = sld [smem:[#allocation3 + $0x1]]
          %v3456 = vstv %s3455
          %v3457 = vmul.f32 %v2609, %v3456
          %v3458 = vmul.f32 %v2611, %v3456
          %v3459 = vmul.f32 %v2613, %v3456
          %v3460 = vmul.f32 %v2615, %v3456
          %v3461 = vmul.f32 %v2617, %v3456
          %v3462 = vmul.f32 %v2619, %v3456
          %v3463 = vmul.f32 %v2621, %v3456
          %v3464 = vmul.f32 %v2623, %v3456
          %v3465 = vmul.f32 %v2625, %v3456
          %v3466 = vmul.f32 %v2627, %v3456
          %v3467 = vmul.f32 %v2629, %v3456
          %v3468 = vmul.f32 %v2631, %v3456
          %v3469 = vmul.f32 %v2633, %v3456
          %v3470 = vmul.f32 %v2635, %v3456
          %v3471 = vmul.f32 %v2637, %v3456
          %v3472 = vmul.f32 %v2639, %v3456
          %v3473 = vmul.f32 %v2641, %v3456
          %v3474 = vmul.f32 %v2643, %v3456
          %v3475 = vmul.f32 %v2645, %v3456
          %v3476 = vmul.f32 %v2647, %v3456
          %v3477 = vmul.f32 %v2649, %v3456
          %v3478 = vmul.f32 %v2651, %v3456
          %v3479 = vmul.f32 %v2653, %v3456
          %v3480 = vmul.f32 %v2655, %v3456
          %v3481 = vmul.f32 %v2657, %v3456
          %v3482 = vmul.f32 %v2659, %v3456
          %v3483 = vmul.f32 %v2661, %v3456
          %v3484 = vmul.f32 %v2663, %v3456
          %v3485 = vmul.f32 %v2665, %v3456
          %v3486 = vmul.f32 %v2667, %v3456
          %v3487 = vmul.f32 %v2669, %v3456
          %v3488 = vmul.f32 %v2671, %v3456
          %s3489 = sld [smem:[#allocation3 + $0x81]]
          %v3490 = vstv %s3489
          %v3491 = vmul.f32 %v2901, %v3490
          %v3492 = vmul.f32 %v2903, %v3490
          %v3493 = vmul.f32 %v2905, %v3490
          %v3494 = vmul.f32 %v2907, %v3490
          %v3495 = vmul.f32 %v2909, %v3490
          %v3496 = vmul.f32 %v2911, %v3490
          %v3497 = vmul.f32 %v2913, %v3490
          %v3498 = vmul.f32 %v2915, %v3490
          %v3499 = vmul.f32 %v2917, %v3490
          %v3500 = vmul.f32 %v2919, %v3490
          %v3501 = vmul.f32 %v2921, %v3490
          %v3502 = vmul.f32 %v2923, %v3490
          %v3503 = vmul.f32 %v2925, %v3490
          %v3504 = vmul.f32 %v2927, %v3490
          %v3505 = vmul.f32 %v2929, %v3490
          %v3506 = vmul.f32 %v2931, %v3490
          %v3507 = vmul.f32 %v2933, %v3490
          %v3508 = vmul.f32 %v2935, %v3490
          %v3509 = vmul.f32 %v2937, %v3490
          %v3510 = vmul.f32 %v2939, %v3490
          %v3511 = vmul.f32 %v2941, %v3490
          %v3512 = vmul.f32 %v2943, %v3490
          %v3513 = vmul.f32 %v2945, %v3490
          %v3514 = vmul.f32 %v2947, %v3490
          %v3515 = vmul.f32 %v2949, %v3490
          %v3516 = vmul.f32 %v2951, %v3490
          %v3517 = vmul.f32 %v2953, %v3490
          %v3518 = vmul.f32 %v2955, %v3490
          %v3519 = vmul.f32 %v2957, %v3490
          %v3520 = vmul.f32 %v2959, %v3490
          %v3521 = vmul.f32 %v2961, %v3490
          %v3522 = vmul.f32 %v2963, %v3490
          %v3523 = vadd.f32 %v3457, %v3491
          %v3524 = vadd.f32 %v3458, %v3492
          %v3525 = vadd.f32 %v3459, %v3493
          %v3526 = vadd.f32 %v3460, %v3494
          %v3527 = vadd.f32 %v3461, %v3495
          %v3528 = vadd.f32 %v3462, %v3496
          %v3529 = vadd.f32 %v3463, %v3497
          %v3530 = vadd.f32 %v3464, %v3498
          %v3531 = vadd.f32 %v3465, %v3499
          %v3532 = vadd.f32 %v3466, %v3500
          %v3533 = vadd.f32 %v3467, %v3501
          %v3534 = vadd.f32 %v3468, %v3502
          %v3535 = vadd.f32 %v3469, %v3503
          %v3536 = vadd.f32 %v3470, %v3504
          %v3537 = vadd.f32 %v3471, %v3505
          %v3538 = vadd.f32 %v3472, %v3506
          %v3539 = vadd.f32 %v3473, %v3507
          %v3540 = vadd.f32 %v3474, %v3508
          %v3541 = vadd.f32 %v3475, %v3509
          %v3542 = vadd.f32 %v3476, %v3510
          %v3543 = vadd.f32 %v3477, %v3511
          %v3544 = vadd.f32 %v3478, %v3512
          %v3545 = vadd.f32 %v3479, %v3513
          %v3546 = vadd.f32 %v3480, %v3514
          %v3547 = vadd.f32 %v3481, %v3515
          %v3548 = vadd.f32 %v3482, %v3516
          %v3549 = vadd.f32 %v3483, %v3517
          %v3550 = vadd.f32 %v3484, %v3518
          %v3551 = vadd.f32 %v3485, %v3519
          %v3552 = vadd.f32 %v3486, %v3520
          %v3553 = vadd.f32 %v3487, %v3521
          %v3554 = vadd.f32 %v3488, %v3522
          %s3555 = sld [smem:[#allocation3 + $0x101]]
          %v3556 = vstv %s3555
          %v3557 = vmul.f32 %v3193, %v3556
          %v3558 = vmul.f32 %v3195, %v3556
          %v3559 = vmul.f32 %v3197, %v3556
          %v3560 = vmul.f32 %v3199, %v3556
          %v3561 = vmul.f32 %v3201, %v3556
          %v3562 = vmul.f32 %v3203, %v3556
          %v3563 = vmul.f32 %v3205, %v3556
          %v3564 = vmul.f32 %v3207, %v3556
          %v3565 = vmul.f32 %v3209, %v3556
          %v3566 = vmul.f32 %v3211, %v3556
          %v3567 = vmul.f32 %v3213, %v3556
          %v3568 = vmul.f32 %v3215, %v3556
          %v3569 = vmul.f32 %v3217, %v3556
          %v3570 = vmul.f32 %v3219, %v3556
          %v3571 = vmul.f32 %v3221, %v3556
          %v3572 = vmul.f32 %v3223, %v3556
          %v3573 = vmul.f32 %v3225, %v3556
          %v3574 = vmul.f32 %v3227, %v3556
          %v3575 = vmul.f32 %v3229, %v3556
          %v3576 = vmul.f32 %v3231, %v3556
          %v3577 = vmul.f32 %v3233, %v3556
          %v3578 = vmul.f32 %v3235, %v3556
          %v3579 = vmul.f32 %v3237, %v3556
          %v3580 = vmul.f32 %v3239, %v3556
          %v3581 = vmul.f32 %v3241, %v3556
          %v3582 = vmul.f32 %v3243, %v3556
          %v3583 = vmul.f32 %v3245, %v3556
          %v3584 = vmul.f32 %v3247, %v3556
          %v3585 = vmul.f32 %v3249, %v3556
          %v3586 = vmul.f32 %v3251, %v3556
          %v3587 = vmul.f32 %v3253, %v3556
          %v3588 = vmul.f32 %v3255, %v3556
          %v3589 = vadd.f32 %v3523, %v3557
          %v3590 = vadd.f32 %v3524, %v3558
          %v3591 = vadd.f32 %v3525, %v3559
          %v3592 = vadd.f32 %v3526, %v3560
          %v3593 = vadd.f32 %v3527, %v3561
          %v3594 = vadd.f32 %v3528, %v3562
          %v3595 = vadd.f32 %v3529, %v3563
          %v3596 = vadd.f32 %v3530, %v3564
          %v3597 = vadd.f32 %v3531, %v3565
          %v3598 = vadd.f32 %v3532, %v3566
          %v3599 = vadd.f32 %v3533, %v3567
          %v3600 = vadd.f32 %v3534, %v3568
          %v3601 = vadd.f32 %v3535, %v3569
          %v3602 = vadd.f32 %v3536, %v3570
          %v3603 = vadd.f32 %v3537, %v3571
          %v3604 = vadd.f32 %v3538, %v3572
          %v3605 = vadd.f32 %v3539, %v3573
          %v3606 = vadd.f32 %v3540, %v3574
          %v3607 = vadd.f32 %v3541, %v3575
          %v3608 = vadd.f32 %v3542, %v3576
          %v3609 = vadd.f32 %v3543, %v3577
          %v3610 = vadd.f32 %v3544, %v3578
          %v3611 = vadd.f32 %v3545, %v3579
          %v3612 = vadd.f32 %v3546, %v3580
          %v3613 = vadd.f32 %v3547, %v3581
          %v3614 = vadd.f32 %v3548, %v3582
          %v3615 = vadd.f32 %v3549, %v3583
          %v3616 = vadd.f32 %v3550, %v3584
          %v3617 = vadd.f32 %v3551, %v3585
          %v3618 = vadd.f32 %v3552, %v3586
          %v3619 = vadd.f32 %v3553, %v3587
          %v3620 = vadd.f32 %v3554, %v3588
          %v3621 = vmul.f32 %v3589, %v3422
          %v3622 = vmul.f32 %v3590, %v3422
          %v3623 = vmul.f32 %v3591, %v3422
          %v3624 = vmul.f32 %v3592, %v3422
          %v3625 = vmul.f32 %v3593, %v3422
          %v3626 = vmul.f32 %v3594, %v3422
          %v3627 = vmul.f32 %v3595, %v3422
          %v3628 = vmul.f32 %v3596, %v3422
          %v3629 = vmul.f32 %v3597, %v3422
          %v3630 = vmul.f32 %v3598, %v3422
          %v3631 = vmul.f32 %v3599, %v3422
          %v3632 = vmul.f32 %v3600, %v3422
          %v3633 = vmul.f32 %v3601, %v3422
          %v3634 = vmul.f32 %v3602, %v3422
          %v3635 = vmul.f32 %v3603, %v3422
          %v3636 = vmul.f32 %v3604, %v3422
          %v3637 = vmul.f32 %v3605, %v3422
          %v3638 = vmul.f32 %v3606, %v3422
          %v3639 = vmul.f32 %v3607, %v3422
          %v3640 = vmul.f32 %v3608, %v3422
          %v3641 = vmul.f32 %v3609, %v3422
          %v3642 = vmul.f32 %v3610, %v3422
          %v3643 = vmul.f32 %v3611, %v3422
          %v3644 = vmul.f32 %v3612, %v3422
          %v3645 = vmul.f32 %v3613, %v3422
          %v3646 = vmul.f32 %v3614, %v3422
          %v3647 = vmul.f32 %v3615, %v3422
          %v3648 = vmul.f32 %v3616, %v3422
          %v3649 = vmul.f32 %v3617, %v3422
          %v3650 = vmul.f32 %v3618, %v3422
          %v3651 = vmul.f32 %v3619, %v3422
          %v3652 = vmul.f32 %v3620, %v3422
          %s3653 = sld [smem:[#allocation3 + $0x2]]
          %v3654 = vstv %s3653
          %v3655 = vmul.f32 %v2609, %v3654
          %v3656 = vmul.f32 %v2611, %v3654
          %v3657 = vmul.f32 %v2613, %v3654
          %v3658 = vmul.f32 %v2615, %v3654
          %v3659 = vmul.f32 %v2617, %v3654
          %v3660 = vmul.f32 %v2619, %v3654
          %v3661 = vmul.f32 %v2621, %v3654
          %v3662 = vmul.f32 %v2623, %v3654
          %v3663 = vmul.f32 %v2625, %v3654
          %v3664 = vmul.f32 %v2627, %v3654
          %v3665 = vmul.f32 %v2629, %v3654
          %v3666 = vmul.f32 %v2631, %v3654
          %v3667 = vmul.f32 %v2633, %v3654
          %v3668 = vmul.f32 %v2635, %v3654
          %v3669 = vmul.f32 %v2637, %v3654
          %v3670 = vmul.f32 %v2639, %v3654
          %v3671 = vmul.f32 %v2641, %v3654
          %v3672 = vmul.f32 %v2643, %v3654
          %v3673 = vmul.f32 %v2645, %v3654
          %v3674 = vmul.f32 %v2647, %v3654
          %v3675 = vmul.f32 %v2649, %v3654
          %v3676 = vmul.f32 %v2651, %v3654
          %v3677 = vmul.f32 %v2653, %v3654
          %v3678 = vmul.f32 %v2655, %v3654
          %v3679 = vmul.f32 %v2657, %v3654
          %v3680 = vmul.f32 %v2659, %v3654
          %v3681 = vmul.f32 %v2661, %v3654
          %v3682 = vmul.f32 %v2663, %v3654
          %v3683 = vmul.f32 %v2665, %v3654
          %v3684 = vmul.f32 %v2667, %v3654
          %v3685 = vmul.f32 %v2669, %v3654
          %v3686 = vmul.f32 %v2671, %v3654
          %s3687 = sld [smem:[#allocation3 + $0x82]]
          %v3688 = vstv %s3687
          %v3689 = vmul.f32 %v2901, %v3688
          %v3690 = vmul.f32 %v2903, %v3688
          %v3691 = vmul.f32 %v2905, %v3688
          %v3692 = vmul.f32 %v2907, %v3688
          %v3693 = vmul.f32 %v2909, %v3688
          %v3694 = vmul.f32 %v2911, %v3688
          %v3695 = vmul.f32 %v2913, %v3688
          %v3696 = vmul.f32 %v2915, %v3688
          %v3697 = vmul.f32 %v2917, %v3688
          %v3698 = vmul.f32 %v2919, %v3688
          %v3699 = vmul.f32 %v2921, %v3688
          %v3700 = vmul.f32 %v2923, %v3688
          %v3701 = vmul.f32 %v2925, %v3688
          %v3702 = vmul.f32 %v2927, %v3688
          %v3703 = vmul.f32 %v2929, %v3688
          %v3704 = vmul.f32 %v2931, %v3688
          %v3705 = vmul.f32 %v2933, %v3688
          %v3706 = vmul.f32 %v2935, %v3688
          %v3707 = vmul.f32 %v2937, %v3688
          %v3708 = vmul.f32 %v2939, %v3688
          %v3709 = vmul.f32 %v2941, %v3688
          %v3710 = vmul.f32 %v2943, %v3688
          %v3711 = vmul.f32 %v2945, %v3688
          %v3712 = vmul.f32 %v2947, %v3688
          %v3713 = vmul.f32 %v2949, %v3688
          %v3714 = vmul.f32 %v2951, %v3688
          %v3715 = vmul.f32 %v2953, %v3688
          %v3716 = vmul.f32 %v2955, %v3688
          %v3717 = vmul.f32 %v2957, %v3688
          %v3718 = vmul.f32 %v2959, %v3688
          %v3719 = vmul.f32 %v2961, %v3688
          %v3720 = vmul.f32 %v2963, %v3688
          %v3721 = vadd.f32 %v3655, %v3689
          %v3722 = vadd.f32 %v3656, %v3690
          %v3723 = vadd.f32 %v3657, %v3691
          %v3724 = vadd.f32 %v3658, %v3692
          %v3725 = vadd.f32 %v3659, %v3693
          %v3726 = vadd.f32 %v3660, %v3694
          %v3727 = vadd.f32 %v3661, %v3695
          %v3728 = vadd.f32 %v3662, %v3696
          %v3729 = vadd.f32 %v3663, %v3697
          %v3730 = vadd.f32 %v3664, %v3698
          %v3731 = vadd.f32 %v3665, %v3699
          %v3732 = vadd.f32 %v3666, %v3700
          %v3733 = vadd.f32 %v3667, %v3701
          %v3734 = vadd.f32 %v3668, %v3702
          %v3735 = vadd.f32 %v3669, %v3703
          %v3736 = vadd.f32 %v3670, %v3704
          %v3737 = vadd.f32 %v3671, %v3705
          %v3738 = vadd.f32 %v3672, %v3706
          %v3739 = vadd.f32 %v3673, %v3707
          %v3740 = vadd.f32 %v3674, %v3708
          %v3741 = vadd.f32 %v3675, %v3709
          %v3742 = vadd.f32 %v3676, %v3710
          %v3743 = vadd.f32 %v3677, %v3711
          %v3744 = vadd.f32 %v3678, %v3712
          %v3745 = vadd.f32 %v3679, %v3713
          %v3746 = vadd.f32 %v3680, %v3714
          %v3747 = vadd.f32 %v3681, %v3715
          %v3748 = vadd.f32 %v3682, %v3716
          %v3749 = vadd.f32 %v3683, %v3717
          %v3750 = vadd.f32 %v3684, %v3718
          %v3751 = vadd.f32 %v3685, %v3719
          %v3752 = vadd.f32 %v3686, %v3720
          %s3753 = sld [smem:[#allocation3 + $0x102]]
          %v3754 = vstv %s3753
          %v3755 = vmul.f32 %v3193, %v3754
          %v3756 = vmul.f32 %v3195, %v3754
          %v3757 = vmul.f32 %v3197, %v3754
          %v3758 = vmul.f32 %v3199, %v3754
          %v3759 = vmul.f32 %v3201, %v3754
          %v3760 = vmul.f32 %v3203, %v3754
          %v3761 = vmul.f32 %v3205, %v3754
          %v3762 = vmul.f32 %v3207, %v3754
          %v3763 = vmul.f32 %v3209, %v3754
          %v3764 = vmul.f32 %v3211, %v3754
          %v3765 = vmul.f32 %v3213, %v3754
          %v3766 = vmul.f32 %v3215, %v3754
          %v3767 = vmul.f32 %v3217, %v3754
          %v3768 = vmul.f32 %v3219, %v3754
          %v3769 = vmul.f32 %v3221, %v3754
          %v3770 = vmul.f32 %v3223, %v3754
          %v3771 = vmul.f32 %v3225, %v3754
          %v3772 = vmul.f32 %v3227, %v3754
          %v3773 = vmul.f32 %v3229, %v3754
          %v3774 = vmul.f32 %v3231, %v3754
          %v3775 = vmul.f32 %v3233, %v3754
          %v3776 = vmul.f32 %v3235, %v3754
          %v3777 = vmul.f32 %v3237, %v3754
          %v3778 = vmul.f32 %v3239, %v3754
          %v3779 = vmul.f32 %v3241, %v3754
          %v3780 = vmul.f32 %v3243, %v3754
          %v3781 = vmul.f32 %v3245, %v3754
          %v3782 = vmul.f32 %v3247, %v3754
          %v3783 = vmul.f32 %v3249, %v3754
          %v3784 = vmul.f32 %v3251, %v3754
          %v3785 = vmul.f32 %v3253, %v3754
          %v3786 = vmul.f32 %v3255, %v3754
          %v3787 = vadd.f32 %v3721, %v3755
          %v3788 = vadd.f32 %v3722, %v3756
          %v3789 = vadd.f32 %v3723, %v3757
          %v3790 = vadd.f32 %v3724, %v3758
          %v3791 = vadd.f32 %v3725, %v3759
          %v3792 = vadd.f32 %v3726, %v3760
          %v3793 = vadd.f32 %v3727, %v3761
          %v3794 = vadd.f32 %v3728, %v3762
          %v3795 = vadd.f32 %v3729, %v3763
          %v3796 = vadd.f32 %v3730, %v3764
          %v3797 = vadd.f32 %v3731, %v3765
          %v3798 = vadd.f32 %v3732, %v3766
          %v3799 = vadd.f32 %v3733, %v3767
          %v3800 = vadd.f32 %v3734, %v3768
          %v3801 = vadd.f32 %v3735, %v3769
          %v3802 = vadd.f32 %v3736, %v3770
          %v3803 = vadd.f32 %v3737, %v3771
          %v3804 = vadd.f32 %v3738, %v3772
          %v3805 = vadd.f32 %v3739, %v3773
          %v3806 = vadd.f32 %v3740, %v3774
          %v3807 = vadd.f32 %v3741, %v3775
          %v3808 = vadd.f32 %v3742, %v3776
          %v3809 = vadd.f32 %v3743, %v3777
          %v3810 = vadd.f32 %v3744, %v3778
          %v3811 = vadd.f32 %v3745, %v3779
          %v3812 = vadd.f32 %v3746, %v3780
          %v3813 = vadd.f32 %v3747, %v3781
          %v3814 = vadd.f32 %v3748, %v3782
          %v3815 = vadd.f32 %v3749, %v3783
          %v3816 = vadd.f32 %v3750, %v3784
          %v3817 = vadd.f32 %v3751, %v3785
          %v3818 = vadd.f32 %v3752, %v3786
          %v3819 = vmul.f32 %v3787, %v3422
          %v3820 = vmul.f32 %v3788, %v3422
          %v3821 = vmul.f32 %v3789, %v3422
          %v3822 = vmul.f32 %v3790, %v3422
          %v3823 = vmul.f32 %v3791, %v3422
          %v3824 = vmul.f32 %v3792, %v3422
          %v3825 = vmul.f32 %v3793, %v3422
          %v3826 = vmul.f32 %v3794, %v3422
          %v3827 = vmul.f32 %v3795, %v3422
          %v3828 = vmul.f32 %v3796, %v3422
          %v3829 = vmul.f32 %v3797, %v3422
          %v3830 = vmul.f32 %v3798, %v3422
          %v3831 = vmul.f32 %v3799, %v3422
          %v3832 = vmul.f32 %v3800, %v3422
          %v3833 = vmul.f32 %v3801, %v3422
          %v3834 = vmul.f32 %v3802, %v3422
          %v3835 = vmul.f32 %v3803, %v3422
          %v3836 = vmul.f32 %v3804, %v3422
          %v3837 = vmul.f32 %v3805, %v3422
          %v3838 = vmul.f32 %v3806, %v3422
          %v3839 = vmul.f32 %v3807, %v3422
          %v3840 = vmul.f32 %v3808, %v3422
          %v3841 = vmul.f32 %v3809, %v3422
          %v3842 = vmul.f32 %v3810, %v3422
          %v3843 = vmul.f32 %v3811, %v3422
          %v3844 = vmul.f32 %v3812, %v3422
          %v3845 = vmul.f32 %v3813, %v3422
          %v3846 = vmul.f32 %v3814, %v3422
          %v3847 = vmul.f32 %v3815, %v3422
          %v3848 = vmul.f32 %v3816, %v3422
          %v3849 = vmul.f32 %v3817, %v3422
          %v3850 = vmul.f32 %v3818, %v3422
          %v3851 = vmax.f32 %v3423, %v3621
          %v3852 = vmax.f32 %v3424, %v3622
          %v3853 = vmax.f32 %v3425, %v3623
          %v3854 = vmax.f32 %v3426, %v3624
          %v3855 = vmax.f32 %v3427, %v3625
          %v3856 = vmax.f32 %v3428, %v3626
          %v3857 = vmax.f32 %v3429, %v3627
          %v3858 = vmax.f32 %v3430, %v3628
          %v3859 = vmax.f32 %v3431, %v3629
          %v3860 = vmax.f32 %v3432, %v3630
          %v3861 = vmax.f32 %v3433, %v3631
          %v3862 = vmax.f32 %v3434, %v3632
          %v3863 = vmax.f32 %v3435, %v3633
          %v3864 = vmax.f32 %v3436, %v3634
          %v3865 = vmax.f32 %v3437, %v3635
          %v3866 = vmax.f32 %v3438, %v3636
          %v3867 = vmax.f32 %v3439, %v3637
          %v3868 = vmax.f32 %v3440, %v3638
          %v3869 = vmax.f32 %v3441, %v3639
          %v3870 = vmax.f32 %v3442, %v3640
          %v3871 = vmax.f32 %v3443, %v3641
          %v3872 = vmax.f32 %v3444, %v3642
          %v3873 = vmax.f32 %v3445, %v3643
          %v3874 = vmax.f32 %v3446, %v3644
          %v3875 = vmax.f32 %v3447, %v3645
          %v3876 = vmax.f32 %v3448, %v3646
          %v3877 = vmax.f32 %v3449, %v3647
          %v3878 = vmax.f32 %v3450, %v3648
          %v3879 = vmax.f32 %v3451, %v3649
          %v3880 = vmax.f32 %v3452, %v3650
          %v3881 = vmax.f32 %v3453, %v3651
          %v3882 = vmax.f32 %v3454, %v3652
          %v3883 = vmax.f32 %v3851, %v3819
          %v3884 = vmax.f32 %v3852, %v3820
          %v3885 = vmax.f32 %v3853, %v3821
          %v3886 = vmax.f32 %v3854, %v3822
          %v3887 = vmax.f32 %v3855, %v3823
          %v3888 = vmax.f32 %v3856, %v3824
          %v3889 = vmax.f32 %v3857, %v3825
          %v3890 = vmax.f32 %v3858, %v3826
          %v3891 = vmax.f32 %v3859, %v3827
          %v3892 = vmax.f32 %v3860, %v3828
          %v3893 = vmax.f32 %v3861, %v3829
          %v3894 = vmax.f32 %v3862, %v3830
          %v3895 = vmax.f32 %v3863, %v3831
          %v3896 = vmax.f32 %v3864, %v3832
          %v3897 = vmax.f32 %v3865, %v3833
          %v3898 = vmax.f32 %v3866, %v3834
          %v3899 = vmax.f32 %v3867, %v3835
          %v3900 = vmax.f32 %v3868, %v3836
          %v3901 = vmax.f32 %v3869, %v3837
          %v3902 = vmax.f32 %v3870, %v3838
          %v3903 = vmax.f32 %v3871, %v3839
          %v3904 = vmax.f32 %v3872, %v3840
          %v3905 = vmax.f32 %v3873, %v3841
          %v3906 = vmax.f32 %v3874, %v3842
          %v3907 = vmax.f32 %v3875, %v3843
          %v3908 = vmax.f32 %v3876, %v3844
          %v3909 = vmax.f32 %v3877, %v3845
          %v3910 = vmax.f32 %v3878, %v3846
          %v3911 = vmax.f32 %v3879, %v3847
          %v3912 = vmax.f32 %v3880, %v3848
          %v3913 = vmax.f32 %v3881, %v3849
          %v3914 = vmax.f32 %v3882, %v3850
          %v3915 = vsub.f32 %v3423, %v3883
          %v3916 = vsub.f32 %v3424, %v3884
          %v3917 = vsub.f32 %v3425, %v3885
          %v3918 = vsub.f32 %v3426, %v3886
          %v3919 = vsub.f32 %v3427, %v3887
          %v3920 = vsub.f32 %v3428, %v3888
          %v3921 = vsub.f32 %v3429, %v3889
          %v3922 = vsub.f32 %v3430, %v3890
          %v3923 = vsub.f32 %v3431, %v3891
          %v3924 = vsub.f32 %v3432, %v3892
          %v3925 = vsub.f32 %v3433, %v3893
          %v3926 = vsub.f32 %v3434, %v3894
          %v3927 = vsub.f32 %v3435, %v3895
          %v3928 = vsub.f32 %v3436, %v3896
          %v3929 = vsub.f32 %v3437, %v3897
          %v3930 = vsub.f32 %v3438, %v3898
          %v3931 = vsub.f32 %v3439, %v3899
          %v3932 = vsub.f32 %v3440, %v3900
          %v3933 = vsub.f32 %v3441, %v3901
          %v3934 = vsub.f32 %v3442, %v3902
          %v3935 = vsub.f32 %v3443, %v3903
          %v3936 = vsub.f32 %v3444, %v3904
          %v3937 = vsub.f32 %v3445, %v3905
          %v3938 = vsub.f32 %v3446, %v3906
          %v3939 = vsub.f32 %v3447, %v3907
          %v3940 = vsub.f32 %v3448, %v3908
          %v3941 = vsub.f32 %v3449, %v3909
          %v3942 = vsub.f32 %v3450, %v3910
          %v3943 = vsub.f32 %v3451, %v3911
          %v3944 = vsub.f32 %v3452, %v3912
          %v3945 = vsub.f32 %v3453, %v3913
          %v3946 = vsub.f32 %v3454, %v3914
          %v3947 = vmul.f32 %v3915, 1.442695
          %v3948 = vpow.pop %v3947
          %v3949 = vmul.f32 %v3916, 1.442695
          %v3950 = vpow.pop %v3949
          %v3951 = vmul.f32 %v3917, 1.442695
          %v3952 = vpow.pop %v3951
          %v3953 = vmul.f32 %v3918, 1.442695
          %v3954 = vpow.pop %v3953
          %v3955 = vmul.f32 %v3919, 1.442695
          %v3956 = vpow.pop %v3955
          %v3957 = vmul.f32 %v3920, 1.442695
          %v3958 = vpow.pop %v3957
          %v3959 = vmul.f32 %v3921, 1.442695
          %v3960 = vpow.pop %v3959
          %v3961 = vmul.f32 %v3922, 1.442695
          %v3962 = vpow.pop %v3961
          %v3963 = vmul.f32 %v3923, 1.442695
          %v3964 = vpow.pop %v3963
          %v3965 = vmul.f32 %v3924, 1.442695
          %v3966 = vpow.pop %v3965
          %v3967 = vmul.f32 %v3925, 1.442695
          %v3968 = vpow.pop %v3967
          %v3969 = vmul.f32 %v3926, 1.442695
          %v3970 = vpow.pop %v3969
          %v3971 = vmul.f32 %v3927, 1.442695
          %v3972 = vpow.pop %v3971
          %v3973 = vmul.f32 %v3928, 1.442695
          %v3974 = vpow.pop %v3973
          %v3975 = vmul.f32 %v3929, 1.442695
          %v3976 = vpow.pop %v3975
          %v3977 = vmul.f32 %v3930, 1.442695
          %v3978 = vpow.pop %v3977
          %v3979 = vmul.f32 %v3931, 1.442695
          %v3980 = vpow.pop %v3979
          %v3981 = vmul.f32 %v3932, 1.442695
          %v3982 = vpow.pop %v3981
          %v3983 = vmul.f32 %v3933, 1.442695
          %v3984 = vpow.pop %v3983
          %v3985 = vmul.f32 %v3934, 1.442695
          %v3986 = vpow.pop %v3985
          %v3987 = vmul.f32 %v3935, 1.442695
          %v3988 = vpow.pop %v3987
          %v3989 = vmul.f32 %v3936, 1.442695
          %v3990 = vpow.pop %v3989
          %v3991 = vmul.f32 %v3937, 1.442695
          %v3992 = vpow.pop %v3991
          %v3993 = vmul.f32 %v3938, 1.442695
          %v3994 = vpow.pop %v3993
          %v3995 = vmul.f32 %v3939, 1.442695
          %v3996 = vpow.pop %v3995
          %v3997 = vmul.f32 %v3940, 1.442695
          %v3998 = vpow.pop %v3997
          %v3999 = vmul.f32 %v3941, 1.442695
          %v4000 = vpow.pop %v3999
          %v4001 = vmul.f32 %v3942, 1.442695
          %v4002 = vpow.pop %v4001
          %v4003 = vmul.f32 %v3943, 1.442695
          %v4004 = vpow.pop %v4003
          %v4005 = vmul.f32 %v3944, 1.442695
          %v4006 = vpow.pop %v4005
          %v4007 = vmul.f32 %v3945, 1.442695
          %v4008 = vpow.pop %v4007
          %v4009 = vmul.f32 %v3946, 1.442695
          %v4010 = vpow.pop %v4009
          %v4011 = vsub.f32 %v3621, %v3883
          %v4012 = vsub.f32 %v3622, %v3884
          %v4013 = vsub.f32 %v3623, %v3885
          %v4014 = vsub.f32 %v3624, %v3886
          %v4015 = vsub.f32 %v3625, %v3887
          %v4016 = vsub.f32 %v3626, %v3888
          %v4017 = vsub.f32 %v3627, %v3889
          %v4018 = vsub.f32 %v3628, %v3890
          %v4019 = vsub.f32 %v3629, %v3891
          %v4020 = vsub.f32 %v3630, %v3892
          %v4021 = vsub.f32 %v3631, %v3893
          %v4022 = vsub.f32 %v3632, %v3894
          %v4023 = vsub.f32 %v3633, %v3895
          %v4024 = vsub.f32 %v3634, %v3896
          %v4025 = vsub.f32 %v3635, %v3897
          %v4026 = vsub.f32 %v3636, %v3898
          %v4027 = vsub.f32 %v3637, %v3899
          %v4028 = vsub.f32 %v3638, %v3900
          %v4029 = vsub.f32 %v3639, %v3901
          %v4030 = vsub.f32 %v3640, %v3902
          %v4031 = vsub.f32 %v3641, %v3903
          %v4032 = vsub.f32 %v3642, %v3904
          %v4033 = vsub.f32 %v3643, %v3905
          %v4034 = vsub.f32 %v3644, %v3906
          %v4035 = vsub.f32 %v3645, %v3907
          %v4036 = vsub.f32 %v3646, %v3908
          %v4037 = vsub.f32 %v3647, %v3909
          %v4038 = vsub.f32 %v3648, %v3910
          %v4039 = vsub.f32 %v3649, %v3911
          %v4040 = vsub.f32 %v3650, %v3912
          %v4041 = vsub.f32 %v3651, %v3913
          %v4042 = vsub.f32 %v3652, %v3914
          %v4043 = vmul.f32 %v4011, 1.442695
          %v4044 = vpow.pop %v4043
          %v4045 = vmul.f32 %v4012, 1.442695
          %v4046 = vpow.pop %v4045
          %v4047 = vmul.f32 %v4013, 1.442695
          %v4048 = vpow.pop %v4047
          %v4049 = vmul.f32 %v4014, 1.442695
          %v4050 = vpow.pop %v4049
          %v4051 = vmul.f32 %v4015, 1.442695
          %v4052 = vpow.pop %v4051
          %v4053 = vmul.f32 %v4016, 1.442695
          %v4054 = vpow.pop %v4053
          %v4055 = vmul.f32 %v4017, 1.442695
          %v4056 = vpow.pop %v4055
          %v4057 = vmul.f32 %v4018, 1.442695
          %v4058 = vpow.pop %v4057
          %v4059 = vmul.f32 %v4019, 1.442695
          %v4060 = vpow.pop %v4059
          %v4061 = vmul.f32 %v4020, 1.442695
          %v4062 = vpow.pop %v4061
          %v4063 = vmul.f32 %v4021, 1.442695
          %v4064 = vpow.pop %v4063
          %v4065 = vmul.f32 %v4022, 1.442695
          %v4066 = vpow.pop %v4065
          %v4067 = vmul.f32 %v4023, 1.442695
          %v4068 = vpow.pop %v4067
          %v4069 = vmul.f32 %v4024, 1.442695
          %v4070 = vpow.pop %v4069
          %v4071 = vmul.f32 %v4025, 1.442695
          %v4072 = vpow.pop %v4071
          %v4073 = vmul.f32 %v4026, 1.442695
          %v4074 = vpow.pop %v4073
          %v4075 = vmul.f32 %v4027, 1.442695
          %v4076 = vpow.pop %v4075
          %v4077 = vmul.f32 %v4028, 1.442695
          %v4078 = vpow.pop %v4077
          %v4079 = vmul.f32 %v4029, 1.442695
          %v4080 = vpow.pop %v4079
          %v4081 = vmul.f32 %v4030, 1.442695
          %v4082 = vpow.pop %v4081
          %v4083 = vmul.f32 %v4031, 1.442695
          %v4084 = vpow.pop %v4083
          %v4085 = vmul.f32 %v4032, 1.442695
          %v4086 = vpow.pop %v4085
          %v4087 = vmul.f32 %v4033, 1.442695
          %v4088 = vpow.pop %v4087
          %v4089 = vmul.f32 %v4034, 1.442695
          %v4090 = vpow.pop %v4089
          %v4091 = vmul.f32 %v4035, 1.442695
          %v4092 = vpow.pop %v4091
          %v4093 = vmul.f32 %v4036, 1.442695
          %v4094 = vpow.pop %v4093
          %v4095 = vmul.f32 %v4037, 1.442695
          %v4096 = vpow.pop %v4095
          %v4097 = vmul.f32 %v4038, 1.442695
          %v4098 = vpow.pop %v4097
          %v4099 = vmul.f32 %v4039, 1.442695
          %v4100 = vpow.pop %v4099
          %v4101 = vmul.f32 %v4040, 1.442695
          %v4102 = vpow.pop %v4101
          %v4103 = vmul.f32 %v4041, 1.442695
          %v4104 = vpow.pop %v4103
          %v4105 = vmul.f32 %v4042, 1.442695
          %v4106 = vpow.pop %v4105
          %v4107 = vsub.f32 %v3819, %v3883
          %v4108 = vsub.f32 %v3820, %v3884
          %v4109 = vsub.f32 %v3821, %v3885
          %v4110 = vsub.f32 %v3822, %v3886
          %v4111 = vsub.f32 %v3823, %v3887
          %v4112 = vsub.f32 %v3824, %v3888
          %v4113 = vsub.f32 %v3825, %v3889
          %v4114 = vsub.f32 %v3826, %v3890
          %v4115 = vsub.f32 %v3827, %v3891
          %v4116 = vsub.f32 %v3828, %v3892
          %v4117 = vsub.f32 %v3829, %v3893
          %v4118 = vsub.f32 %v3830, %v3894
          %v4119 = vsub.f32 %v3831, %v3895
          %v4120 = vsub.f32 %v3832, %v3896
          %v4121 = vsub.f32 %v3833, %v3897
          %v4122 = vsub.f32 %v3834, %v3898
          %v4123 = vsub.f32 %v3835, %v3899
          %v4124 = vsub.f32 %v3836, %v3900
          %v4125 = vsub.f32 %v3837, %v3901
          %v4126 = vsub.f32 %v3838, %v3902
          %v4127 = vsub.f32 %v3839, %v3903
          %v4128 = vsub.f32 %v3840, %v3904
          %v4129 = vsub.f32 %v3841, %v3905
          %v4130 = vsub.f32 %v3842, %v3906
          %v4131 = vsub.f32 %v3843, %v3907
          %v4132 = vsub.f32 %v3844, %v3908
          %v4133 = vsub.f32 %v3845, %v3909
          %v4134 = vsub.f32 %v3846, %v3910
          %v4135 = vsub.f32 %v3847, %v3911
          %v4136 = vsub.f32 %v3848, %v3912
          %v4137 = vsub.f32 %v3849, %v3913
          %v4138 = vsub.f32 %v3850, %v3914
          %v4139 = vmul.f32 %v4107, 1.442695
          %v4140 = vpow.pop %v4139
          %v4141 = vmul.f32 %v4108, 1.442695
          %v4142 = vpow.pop %v4141
          %v4143 = vmul.f32 %v4109, 1.442695
          %v4144 = vpow.pop %v4143
          %v4145 = vmul.f32 %v4110, 1.442695
          %v4146 = vpow.pop %v4145
          %v4147 = vmul.f32 %v4111, 1.442695
          %v4148 = vpow.pop %v4147
          %v4149 = vmul.f32 %v4112, 1.442695
          %v4150 = vpow.pop %v4149
          %v4151 = vmul.f32 %v4113, 1.442695
          %v4152 = vpow.pop %v4151
          %v4153 = vmul.f32 %v4114, 1.442695
          %v4154 = vpow.pop %v4153
          %v4155 = vmul.f32 %v4115, 1.442695
          %v4156 = vpow.pop %v4155
          %v4157 = vmul.f32 %v4116, 1.442695
          %v4158 = vpow.pop %v4157
          %v4159 = vmul.f32 %v4117, 1.442695
          %v4160 = vpow.pop %v4159
          %v4161 = vmul.f32 %v4118, 1.442695
          %v4162 = vpow.pop %v4161
          %v4163 = vmul.f32 %v4119, 1.442695
          %v4164 = vpow.pop %v4163
          %v4165 = vmul.f32 %v4120, 1.442695
          %v4166 = vpow.pop %v4165
          %v4167 = vmul.f32 %v4121, 1.442695
          %v4168 = vpow.pop %v4167
          %v4169 = vmul.f32 %v4122, 1.442695
          %v4170 = vpow.pop %v4169
          %v4171 = vmul.f32 %v4123, 1.442695
          %v4172 = vpow.pop %v4171
          %v4173 = vmul.f32 %v4124, 1.442695
          %v4174 = vpow.pop %v4173
          %v4175 = vmul.f32 %v4125, 1.442695
          %v4176 = vpow.pop %v4175
          %v4177 = vmul.f32 %v4126, 1.442695
          %v4178 = vpow.pop %v4177
          %v4179 = vmul.f32 %v4127, 1.442695
          %v4180 = vpow.pop %v4179
          %v4181 = vmul.f32 %v4128, 1.442695
          %v4182 = vpow.pop %v4181
          %v4183 = vmul.f32 %v4129, 1.442695
          %v4184 = vpow.pop %v4183
          %v4185 = vmul.f32 %v4130, 1.442695
          %v4186 = vpow.pop %v4185
          %v4187 = vmul.f32 %v4131, 1.442695
          %v4188 = vpow.pop %v4187
          %v4189 = vmul.f32 %v4132, 1.442695
          %v4190 = vpow.pop %v4189
          %v4191 = vmul.f32 %v4133, 1.442695
          %v4192 = vpow.pop %v4191
          %v4193 = vmul.f32 %v4134, 1.442695
          %v4194 = vpow.pop %v4193
          %v4195 = vmul.f32 %v4135, 1.442695
          %v4196 = vpow.pop %v4195
          %v4197 = vmul.f32 %v4136, 1.442695
          %v4198 = vpow.pop %v4197
          %v4199 = vmul.f32 %v4137, 1.442695
          %v4200 = vpow.pop %v4199
          %v4201 = vmul.f32 %v4138, 1.442695
          %v4202 = vpow.pop %v4201
          %v4203 = vadd.f32 %v3948, %v4044
          %v4204 = vadd.f32 %v3950, %v4046
          %v4205 = vadd.f32 %v3952, %v4048
          %v4206 = vadd.f32 %v3954, %v4050
          %v4207 = vadd.f32 %v3956, %v4052
          %v4208 = vadd.f32 %v3958, %v4054
          %v4209 = vadd.f32 %v3960, %v4056
          %v4210 = vadd.f32 %v3962, %v4058
          %v4211 = vadd.f32 %v3964, %v4060
          %v4212 = vadd.f32 %v3966, %v4062
          %v4213 = vadd.f32 %v3968, %v4064
          %v4214 = vadd.f32 %v3970, %v4066
          %v4215 = vadd.f32 %v3972, %v4068
          %v4216 = vadd.f32 %v3974, %v4070
          %v4217 = vadd.f32 %v3976, %v4072
          %v4218 = vadd.f32 %v3978, %v4074
          %v4219 = vadd.f32 %v3980, %v4076
          %v4220 = vadd.f32 %v3982, %v4078
          %v4221 = vadd.f32 %v3984, %v4080
          %v4222 = vadd.f32 %v3986, %v4082
          %v4223 = vadd.f32 %v3988, %v4084
          %v4224 = vadd.f32 %v3990, %v4086
          %v4225 = vadd.f32 %v3992, %v4088
          %v4226 = vadd.f32 %v3994, %v4090
          %v4227 = vadd.f32 %v3996, %v4092
          %v4228 = vadd.f32 %v3998, %v4094
          %v4229 = vadd.f32 %v4000, %v4096
          %v4230 = vadd.f32 %v4002, %v4098
          %v4231 = vadd.f32 %v4004, %v4100
          %v4232 = vadd.f32 %v4006, %v4102
          %v4233 = vadd.f32 %v4008, %v4104
          %v4234 = vadd.f32 %v4010, %v4106
          %v4235 = vadd.f32 %v4203, %v4140
          %v4236 = vadd.f32 %v4204, %v4142
          %v4237 = vadd.f32 %v4205, %v4144
          %v4238 = vadd.f32 %v4206, %v4146
          %v4239 = vadd.f32 %v4207, %v4148
          %v4240 = vadd.f32 %v4208, %v4150
          %v4241 = vadd.f32 %v4209, %v4152
          %v4242 = vadd.f32 %v4210, %v4154
          %v4243 = vadd.f32 %v4211, %v4156
          %v4244 = vadd.f32 %v4212, %v4158
          %v4245 = vadd.f32 %v4213, %v4160
          %v4246 = vadd.f32 %v4214, %v4162
          %v4247 = vadd.f32 %v4215, %v4164
          %v4248 = vadd.f32 %v4216, %v4166
          %v4249 = vadd.f32 %v4217, %v4168
          %v4250 = vadd.f32 %v4218, %v4170
          %v4251 = vadd.f32 %v4219, %v4172
          %v4252 = vadd.f32 %v4220, %v4174
          %v4253 = vadd.f32 %v4221, %v4176
          %v4254 = vadd.f32 %v4222, %v4178
          %v4255 = vadd.f32 %v4223, %v4180
          %v4256 = vadd.f32 %v4224, %v4182
          %v4257 = vadd.f32 %v4225, %v4184
          %v4258 = vadd.f32 %v4226, %v4186
          %v4259 = vadd.f32 %v4227, %v4188
          %v4260 = vadd.f32 %v4228, %v4190
          %v4261 = vadd.f32 %v4229, %v4192
          %v4262 = vadd.f32 %v4230, %v4194
          %v4263 = vadd.f32 %v4231, %v4196
          %v4264 = vadd.f32 %v4232, %v4198
          %v4265 = vadd.f32 %v4233, %v4200
          %v4266 = vadd.f32 %v4234, %v4202
          %v4267 = vrcp.pop %v4235
          %v4268 = vrcp.pop %v4236
          %v4269 = vrcp.pop %v4237
          %v4270 = vrcp.pop %v4238
          %v4271 = vrcp.pop %v4239
          %v4272 = vrcp.pop %v4240
          %v4273 = vrcp.pop %v4241
          %v4274 = vrcp.pop %v4242
          %v4275 = vrcp.pop %v4243
          %v4276 = vrcp.pop %v4244
          %v4277 = vrcp.pop %v4245
          %v4278 = vrcp.pop %v4246
          %v4279 = vrcp.pop %v4247
          %v4280 = vrcp.pop %v4248
          %v4281 = vrcp.pop %v4249
          %v4282 = vrcp.pop %v4250
          %v4283 = vrcp.pop %v4251
          %v4284 = vrcp.pop %v4252
          %v4285 = vrcp.pop %v4253
          %v4286 = vrcp.pop %v4254
          %v4287 = vrcp.pop %v4255
          %v4288 = vrcp.pop %v4256
          %v4289 = vrcp.pop %v4257
          %v4290 = vrcp.pop %v4258
          %v4291 = vrcp.pop %v4259
          %v4292 = vrcp.pop %v4260
          %v4293 = vrcp.pop %v4261
          %v4294 = vrcp.pop %v4262
          %v4295 = vrcp.pop %v4263
          %v4296 = vrcp.pop %v4264
          %v4297 = vrcp.pop %v4265
          %v4298 = vrcp.pop %v4266
          %v4299 = vmul.f32 %v3948, %v4267
          %v4300 = vmul.f32 %v3950, %v4268
          %v4301 = vmul.f32 %v3952, %v4269
          %v4302 = vmul.f32 %v3954, %v4270
          %v4303 = vmul.f32 %v3956, %v4271
          %v4304 = vmul.f32 %v3958, %v4272
          %v4305 = vmul.f32 %v3960, %v4273
          %v4306 = vmul.f32 %v3962, %v4274
          %v4307 = vmul.f32 %v3964, %v4275
          %v4308 = vmul.f32 %v3966, %v4276
          %v4309 = vmul.f32 %v3968, %v4277
          %v4310 = vmul.f32 %v3970, %v4278
          %v4311 = vmul.f32 %v3972, %v4279
          %v4312 = vmul.f32 %v3974, %v4280
          %v4313 = vmul.f32 %v3976, %v4281
          %v4314 = vmul.f32 %v3978, %v4282
          %v4315 = vmul.f32 %v3980, %v4283
          %v4316 = vmul.f32 %v3982, %v4284
          %v4317 = vmul.f32 %v3984, %v4285
          %v4318 = vmul.f32 %v3986, %v4286
          %v4319 = vmul.f32 %v3988, %v4287
          %v4320 = vmul.f32 %v3990, %v4288
          %v4321 = vmul.f32 %v3992, %v4289
          %v4322 = vmul.f32 %v3994, %v4290
          %v4323 = vmul.f32 %v3996, %v4291
          %v4324 = vmul.f32 %v3998, %v4292
          %v4325 = vmul.f32 %v4000, %v4293
          %v4326 = vmul.f32 %v4002, %v4294
          %v4327 = vmul.f32 %v4004, %v4295
          %v4328 = vmul.f32 %v4006, %v4296
          %v4329 = vmul.f32 %v4008, %v4297
          %v4330 = vmul.f32 %v4010, %v4298
          %v4331 = vmul.f32 %v4299, %v1801
          %v4332 = vmul.f32 %v4300, %v1802
          %v4333 = vmul.f32 %v4301, %v1803
          %v4334 = vmul.f32 %v4302, %v1804
          %v4335 = vmul.f32 %v4303, %v1805
          %v4336 = vmul.f32 %v4304, %v1806
          %v4337 = vmul.f32 %v4305, %v1807
          %v4338 = vmul.f32 %v4306, %v1808
          %v4339 = vmul.f32 %v4307, %v1809
          %v4340 = vmul.f32 %v4308, %v1810
          %v4341 = vmul.f32 %v4309, %v1811
          %v4342 = vmul.f32 %v4310, %v1812
          %v4343 = vmul.f32 %v4311, %v1813
          %v4344 = vmul.f32 %v4312, %v1814
          %v4345 = vmul.f32 %v4313, %v1815
          %v4346 = vmul.f32 %v4314, %v1816
          %v4347 = vmul.f32 %v4315, %v1817
          %v4348 = vmul.f32 %v4316, %v1818
          %v4349 = vmul.f32 %v4317, %v1819
          %v4350 = vmul.f32 %v4318, %v1820
          %v4351 = vmul.f32 %v4319, %v1821
          %v4352 = vmul.f32 %v4320, %v1822
          %v4353 = vmul.f32 %v4321, %v1823
          %v4354 = vmul.f32 %v4322, %v1824
          %v4355 = vmul.f32 %v4323, %v1825
          %v4356 = vmul.f32 %v4324, %v1826
          %v4357 = vmul.f32 %v4325, %v1827
          %v4358 = vmul.f32 %v4326, %v1828
          %v4359 = vmul.f32 %v4327, %v1829
          %v4360 = vmul.f32 %v4328, %v1830
          %v4361 = vmul.f32 %v4329, %v1831
          %v4362 = vmul.f32 %v4330, %v1832
          %v4363 = vmul.f32 %v4044, %v4267
          %v4364 = vmul.f32 %v4046, %v4268
          %v4365 = vmul.f32 %v4048, %v4269
          %v4366 = vmul.f32 %v4050, %v4270
          %v4367 = vmul.f32 %v4052, %v4271
          %v4368 = vmul.f32 %v4054, %v4272
          %v4369 = vmul.f32 %v4056, %v4273
          %v4370 = vmul.f32 %v4058, %v4274
          %v4371 = vmul.f32 %v4060, %v4275
          %v4372 = vmul.f32 %v4062, %v4276
          %v4373 = vmul.f32 %v4064, %v4277
          %v4374 = vmul.f32 %v4066, %v4278
          %v4375 = vmul.f32 %v4068, %v4279
          %v4376 = vmul.f32 %v4070, %v4280
          %v4377 = vmul.f32 %v4072, %v4281
          %v4378 = vmul.f32 %v4074, %v4282
          %v4379 = vmul.f32 %v4076, %v4283
          %v4380 = vmul.f32 %v4078, %v4284
          %v4381 = vmul.f32 %v4080, %v4285
          %v4382 = vmul.f32 %v4082, %v4286
          %v4383 = vmul.f32 %v4084, %v4287
          %v4384 = vmul.f32 %v4086, %v4288
          %v4385 = vmul.f32 %v4088, %v4289
          %v4386 = vmul.f32 %v4090, %v4290
          %v4387 = vmul.f32 %v4092, %v4291
          %v4388 = vmul.f32 %v4094, %v4292
          %v4389 = vmul.f32 %v4096, %v4293
          %v4390 = vmul.f32 %v4098, %v4294
          %v4391 = vmul.f32 %v4100, %v4295
          %v4392 = vmul.f32 %v4102, %v4296
          %v4393 = vmul.f32 %v4104, %v4297
          %v4394 = vmul.f32 %v4106, %v4298
          %v4395 = vmul.f32 %v4363, %v2074
          %v4396 = vmul.f32 %v4364, %v2075
          %v4397 = vmul.f32 %v4365, %v2076
          %v4398 = vmul.f32 %v4366, %v2077
          %v4399 = vmul.f32 %v4367, %v2078
          %v4400 = vmul.f32 %v4368, %v2079
          %v4401 = vmul.f32 %v4369, %v2080
          %v4402 = vmul.f32 %v4370, %v2081
          %v4403 = vmul.f32 %v4371, %v2082
          %v4404 = vmul.f32 %v4372, %v2083
          %v4405 = vmul.f32 %v4373, %v2084
          %v4406 = vmul.f32 %v4374, %v2085
          %v4407 = vmul.f32 %v4375, %v2086
          %v4408 = vmul.f32 %v4376, %v2087
          %v4409 = vmul.f32 %v4377, %v2088
          %v4410 = vmul.f32 %v4378, %v2089
          %v4411 = vmul.f32 %v4379, %v2090
          %v4412 = vmul.f32 %v4380, %v2091
          %v4413 = vmul.f32 %v4381, %v2092
          %v4414 = vmul.f32 %v4382, %v2093
          %v4415 = vmul.f32 %v4383, %v2094
          %v4416 = vmul.f32 %v4384, %v2095
          %v4417 = vmul.f32 %v4385, %v2096
          %v4418 = vmul.f32 %v4386, %v2097
          %v4419 = vmul.f32 %v4387, %v2098
          %v4420 = vmul.f32 %v4388, %v2099
          %v4421 = vmul.f32 %v4389, %v2100
          %v4422 = vmul.f32 %v4390, %v2101
          %v4423 = vmul.f32 %v4391, %v2102
          %v4424 = vmul.f32 %v4392, %v2103
          %v4425 = vmul.f32 %v4393, %v2104
          %v4426 = vmul.f32 %v4394, %v2105
          %v4427 = vadd.f32 %v4331, %v4395
          %v4428 = vadd.f32 %v4332, %v4396
          %v4429 = vadd.f32 %v4333, %v4397
          %v4430 = vadd.f32 %v4334, %v4398
          %v4431 = vadd.f32 %v4335, %v4399
          %v4432 = vadd.f32 %v4336, %v4400
          %v4433 = vadd.f32 %v4337, %v4401
          %v4434 = vadd.f32 %v4338, %v4402
          %v4435 = vadd.f32 %v4339, %v4403
          %v4436 = vadd.f32 %v4340, %v4404
          %v4437 = vadd.f32 %v4341, %v4405
          %v4438 = vadd.f32 %v4342, %v4406
          %v4439 = vadd.f32 %v4343, %v4407
          %v4440 = vadd.f32 %v4344, %v4408
          %v4441 = vadd.f32 %v4345, %v4409
          %v4442 = vadd.f32 %v4346, %v4410
          %v4443 = vadd.f32 %v4347, %v4411
          %v4444 = vadd.f32 %v4348, %v4412
          %v4445 = vadd.f32 %v4349, %v4413
          %v4446 = vadd.f32 %v4350, %v4414
          %v4447 = vadd.f32 %v4351, %v4415
          %v4448 = vadd.f32 %v4352, %v4416
          %v4449 = vadd.f32 %v4353, %v4417
          %v4450 = vadd.f32 %v4354, %v4418
          %v4451 = vadd.f32 %v4355, %v4419
          %v4452 = vadd.f32 %v4356, %v4420
          %v4453 = vadd.f32 %v4357, %v4421
          %v4454 = vadd.f32 %v4358, %v4422
          %v4455 = vadd.f32 %v4359, %v4423
          %v4456 = vadd.f32 %v4360, %v4424
          %v4457 = vadd.f32 %v4361, %v4425
          %v4458 = vadd.f32 %v4362, %v4426
          %v4459 = vmul.f32 %v4140, %v4267
          %v4460 = vmul.f32 %v4142, %v4268
          %v4461 = vmul.f32 %v4144, %v4269
          %v4462 = vmul.f32 %v4146, %v4270
          %v4463 = vmul.f32 %v4148, %v4271
          %v4464 = vmul.f32 %v4150, %v4272
          %v4465 = vmul.f32 %v4152, %v4273
          %v4466 = vmul.f32 %v4154, %v4274
          %v4467 = vmul.f32 %v4156, %v4275
          %v4468 = vmul.f32 %v4158, %v4276
          %v4469 = vmul.f32 %v4160, %v4277
          %v4470 = vmul.f32 %v4162, %v4278
          %v4471 = vmul.f32 %v4164, %v4279
          %v4472 = vmul.f32 %v4166, %v4280
          %v4473 = vmul.f32 %v4168, %v4281
          %v4474 = vmul.f32 %v4170, %v4282
          %v4475 = vmul.f32 %v4172, %v4283
          %v4476 = vmul.f32 %v4174, %v4284
          %v4477 = vmul.f32 %v4176, %v4285
          %v4478 = vmul.f32 %v4178, %v4286
          %v4479 = vmul.f32 %v4180, %v4287
          %v4480 = vmul.f32 %v4182, %v4288
          %v4481 = vmul.f32 %v4184, %v4289
          %v4482 = vmul.f32 %v4186, %v4290
          %v4483 = vmul.f32 %v4188, %v4291
          %v4484 = vmul.f32 %v4190, %v4292
          %v4485 = vmul.f32 %v4192, %v4293
          %v4486 = vmul.f32 %v4194, %v4294
          %v4487 = vmul.f32 %v4196, %v4295
          %v4488 = vmul.f32 %v4198, %v4296
          %v4489 = vmul.f32 %v4200, %v4297
          %v4490 = vmul.f32 %v4202, %v4298
          %v4491 = vmul.f32 %v4459, %v2347
          %v4492 = vmul.f32 %v4460, %v2348
          %v4493 = vmul.f32 %v4461, %v2349
          %v4494 = vmul.f32 %v4462, %v2350
          %v4495 = vmul.f32 %v4463, %v2351
          %v4496 = vmul.f32 %v4464, %v2352
          %v4497 = vmul.f32 %v4465, %v2353
          %v4498 = vmul.f32 %v4466, %v2354
          %v4499 = vmul.f32 %v4467, %v2355
          %v4500 = vmul.f32 %v4468, %v2356
          %v4501 = vmul.f32 %v4469, %v2357
          %v4502 = vmul.f32 %v4470, %v2358
          %v4503 = vmul.f32 %v4471, %v2359
          %v4504 = vmul.f32 %v4472, %v2360
          %v4505 = vmul.f32 %v4473, %v2361
          %v4506 = vmul.f32 %v4474, %v2362
          %v4507 = vmul.f32 %v4475, %v2363
          %v4508 = vmul.f32 %v4476, %v2364
          %v4509 = vmul.f32 %v4477, %v2365
          %v4510 = vmul.f32 %v4478, %v2366
          %v4511 = vmul.f32 %v4479, %v2367
          %v4512 = vmul.f32 %v4480, %v2368
          %v4513 = vmul.f32 %v4481, %v2369
          %v4514 = vmul.f32 %v4482, %v2370
          %v4515 = vmul.f32 %v4483, %v2371
          %v4516 = vmul.f32 %v4484, %v2372
          %v4517 = vmul.f32 %v4485, %v2373
          %v4518 = vmul.f32 %v4486, %v2374
          %v4519 = vmul.f32 %v4487, %v2375
          %v4520 = vmul.f32 %v4488, %v2376
          %v4521 = vmul.f32 %v4489, %v2377
          %v4522 = vmul.f32 %v4490, %v2378
          %v4523 = vadd.f32 %v4427, %v4491
          %v4524 = vadd.f32 %v4428, %v4492
          %v4525 = vadd.f32 %v4429, %v4493
          %v4526 = vadd.f32 %v4430, %v4494
          %v4527 = vadd.f32 %v4431, %v4495
          %v4528 = vadd.f32 %v4432, %v4496
          %v4529 = vadd.f32 %v4433, %v4497
          %v4530 = vadd.f32 %v4434, %v4498
          %v4531 = vadd.f32 %v4435, %v4499
          %v4532 = vadd.f32 %v4436, %v4500
          %v4533 = vadd.f32 %v4437, %v4501
          %v4534 = vadd.f32 %v4438, %v4502
          %v4535 = vadd.f32 %v4439, %v4503
          %v4536 = vadd.f32 %v4440, %v4504
          %v4537 = vadd.f32 %v4441, %v4505
          %v4538 = vadd.f32 %v4442, %v4506
          %v4539 = vadd.f32 %v4443, %v4507
          %v4540 = vadd.f32 %v4444, %v4508
          %v4541 = vadd.f32 %v4445, %v4509
          %v4542 = vadd.f32 %v4446, %v4510
          %v4543 = vadd.f32 %v4447, %v4511
          %v4544 = vadd.f32 %v4448, %v4512
          %v4545 = vadd.f32 %v4449, %v4513
          %v4546 = vadd.f32 %v4450, %v4514
          %v4547 = vadd.f32 %v4451, %v4515
          %v4548 = vadd.f32 %v4452, %v4516
          %v4549 = vadd.f32 %v4453, %v4517
          %v4550 = vadd.f32 %v4454, %v4518
          %v4551 = vadd.f32 %v4455, %v4519
          %v4552 = vadd.f32 %v4456, %v4520
          %v4553 = vadd.f32 %v4457, %v4521
          %v4554 = vadd.f32 %v4458, %v4522
          %v4555 = vmul.f32 %v4523, 3.0
          %v4556 = vmul.f32 %v4524, 3.0
          %v4557 = vmul.f32 %v4525, 3.0
          %v4558 = vmul.f32 %v4526, 3.0
          %v4559 = vmul.f32 %v4527, 3.0
          %v4560 = vmul.f32 %v4528, 3.0
          %v4561 = vmul.f32 %v4529, 3.0
          %v4562 = vmul.f32 %v4530, 3.0
          %v4563 = vmul.f32 %v4531, 3.0
          %v4564 = vmul.f32 %v4532, 3.0
          %v4565 = vmul.f32 %v4533, 3.0
          %v4566 = vmul.f32 %v4534, 3.0
          %v4567 = vmul.f32 %v4535, 3.0
          %v4568 = vmul.f32 %v4536, 3.0
          %v4569 = vmul.f32 %v4537, 3.0
          %v4570 = vmul.f32 %v4538, 3.0
          %v4571 = vmul.f32 %v4539, 3.0
          %v4572 = vmul.f32 %v4540, 3.0
          %v4573 = vmul.f32 %v4541, 3.0
          %v4574 = vmul.f32 %v4542, 3.0
          %v4575 = vmul.f32 %v4543, 3.0
          %v4576 = vmul.f32 %v4544, 3.0
          %v4577 = vmul.f32 %v4545, 3.0
          %v4578 = vmul.f32 %v4546, 3.0
          %v4579 = vmul.f32 %v4547, 3.0
          %v4580 = vmul.f32 %v4548, 3.0
          %v4581 = vmul.f32 %v4549, 3.0
          %v4582 = vmul.f32 %v4550, 3.0
          %v4583 = vmul.f32 %v4551, 3.0
          %v4584 = vmul.f32 %v4552, 3.0
          %v4585 = vmul.f32 %v4553, 3.0
          %v4586 = vmul.f32 %v4554, 3.0
          %4587 = vst [vmem:[%s397] sm:$0xff] %v4555
          %4588 = vst [vmem:[%s397 + $0x8] sm:$0xff] %v4556
          %4589 = vst [vmem:[%s397 + $0x10] sm:$0xff] %v4557
          %4590 = vst [vmem:[%s397 + $0x18] sm:$0xff] %v4558
          %4591 = vst [vmem:[%s397 + $0x20] sm:$0xff] %v4559
          %4592 = vst [vmem:[%s397 + $0x28] sm:$0xff] %v4560
          %4593 = vst [vmem:[%s397 + $0x30] sm:$0xff] %v4561
          %4594 = vst [vmem:[%s397 + $0x38] sm:$0xff] %v4562
          %4595 = vst [vmem:[%s397 + $0x40] sm:$0xff] %v4563
          %4596 = vst [vmem:[%s397 + $0x48] sm:$0xff] %v4564
          %4597 = vst [vmem:[%s397 + $0x50] sm:$0xff] %v4565
          %4598 = vst [vmem:[%s397 + $0x58] sm:$0xff] %v4566
          %4599 = vst [vmem:[%s397 + $0x60] sm:$0xff] %v4567
          %4600 = vst [vmem:[%s397 + $0x68] sm:$0xff] %v4568
          %4601 = vst [vmem:[%s397 + $0x70] sm:$0xff] %v4569
          %4602 = vst [vmem:[%s397 + $0x78] sm:$0xff] %v4570
          %4603 = vst [vmem:[%s397 + $0x80] sm:$0xff] %v4571
          %4604 = vst [vmem:[%s397 + $0x88] sm:$0xff] %v4572
          %4605 = vst [vmem:[%s397 + $0x90] sm:$0xff] %v4573
          %4606 = vst [vmem:[%s397 + $0x98] sm:$0xff] %v4574
          %4607 = vst [vmem:[%s397 + $0xa0] sm:$0xff] %v4575
          %4608 = vst [vmem:[%s397 + $0xa8] sm:$0xff] %v4576
          %4609 = vst [vmem:[%s397 + $0xb0] sm:$0xff] %v4577
          %4610 = vst [vmem:[%s397 + $0xb8] sm:$0xff] %v4578
          %4611 = vst [vmem:[%s397 + $0xc0] sm:$0xff] %v4579
          %4612 = vst [vmem:[%s397 + $0xc8] sm:$0xff] %v4580
          %4613 = vst [vmem:[%s397 + $0xd0] sm:$0xff] %v4581
          %4614 = vst [vmem:[%s397 + $0xd8] sm:$0xff] %v4582
          %4615 = vst [vmem:[%s397 + $0xe0] sm:$0xff] %v4583
          %4616 = vst [vmem:[%s397 + $0xe8] sm:$0xff] %v4584
          %4617 = vst [vmem:[%s397 + $0xf0] sm:$0xff] %v4585
          %4618 = vst [vmem:[%s397 + $0xf8] sm:$0xff] %v4586
        $region68: #{tpu_custom_call.1} parent=55 // pred_fallthru
          _
        %s4619 = sand.u32 %s250, 1
        %s4620 = scalar_lea.sflag [#allocation4], %s4619
        %s4621 = sand.u32 %s250, 1
        %s4622 = smul.addr %s4621, 256
        %s4623 = scalar_lea.vmem [#allocation6], %s4622
        // Predicated region
        $region69: #{tpu_custom_call.1} parent=55 // pred_check
          %p4624 = pneg %p260
        $region70: #{tpu_custom_call.1} parent=55 // pred_check_branch
          %4626 = sbr.rel (%p4624) target = $region72
        $region71: #{tpu_custom_call.1} parent=55 // pred_region
          %s4627 = smul.u32 32, %s28
          %s4629 = ssub.s32 4096, 4096
          %4630 = vsyncadd %s4620, %s4629
          %s4631 = smul.addr %s4627, 128
          %s4632 = scalar_lea.hbm %s9, %s4631
          %s4633 = sshll.u32 %s4623, 4
          %s4634 = int_to_ptr.vmem [resolvable:$true] %s4633
          %4639 = dma.vmem_to_hbm [thread:$0]  %s4634, 4096, %s4632, %s4620, 128, 128, 8
        $region72: #{tpu_custom_call.1} parent=55 // pred_fallthru
          _
      $region56: #{tpu_custom_call.1} parent=5 // pred_fallthru
        _
      %p4640 = scmp.le.s32.totalorder 2, %s19
      // Predicated region
      $region73: #{tpu_custom_call.1} parent=5 // pred_check
        %p4641 = pneg %p4640
      $region74: #{tpu_custom_call.1} parent=5 // pred_check_branch
        %4643 = sbr.rel (%p4641) target = $region76
      $region75: #{tpu_custom_call.1} parent=5 // pred_region
        %s4644 = ssub.s32 %s19, 2
        // Predicated region
        $region77: #{tpu_custom_call.1} parent=75 // pred_check
          %p4645 = pneg %p266
        $region78: #{tpu_custom_call.1} parent=75 // pred_check_branch
          %4647 = sbr.rel (%p4645) target = $region80
        $region79: #{tpu_custom_call.1} parent=75 // pred_region
          %s4648 = sand.u32 %s251, 1
          %s4649 = scalar_lea.sflag [#allocation4], %s4648
          %s4650 = sand.u32 %s251, 1
          %s4651 = smul.addr %s4650, 256
          %s4652 = scalar_lea.vmem [#allocation6], %s4651
          %4653 = dma.done %s4649, 4096
        $region80: #{tpu_custom_call.1} parent=75 // pred_fallthru
          _
      $region76: #{tpu_custom_call.1} parent=5 // pred_fallthru
        _
    $region6: #{tpu_custom_call.1} parent=1 // loop_footer
      %s23 = sadd.s32 1, %s19
    $region7: #{tpu_custom_call.1} parent=1 // loop_footer_branch
      %18 = sbr.rel target = $region3
    $region8: #{tpu_custom_call.1} parent=1 // loop_exit
      _
    %4654 = vsyncpa [#allocation4], 1
    %s4655 = scalar_lea.sflag [#allocation4], 1
    %4656 = vsyncpa %s4655, 1
    %4657 = vsyncpa [#allocation5], 1
    %s4658 = scalar_lea.sflag [#allocation5], 1
    %4659 = vsyncpa %s4658, 1

</llo_original>
